<compile_context>
chip_gen: v6e
topology: v6e:2x2x1
jax: 0.10.0
libtpu: 0.0.40
codegen_flags: <defaults>
</compile_context>

<pallas_src>
import math
from functools import partial

import jax
import jax.numpy as jnp
from jax.experimental import pallas as pl
from jax.experimental.pallas import tpu as pltpu

# ----------------------------------------------------------------------------
# Demo configuration (small shapes consistent with the module)
# ----------------------------------------------------------------------------
EMBED_SIZE = 32
HEADS = 4
M_VALUE = 4
NUM_CLASSES = 5
FORWARD_EXPANSION = 4
NUM_LAYERS = 2
MAX_LENGTH = 64          # also the vocab size of word_embedding in the torch code
BATCH = 2
SEQ_LEN = 8


def _vmem():
    # Whole-array block resident in VMEM (grid-less pallas_call).
    return pl.BlockSpec(memory_space=pltpu.MemorySpace.VMEM)


# ----------------------------------------------------------------------------
# Positional encoding table (parameter setup, plain JAX -- matches __init__)
# ----------------------------------------------------------------------------
def make_sinusoidal_encoding(d_model: int, max_len: int) -> jnp.ndarray:
    assert d_model % 2 == 0, "PositionalEncoding as written requires even d_model"
    position = jnp.arange(max_len, dtype=jnp.float32)[:, None]
    div_term = jnp.exp(jnp.arange(0, d_model, 2, dtype=jnp.float32)
                       * -(math.log(10000.0) / d_model))
    angles = position * div_term
    enc = jnp.zeros((max_len, d_model), jnp.float32)
    enc = enc.at[:, 0::2].set(jnp.sin(angles))
    enc = enc.at[:, 1::2].set(jnp.cos(angles))
    return enc


# ----------------------------------------------------------------------------
# The single fused forward kernel
# ----------------------------------------------------------------------------
def _make_fused_forward_kernel(N, S, E, heads, m_value, num_layers, vocab):
    H = heads
    Dh = E // H
    assert Dh * H == E, "embed_size must be divisible by heads"
    R = N * S
    G = E // Dh                    # queries interleaved per output row (== H)
    assert S % G == 0, "raw-reshape replication needs seq_len % (E/head_dim) == 0"
    rows_per_nh = S // G

    def layernorm(v, g, b):
        mean = jnp.mean(v, axis=-1, keepdims=True)
        c = v - mean
        var = jnp.mean(c * c, axis=-1, keepdims=True)
        return c * jax.lax.rsqrt(var + 1e-5) * g + b

    def kernel(*refs):
        tok_ref, emb_ref, pe_ref = refs[0], refs[1], refs[2]
        idx = 3
        layer_refs = []
        for _ in range(num_layers):
            layer_refs.append(refs[idx:idx + 11])
            idx += 11
        wc_ref, bc_ref = refs[idx], refs[idx + 1]
        out_ref = refs[idx + 2]

        # ---- 1. embedding gather as a one-hot MXU matmul + positional add ----
        tok = tok_ref[...]                                           # (R, 1) int32
        vocab_iota = jax.lax.broadcasted_iota(jnp.int32, (R, vocab), 1)
        onehot = (vocab_iota == tok).astype(jnp.float32)             # (R, V)
        x = jnp.dot(onehot, emb_ref[...],
                    preferred_element_type=jnp.float32)              # (R, E)
        x = x + pe_ref[...]                    # dropout(0.1) -> identity (eval)

        neg_big = jnp.float32(-1e30)

        for layer in range(num_layers):
            (wqkv_ref, wo_ref, bo_ref, g1_ref, be1_ref,
             w1_ref, b1_ref, w2_ref, b2_ref, g2_ref, be2_ref) = layer_refs[layer]

            # ---- fused QKV projection: one MXU matmul (weights fused at init) --
            qkv = jnp.dot(x, wqkv_ref[...],
                          preferred_element_type=jnp.float32)        # (R, 3E)

            # ---- head-major batched q/k/v, batch index b = h*N + n -----------
            def split_heads(base):
                return jnp.concatenate(
                    [qkv[:, base + h * Dh: base + (h + 1) * Dh].reshape(N, S, Dh)
                     for h in range(H)], axis=0)                     # (H*N, S, Dh)
            q_b = split_heads(0)
            k_b = split_heads(E)
            v_b = split_heads(2 * E)

            # ---- energies for ALL heads in one batched dot --------------------
            energy = jnp.einsum("bqd,bkd->bqk", q_b, k_b,
                                preferred_element_type=jnp.float32)  # (H*N, S, S)

            # ---- iterative top-m selection (== lax.top_k set, ties->lowest) ---
            iota_k = jax.lax.broadcasted_iota(
                jnp.int32, energy.shape, 2).astype(jnp.float32)
            row_max = jnp.max(energy, axis=-1, keepdims=True)
            work = energy
            selected = jnp.zeros(energy.shape, dtype=jnp.bool_)
            for _ in range(m_value):
                cur = jnp.max(work, axis=-1, keepdims=True)
                is_max = work == cur
                first = jnp.min(jnp.where(is_max, iota_k, jnp.float32(S)),
                                axis=-1, keepdims=True)
                pick = iota_k == first
                selected = jnp.logical_or(selected, pick)
                work = jnp.where(pick, neg_big, work)

            # ---- softmax over selected energies, scattered on the key axis ----
            p_sel = jnp.where(selected, jnp.exp(energy - row_max), 0.0)
            denom = jnp.sum(p_sel, axis=-1, keepdims=True)
            # NOTE: pl.reciprocal(denom, approx=True) is the production choice;
            # exact division keeps the reference comparison tight here.
            attnw = p_sel / denom                                     # (H*N, S, S)

            out_b = jnp.einsum("bqk,bkd->bqd", attnw, v_b,
                               preferred_element_type=jnp.float32)   # (H*N, S, Dh)

            # ---- torch's RAW (N,H,S,Dh)->(N,S,E) reshape (no head permute) ----
            # row (n, h*rows_per_nh + g) = lane-concat of out_b[h*N+n, g*G+j, :]
            # for j = 0..G-1.  Built from 2-D row slices + lane concats (safe,
            # no minor-dim-changing reshapes / masked partial stores).
            rows = []
            for n in range(N):
                for h in range(H):
                    blk = out_b[h * N + n]                            # (S, Dh)
                    for g_ in range(rows_per_nh):
                        rows.append(jnp.concatenate(
                            [blk[g_ * G + j: g_ * G + j + 1, :] for j in range(G)],
                            axis=1))                                  # (1, E)
            attn_raw = jnp.concatenate(rows, axis=0)                  # (R, E)

            # ---- fc_out, add & LayerNorm, FFN, add & LayerNorm ----------------
            attn_o = jnp.dot(attn_raw, wo_ref[...],
                             preferred_element_type=jnp.float32) + bo_ref[...]
            h1 = layernorm(attn_o + x, g1_ref[...], be1_ref[...])
            ff = jnp.maximum(
                jnp.dot(h1, w1_ref[...],
                        preferred_element_type=jnp.float32) + b1_ref[...], 0.0)
            ff = jnp.dot(ff, w2_ref[...],
                         preferred_element_type=jnp.float32) + b2_ref[...]
            x = layernorm(ff + h1, g2_ref[...], be2_ref[...])

        # ---- 3. mean over sequence + classifier head --------------------------
        pooled = jnp.mean(x.reshape(N, S, E), axis=1)                 # (N, E)
        logits = jnp.dot(pooled, wc_ref[...],
                         preferred_element_type=jnp.float32) + bc_ref[...]
        out_ref[...] = logits.astype(out_ref.dtype)

    return kernel


# ----------------------------------------------------------------------------
# Model forward (one pallas_call for the whole network)
# ----------------------------------------------------------------------------
@partial(jax.jit, static_argnames=("heads", "m_value", "num_layers"))
def dga_forward(params, tokens, heads, m_value, num_layers):
    N, S = tokens.shape
    V, E = params["embedding"].shape
    C = params["wc"].shape[1]
    R = N * S

    pe = jnp.tile(params["pos_encoding"][:S], (N, 1))      # (R, E), lane-dense
    tok2 = tokens.reshape(R, 1).astype(jnp.int32)

    flat_inputs = [tok2, params["embedding"], pe]
    for layer in range(num_layers):
        p = params["layers"][layer]
        flat_inputs += [p["w_qkv"], p["wo"], p["bo"], p["g1"], p["be1"],
                        p["w1"], p["b1"], p["w2"], p["b2"], p["g2"], p["be2"]]
    flat_inputs += [params["wc"], params["bc"]]

    kernel = _make_fused_forward_kernel(N, S, E, heads, m_value, num_layers, V)
    logits = pl.pallas_call(
        kernel,
        out_shape=jax.ShapeDtypeStruct((N, C), jnp.float32),
        in_specs=[_vmem() for _ in flat_inputs],
        out_specs=_vmem(),
    )(*flat_inputs)

    if logits.shape[1] == 1:                                # torch out.squeeze(1)
        logits = logits[:, 0]
    return logits


# ----------------------------------------------------------------------------
# Pure-JAX reference (faithful to the torch module: topk + softmax + gather)
# ----------------------------------------------------------------------------
def _ref_layernorm(x, g, b, eps=1e-5):
    mean = x.mean(axis=-1, keepdims=True)
    var = ((x - mean) ** 2).mean(axis=-1, keepdims=True)
    return (x - mean) * jax.lax.rsqrt(var + eps) * g + b


def ref_forward(params, tokens, heads, m_value, num_layers):
    N, S = tokens.shape
    E = params["embedding"].shape[1]
    x = params["embedding"][tokens] + params["pos_encoding"][None, :S, :]
    for layer in range(num_layers):
        p = params["layers"][layer]
        Dh = E // heads
        wq = p["w_qkv"][:, :E]
        wk = p["w_qkv"][:, E:2 * E]
        wv = p["w_qkv"][:, 2 * E:]
        queries = (x @ wq).reshape(N, S, heads, Dh)
        keys = (x @ wk).reshape(N, S, heads, Dh)
        values = (x @ wv).reshape(N, S, heads, Dh)
        energy = jnp.einsum("nqhd,nkhd->nhqk", queries, keys)
        top_vals, top_idx = jax.lax.top_k(energy, m_value)
        attention = jax.nn.softmax(top_vals, axis=-1)
        values_p = jnp.transpose(values, (0, 2, 1, 3))               # (N, H, K, Dh)
        n_idx = jnp.arange(N)[:, None, None, None]
        h_idx = jnp.arange(heads)[None, :, None, None]
        selected = values_p[n_idx, h_idx, top_idx]                   # (N, H, Q, M, Dh)
        out = jnp.einsum("nhqm,nhqmd->nhqd", attention, selected)
        out = out.reshape(N, S, heads * Dh)          # raw reshape (torch quirk)
        attn = out @ p["wo"] + p["bo"][0]
        h1 = _ref_layernorm(attn + x, p["g1"][0], p["be1"][0])
        ff = jax.nn.relu(h1 @ p["w1"] + p["b1"][0]) @ p["w2"] + p["b2"][0]
        x = _ref_layernorm(ff + h1, p["g2"][0], p["be2"][0])
    pooled = x.mean(axis=1)
    logits = pooled @ params["wc"] + params["bc"][0]
    if logits.shape[1] == 1:
        logits = logits[:, 0]
    return logits


# ----------------------------------------------------------------------------
# Parameter init (QKV weights fused once at init, per the perf review)
# ----------------------------------------------------------------------------
def init_params(key):
    E, C, L, V = EMBED_SIZE, NUM_CLASSES, NUM_LAYERS, MAX_LENGTH
    F = FORWARD_EXPANSION * E
    keys = iter(jax.random.split(key, 3 + 9 * L))

    def nrm(shape, scale=0.1):
        return scale * jax.random.normal(next(keys), shape, jnp.float32)

    params = {
        "embedding": nrm((V, E)),
        "pos_encoding": make_sinusoidal_encoding(E, V),
        "wc": nrm((E, C)),
        "bc": nrm((1, C), 0.02),
        "layers": [],
    }
    for _ in range(L):
        w_qkv = jnp.concatenate([nrm((E, E)), nrm((E, E)), nrm((E, E))], axis=1)
        params["layers"].append({
            "w_qkv": w_qkv,                               # [wq | wk | wv], (E, 3E)
            "wo": nrm((E, E)), "bo": nrm((1, E), 0.02),
            "g1": jnp.ones((1, E), jnp.float32), "be1": jnp.zeros((1, E), jnp.float32),
            "w1": nrm((E, F)), "b1": nrm((1, F), 0.02),
            "w2": nrm((F, E)), "b2": nrm((1, E), 0.02),
            "g2": jnp.ones((1, E), jnp.float32), "be2": jnp.zeros((1, E), jnp.float32),
        })
    return params


if __name__ == "__main__":
    root = jax.random.PRNGKey(0)
    pkey, tkey = jax.random.split(root)
    params = init_params(pkey)
    tokens = jax.random.randint(tkey, (BATCH, SEQ_LEN), 0, MAX_LENGTH, dtype=jnp.int32)

    logits = dga_forward(params, tokens, heads=HEADS, m_value=M_VALUE,
                         num_layers=NUM_LAYERS)
    logits = jax.block_until_ready(logits)

    # Reference under f32 matmuls so the top-m selection path agrees numerically
    # with the kernel's in-VMEM f32 math (no global precision config anymore).
    with jax.default_matmul_precision("highest"):
        ref = ref_forward(params, tokens, HEADS, M_VALUE, NUM_LAYERS)
    ref = jax.block_until_ready(ref)

    assert logits.shape == ref.shape
    err = float(jnp.max(jnp.abs(logits - ref)))
    assert jnp.allclose(logits, ref, atol=3e-2, rtol=3e-2), \
        f"mismatch vs reference, max abs err={err}"

    print("KERNEL_OK")
</pallas_src>

<mosaic_0001>
module attributes {stable_mosaic.version = 11 : i64} {
  func.func @kernel(%arg0: memref<16x1xi32, #tpu.memory_space<vmem>>, %arg1: memref<64x32xf32, #tpu.memory_space<vmem>>, %arg2: memref<16x32xf32, #tpu.memory_space<vmem>>, %arg3: memref<32x96xf32, #tpu.memory_space<vmem>>, %arg4: memref<32x32xf32, #tpu.memory_space<vmem>>, %arg5: memref<1x32xf32, #tpu.memory_space<vmem>>, %arg6: memref<1x32xf32, #tpu.memory_space<vmem>>, %arg7: memref<1x32xf32, #tpu.memory_space<vmem>>, %arg8: memref<32x128xf32, #tpu.memory_space<vmem>>, %arg9: memref<1x128xf32, #tpu.memory_space<vmem>>, %arg10: memref<128x32xf32, #tpu.memory_space<vmem>>, %arg11: memref<1x32xf32, #tpu.memory_space<vmem>>, %arg12: memref<1x32xf32, #tpu.memory_space<vmem>>, %arg13: memref<1x32xf32, #tpu.memory_space<vmem>>, %arg14: memref<32x96xf32, #tpu.memory_space<vmem>>, %arg15: memref<32x32xf32, #tpu.memory_space<vmem>>, %arg16: memref<1x32xf32, #tpu.memory_space<vmem>>, %arg17: memref<1x32xf32, #tpu.memory_space<vmem>>, %arg18: memref<1x32xf32, #tpu.memory_space<vmem>>, %arg19: memref<32x128xf32, #tpu.memory_space<vmem>>, %arg20: memref<1x128xf32, #tpu.memory_space<vmem>>, %arg21: memref<128x32xf32, #tpu.memory_space<vmem>>, %arg22: memref<1x32xf32, #tpu.memory_space<vmem>>, %arg23: memref<1x32xf32, #tpu.memory_space<vmem>>, %arg24: memref<1x32xf32, #tpu.memory_space<vmem>>, %arg25: memref<32x5xf32, #tpu.memory_space<vmem>>, %arg26: memref<1x5xf32, #tpu.memory_space<vmem>>, %arg27: memref<2x5xf32, #tpu.memory_space<vmem>>) attributes {dimension_semantics = [], scalar_prefetch = 0 : i64, scratch_operands = 0 : i64, tpu.core_type = #tpu.core_type<tc>} {
    %c0 = arith.constant 0 : index
    %c0_0 = arith.constant 0 : index
    %0 = vector.load %arg0[%c0, %c0_0] : memref<16x1xi32, #tpu.memory_space<vmem>>, vector<16x1xi32>
    %1 = tpu.iota {dimensions = array<i32: 1>} : vector<16x64xi32>
    %2 = vector.broadcast %0 : vector<16x1xi32> to vector<16x64xi32>
    %3 = arith.cmpi eq, %1, %2 : vector<16x64xi32>
    %4 = arith.extui %3 : vector<16x64xi1> to vector<16x64xi32>
    %5 = arith.sitofp %4 : vector<16x64xi32> to vector<16x64xf32>
    %c0_1 = arith.constant 0 : index
    %c0_2 = arith.constant 0 : index
    %6 = vector.load %arg1[%c0_1, %c0_2] : memref<64x32xf32, #tpu.memory_space<vmem>>, vector<64x32xf32>
    %cst = arith.constant dense<0.000000e+00> : vector<16x32xf32>
    %7 = tpu.matmul %5, %6, %cst {dimension_numbers = #tpu.dot_dimension_numbers<[1], [0], [0], [1], [0, 0, 1, 1], [], []>} : vector<16x64xf32>, vector<64x32xf32>, vector<16x32xf32> -> vector<16x32xf32>
    %c0_3 = arith.constant 0 : index
    %c0_4 = arith.constant 0 : index
    %8 = vector.load %arg2[%c0_3, %c0_4] : memref<16x32xf32, #tpu.memory_space<vmem>>, vector<16x32xf32>
    %9 = arith.addf %7, %8 : vector<16x32xf32>
    %c0_5 = arith.constant 0 : index
    %c0_6 = arith.constant 0 : index
    %10 = vector.load %arg3[%c0_5, %c0_6] : memref<32x96xf32, #tpu.memory_space<vmem>>, vector<32x96xf32>
    %cst_7 = arith.constant dense<0.000000e+00> : vector<16x96xf32>
    %11 = tpu.matmul %9, %10, %cst_7 {dimension_numbers = #tpu.dot_dimension_numbers<[1], [0], [0], [1], [0, 0, 1, 1], [], []>} : vector<16x32xf32>, vector<32x96xf32>, vector<16x96xf32> -> vector<16x96xf32>
    %12 = vector.extract_strided_slice %11 {offsets = [0, 0], sizes = [16, 8], strides = [1, 1]} : vector<16x96xf32> to vector<16x8xf32>
    %13 = vector.shape_cast %12 : vector<16x8xf32> to vector<2x8x8xf32>
    %14 = vector.extract_strided_slice %11 {offsets = [0, 8], sizes = [16, 8], strides = [1, 1]} : vector<16x96xf32> to vector<16x8xf32>
    %15 = vector.shape_cast %14 : vector<16x8xf32> to vector<2x8x8xf32>
    %16 = vector.extract_strided_slice %11 {offsets = [0, 16], sizes = [16, 8], strides = [1, 1]} : vector<16x96xf32> to vector<16x8xf32>
    %17 = vector.shape_cast %16 : vector<16x8xf32> to vector<2x8x8xf32>
    %18 = vector.extract_strided_slice %11 {offsets = [0, 24], sizes = [16, 8], strides = [1, 1]} : vector<16x96xf32> to vector<16x8xf32>
    %19 = vector.shape_cast %18 : vector<16x8xf32> to vector<2x8x8xf32>
    %20 = tpu.concatenate %13, %15, %17, %19 in 0 : vector<2x8x8xf32>, vector<2x8x8xf32>, vector<2x8x8xf32>, vector<2x8x8xf32> -> vector<8x8x8xf32>
    %21 = vector.extract_strided_slice %11 {offsets = [0, 32], sizes = [16, 8], strides = [1, 1]} : vector<16x96xf32> to vector<16x8xf32>
    %22 = vector.shape_cast %21 : vector<16x8xf32> to vector<2x8x8xf32>
    %23 = vector.extract_strided_slice %11 {offsets = [0, 40], sizes = [16, 8], strides = [1, 1]} : vector<16x96xf32> to vector<16x8xf32>
    %24 = vector.shape_cast %23 : vector<16x8xf32> to vector<2x8x8xf32>
    %25 = vector.extract_strided_slice %11 {offsets = [0, 48], sizes = [16, 8], strides = [1, 1]} : vector<16x96xf32> to vector<16x8xf32>
    %26 = vector.shape_cast %25 : vector<16x8xf32> to vector<2x8x8xf32>
    %27 = vector.extract_strided_slice %11 {offsets = [0, 56], sizes = [16, 8], strides = [1, 1]} : vector<16x96xf32> to vector<16x8xf32>
    %28 = vector.shape_cast %27 : vector<16x8xf32> to vector<2x8x8xf32>
    %29 = tpu.concatenate %22, %24, %26, %28 in 0 : vector<2x8x8xf32>, vector<2x8x8xf32>, vector<2x8x8xf32>, vector<2x8x8xf32> -> vector<8x8x8xf32>
    %30 = vector.extract_strided_slice %11 {offsets = [0, 64], sizes = [16, 8], strides = [1, 1]} : vector<16x96xf32> to vector<16x8xf32>
    %31 = vector.shape_cast %30 : vector<16x8xf32> to vector<2x8x8xf32>
    %32 = vector.extract_strided_slice %11 {offsets = [0, 72], sizes = [16, 8], strides = [1, 1]} : vector<16x96xf32> to vector<16x8xf32>
    %33 = vector.shape_cast %32 : vector<16x8xf32> to vector<2x8x8xf32>
    %34 = vector.extract_strided_slice %11 {offsets = [0, 80], sizes = [16, 8], strides = [1, 1]} : vector<16x96xf32> to vector<16x8xf32>
    %35 = vector.shape_cast %34 : vector<16x8xf32> to vector<2x8x8xf32>
    %36 = vector.extract_strided_slice %11 {offsets = [0, 88], sizes = [16, 8], strides = [1, 1]} : vector<16x96xf32> to vector<16x8xf32>
    %37 = vector.shape_cast %36 : vector<16x8xf32> to vector<2x8x8xf32>
    %38 = tpu.concatenate %31, %33, %35, %37 in 0 : vector<2x8x8xf32>, vector<2x8x8xf32>, vector<2x8x8xf32>, vector<2x8x8xf32> -> vector<8x8x8xf32>
    "tpu.trace_start"() <{level = 10 : i32, message = "bqd,bkd->bqk"}> : () -> ()
    %cst_8 = arith.constant dense<0.000000e+00> : vector<8x8x8xf32>
    %39 = tpu.matmul %20, %29, %cst_8 {dimension_numbers = #tpu.dot_dimension_numbers<[2], [2], [1], [1], [0, 0, 0, 1, 1, 1], [0], [0]>} : vector<8x8x8xf32>, vector<8x8x8xf32>, vector<8x8x8xf32> -> vector<8x8x8xf32>
    "tpu.trace_stop"() : () -> ()
    %40 = tpu.iota {dimensions = array<i32: 2>} : vector<8x8x8xi32>
    %41 = arith.sitofp %40 : vector<8x8x8xi32> to vector<8x8x8xf32>
    %cst_9 = arith.constant dense<0xFF800000> : vector<8x8xf32>
    %42 = vector.multi_reduction <maximumf>, %39, %cst_9 [2] : vector<8x8x8xf32> to vector<8x8xf32>
    %43 = vector.shape_cast %42 : vector<8x8xf32> to vector<8x8x1xf32>
    %false = arith.constant false
    %44 = vector.broadcast %false : i1 to vector<8x8x8xi1>
    %cst_10 = arith.constant dense<0xFF800000> : vector<8x8xf32>
    %45 = vector.multi_reduction <maximumf>, %39, %cst_10 [2] : vector<8x8x8xf32> to vector<8x8xf32>
    %46 = vector.shape_cast %45 : vector<8x8xf32> to vector<8x8x1xf32>
    %47 = vector.broadcast %46 : vector<8x8x1xf32> to vector<8x8x8xf32>
    %48 = arith.cmpf oeq, %39, %47 : vector<8x8x8xf32>
    %cst_11 = arith.constant 8.000000e+00 : f32
    %49 = vector.broadcast %cst_11 : f32 to vector<8x8x8xf32>
    %50 = arith.select %48, %41, %49 : vector<8x8x8xi1>, vector<8x8x8xf32>
    %cst_12 = arith.constant dense<0x7F800000> : vector<8x8xf32>
    %51 = vector.multi_reduction <minimumf>, %50, %cst_12 [2] : vector<8x8x8xf32> to vector<8x8xf32>
    %52 = vector.shape_cast %51 : vector<8x8xf32> to vector<8x8x1xf32>
    %53 = vector.broadcast %52 : vector<8x8x1xf32> to vector<8x8x8xf32>
    %54 = arith.cmpf oeq, %41, %53 : vector<8x8x8xf32>
    %55 = arith.ori %44, %54 : vector<8x8x8xi1>
    %cst_13 = arith.constant -1.000000e+30 : f32
    %56 = vector.broadcast %cst_13 : f32 to vector<8x8x8xf32>
    %57 = arith.select %54, %56, %39 : vector<8x8x8xi1>, vector<8x8x8xf32>
    %cst_14 = arith.constant dense<0xFF800000> : vector<8x8xf32>
    %58 = vector.multi_reduction <maximumf>, %57, %cst_14 [2] : vector<8x8x8xf32> to vector<8x8xf32>
    %59 = vector.shape_cast %58 : vector<8x8xf32> to vector<8x8x1xf32>
    %60 = vector.broadcast %59 : vector<8x8x1xf32> to vector<8x8x8xf32>
    %61 = arith.cmpf oeq, %57, %60 : vector<8x8x8xf32>
    %cst_15 = arith.constant 8.000000e+00 : f32
    %62 = vector.broadcast %cst_15 : f32 to vector<8x8x8xf32>
    %63 = arith.select %61, %41, %62 : vector<8x8x8xi1>, vector<8x8x8xf32>
    %cst_16 = arith.constant dense<0x7F800000> : vector<8x8xf32>
    %64 = vector.multi_reduction <minimumf>, %63, %cst_16 [2] : vector<8x8x8xf32> to vector<8x8xf32>
    %65 = vector.shape_cast %64 : vector<8x8xf32> to vector<8x8x1xf32>
    %66 = vector.broadcast %65 : vector<8x8x1xf32> to vector<8x8x8xf32>
    %67 = arith.cmpf oeq, %41, %66 : vector<8x8x8xf32>
    %68 = arith.ori %55, %67 : vector<8x8x8xi1>
    %cst_17 = arith.constant -1.000000e+30 : f32
    %69 = vector.broadcast %cst_17 : f32 to vector<8x8x8xf32>
    %70 = arith.select %67, %69, %57 : vector<8x8x8xi1>, vector<8x8x8xf32>
    %cst_18 = arith.constant dense<0xFF800000> : vector<8x8xf32>
    %71 = vector.multi_reduction <maximumf>, %70, %cst_18 [2] : vector<8x8x8xf32> to vector<8x8xf32>
    %72 = vector.shape_cast %71 : vector<8x8xf32> to vector<8x8x1xf32>
    %73 = vector.broadcast %72 : vector<8x8x1xf32> to vector<8x8x8xf32>
    %74 = arith.cmpf oeq, %70, %73 : vector<8x8x8xf32>
    %cst_19 = arith.constant 8.000000e+00 : f32
    %75 = vector.broadcast %cst_19 : f32 to vector<8x8x8xf32>
    %76 = arith.select %74, %41, %75 : vector<8x8x8xi1>, vector<8x8x8xf32>
    %cst_20 = arith.constant dense<0x7F800000> : vector<8x8xf32>
    %77 = vector.multi_reduction <minimumf>, %76, %cst_20 [2] : vector<8x8x8xf32> to vector<8x8xf32>
    %78 = vector.shape_cast %77 : vector<8x8xf32> to vector<8x8x1xf32>
    %79 = vector.broadcast %78 : vector<8x8x1xf32> to vector<8x8x8xf32>
    %80 = arith.cmpf oeq, %41, %79 : vector<8x8x8xf32>
    %81 = arith.ori %68, %80 : vector<8x8x8xi1>
    %cst_21 = arith.constant -1.000000e+30 : f32
    %82 = vector.broadcast %cst_21 : f32 to vector<8x8x8xf32>
    %83 = arith.select %80, %82, %70 : vector<8x8x8xi1>, vector<8x8x8xf32>
    %cst_22 = arith.constant dense<0xFF800000> : vector<8x8xf32>
    %84 = vector.multi_reduction <maximumf>, %83, %cst_22 [2] : vector<8x8x8xf32> to vector<8x8xf32>
    %85 = vector.shape_cast %84 : vector<8x8xf32> to vector<8x8x1xf32>
    %86 = vector.broadcast %85 : vector<8x8x1xf32> to vector<8x8x8xf32>
    %87 = arith.cmpf oeq, %83, %86 : vector<8x8x8xf32>
    %cst_23 = arith.constant 8.000000e+00 : f32
    %88 = vector.broadcast %cst_23 : f32 to vector<8x8x8xf32>
    %89 = arith.select %87, %41, %88 : vector<8x8x8xi1>, vector<8x8x8xf32>
    %cst_24 = arith.constant dense<0x7F800000> : vector<8x8xf32>
    %90 = vector.multi_reduction <minimumf>, %89, %cst_24 [2] : vector<8x8x8xf32> to vector<8x8xf32>
    %91 = vector.shape_cast %90 : vector<8x8xf32> to vector<8x8x1xf32>
    %92 = vector.broadcast %91 : vector<8x8x1xf32> to vector<8x8x8xf32>
    %93 = arith.cmpf oeq, %41, %92 : vector<8x8x8xf32>
    %94 = arith.ori %81, %93 : vector<8x8x8xi1>
    %95 = vector.broadcast %43 : vector<8x8x1xf32> to vector<8x8x8xf32>
    %96 = arith.subf %39, %95 : vector<8x8x8xf32>
    %97 = math.exp %96 : vector<8x8x8xf32>
    %cst_25 = arith.constant 0.000000e+00 : f32
    %98 = vector.broadcast %cst_25 : f32 to vector<8x8x8xf32>
    %99 = arith.select %94, %97, %98 : vector<8x8x8xi1>, vector<8x8x8xf32>
    %cst_26 = arith.constant dense<0.000000e+00> : vector<8x8xf32>
    %100 = vector.multi_reduction <add>, %99, %cst_26 [2] : vector<8x8x8xf32> to vector<8x8xf32>
    %101 = vector.shape_cast %100 : vector<8x8xf32> to vector<8x8x1xf32>
    %102 = vector.broadcast %101 : vector<8x8x1xf32> to vector<8x8x8xf32>
    %103 = arith.divf %99, %102 : vector<8x8x8xf32>
    "tpu.trace_start"() <{level = 10 : i32, message = "bqk,bkd->bqd"}> : () -> ()
    %cst_27 = arith.constant dense<0.000000e+00> : vector<8x8x8xf32>
    %104 = tpu.matmul %103, %38, %cst_27 {dimension_numbers = #tpu.dot_dimension_numbers<[2], [1], [1], [2], [0, 0, 0, 1, 1, 2], [0], [0]>} : vector<8x8x8xf32>, vector<8x8x8xf32>, vector<8x8x8xf32> -> vector<8x8x8xf32>
    "tpu.trace_stop"() : () -> ()
    %105 = vector.extract_strided_slice %104 {offsets = [0, 0, 0], sizes = [1, 8, 8], strides = [1, 1, 1]} : vector<8x8x8xf32> to vector<1x8x8xf32>
    %106 = vector.shape_cast %105 : vector<1x8x8xf32> to vector<8x8xf32>
    %107 = vector.extract_strided_slice %106 {offsets = [0, 0], sizes = [1, 8], strides = [1, 1]} : vector<8x8xf32> to vector<1x8xf32>
    %108 = vector.extract_strided_slice %106 {offsets = [1, 0], sizes = [1, 8], strides = [1, 1]} : vector<8x8xf32> to vector<1x8xf32>
    %109 = vector.extract_strided_slice %106 {offsets = [2, 0], sizes = [1, 8], strides = [1, 1]} : vector<8x8xf32> to vector<1x8xf32>
    %110 = vector.extract_strided_slice %106 {offsets = [3, 0], sizes = [1, 8], strides = [1, 1]} : vector<8x8xf32> to vector<1x8xf32>
    %111 = tpu.concatenate %107, %108, %109, %110 in 1 : vector<1x8xf32>, vector<1x8xf32>, vector<1x8xf32>, vector<1x8xf32> -> vector<1x32xf32>
    %112 = vector.extract_strided_slice %106 {offsets = [4, 0], sizes = [1, 8], strides = [1, 1]} : vector<8x8xf32> to vector<1x8xf32>
    %113 = vector.extract_strided_slice %106 {offsets = [5, 0], sizes = [1, 8], strides = [1, 1]} : vector<8x8xf32> to vector<1x8xf32>
    %114 = vector.extract_strided_slice %106 {offsets = [6, 0], sizes = [1, 8], strides = [1, 1]} : vector<8x8xf32> to vector<1x8xf32>
    %115 = vector.extract_strided_slice %106 {offsets = [7, 0], sizes = [1, 8], strides = [1, 1]} : vector<8x8xf32> to vector<1x8xf32>
    %116 = tpu.concatenate %112, %113, %114, %115 in 1 : vector<1x8xf32>, vector<1x8xf32>, vector<1x8xf32>, vector<1x8xf32> -> vector<1x32xf32>
    %117 = vector.extract_strided_slice %104 {offsets = [2, 0, 0], sizes = [1, 8, 8], strides = [1, 1, 1]} : vector<8x8x8xf32> to vector<1x8x8xf32>
    %118 = vector.shape_cast %117 : vector<1x8x8xf32> to vector<8x8xf32>
    %119 = vector.extract_strided_slice %118 {offsets = [0, 0], sizes = [1, 8], strides = [1, 1]} : vector<8x8xf32> to vector<1x8xf32>
    %120 = vector.extract_strided_slice %118 {offsets = [1, 0], sizes = [1, 8], strides = [1, 1]} : vector<8x8xf32> to vector<1x8xf32>
    %121 = vector.extract_strided_slice %118 {offsets = [2, 0], sizes = [1, 8], strides = [1, 1]} : vector<8x8xf32> to vector<1x8xf32>
    %122 = vector.extract_strided_slice %118 {offsets = [3, 0], sizes = [1, 8], strides = [1, 1]} : vector<8x8xf32> to vector<1x8xf32>
    %123 = tpu.concatenate %119, %120, %121, %122 in 1 : vector<1x8xf32>, vector<1x8xf32>, vector<1x8xf32>, vector<1x8xf32> -> vector<1x32xf32>
    %124 = vector.extract_strided_slice %118 {offsets = [4, 0], sizes = [1, 8], strides = [1, 1]} : vector<8x8xf32> to vector<1x8xf32>
    %125 = vector.extract_strided_slice %118 {offsets = [5, 0], sizes = [1, 8], strides = [1, 1]} : vector<8x8xf32> to vector<1x8xf32>
    %126 = vector.extract_strided_slice %118 {offsets = [6, 0], sizes = [1, 8], strides = [1, 1]} : vector<8x8xf32> to vector<1x8xf32>
    %127 = vector.extract_strided_slice %118 {offsets = [7, 0], sizes = [1, 8], strides = [1, 1]} : vector<8x8xf32> to vector<1x8xf32>
    %128 = tpu.concatenate %124, %125, %126, %127 in 1 : vector<1x8xf32>, vector<1x8xf32>, vector<1x8xf32>, vector<1x8xf32> -> vector<1x32xf32>
    %129 = vector.extract_strided_slice %104 {offsets = [4, 0, 0], sizes = [1, 8, 8], strides = [1, 1, 1]} : vector<8x8x8xf32> to vector<1x8x8xf32>
    %130 = vector.shape_cast %129 : vector<1x8x8xf32> to vector<8x8xf32>
    %131 = vector.extract_strided_slice %130 {offsets = [0, 0], sizes = [1, 8], strides = [1, 1]} : vector<8x8xf32> to vector<1x8xf32>
    %132 = vector.extract_strided_slice %130 {offsets = [1, 0], sizes = [1, 8], strides = [1, 1]} : vector<8x8xf32> to vector<1x8xf32>
    %133 = vector.extract_strided_slice %130 {offsets = [2, 0], sizes = [1, 8], strides = [1, 1]} : vector<8x8xf32> to vector<1x8xf32>
    %134 = vector.extract_strided_slice %130 {offsets = [3, 0], sizes = [1, 8], strides = [1, 1]} : vector<8x8xf32> to vector<1x8xf32>
    %135 = tpu.concatenate %131, %132, %133, %134 in 1 : vector<1x8xf32>, vector<1x8xf32>, vector<1x8xf32>, vector<1x8xf32> -> vector<1x32xf32>
    %136 = vector.extract_strided_slice %130 {offsets = [4, 0], sizes = [1, 8], strides = [1, 1]} : vector<8x8xf32> to vector<1x8xf32>
    %137 = vector.extract_strided_slice %130 {offsets = [5, 0], sizes = [1, 8], strides = [1, 1]} : vector<8x8xf32> to vector<1x8xf32>
    %138 = vector.extract_strided_slice %130 {offsets = [6, 0], sizes = [1, 8], strides = [1, 1]} : vector<8x8xf32> to vector<1x8xf32>
    %139 = vector.extract_strided_slice %130 {offsets = [7, 0], sizes = [1, 8], strides = [1, 1]} : vector<8x8xf32> to vector<1x8xf32>
    %140 = tpu.concatenate %136, %137, %138, %139 in 1 : vector<1x8xf32>, vector<1x8xf32>, vector<1x8xf32>, vector<1x8xf32> -> vector<1x32xf32>
    %141 = vector.extract_strided_slice %104 {offsets = [6, 0, 0], sizes = [1, 8, 8], strides = [1, 1, 1]} : vector<8x8x8xf32> to vector<1x8x8xf32>
    %142 = vector.shape_cast %141 : vector<1x8x8xf32> to vector<8x8xf32>
    %143 = vector.extract_strided_slice %142 {offsets = [0, 0], sizes = [1, 8], strides = [1, 1]} : vector<8x8xf32> to vector<1x8xf32>
    %144 = vector.extract_strided_slice %142 {offsets = [1, 0], sizes = [1, 8], strides = [1, 1]} : vector<8x8xf32> to vector<1x8xf32>
    %145 = vector.extract_strided_slice %142 {offsets = [2, 0], sizes = [1, 8], strides = [1, 1]} : vector<8x8xf32> to vector<1x8xf32>
    %146 = vector.extract_strided_slice %142 {offsets = [3, 0], sizes = [1, 8], strides = [1, 1]} : vector<8x8xf32> to vector<1x8xf32>
    %147 = tpu.concatenate %143, %144, %145, %146 in 1 : vector<1x8xf32>, vector<1x8xf32>, vector<1x8xf32>, vector<1x8xf32> -> vector<1x32xf32>
    %148 = vector.extract_strided_slice %142 {offsets = [4, 0], sizes = [1, 8], strides = [1, 1]} : vector<8x8xf32> to vector<1x8xf32>
    %149 = vector.extract_strided_slice %142 {offsets = [5, 0], sizes = [1, 8], strides = [1, 1]} : vector<8x8xf32> to vector<1x8xf32>
    %150 = vector.extract_strided_slice %142 {offsets = [6, 0], sizes = [1, 8], strides = [1, 1]} : vector<8x8xf32> to vector<1x8xf32>
    %151 = vector.extract_strided_slice %142 {offsets = [7, 0], sizes = [1, 8], strides = [1, 1]} : vector<8x8xf32> to vector<1x8xf32>
    %152 = tpu.concatenate %148, %149, %150, %151 in 1 : vector<1x8xf32>, vector<1x8xf32>, vector<1x8xf32>, vector<1x8xf32> -> vector<1x32xf32>
    %153 = vector.extract_strided_slice %104 {offsets = [1, 0, 0], sizes = [1, 8, 8], strides = [1, 1, 1]} : vector<8x8x8xf32> to vector<1x8x8xf32>
    %154 = vector.shape_cast %153 : vector<1x8x8xf32> to vector<8x8xf32>
    %155 = vector.extract_strided_slice %154 {offsets = [0, 0], sizes = [1, 8], strides = [1, 1]} : vector<8x8xf32> to vector<1x8xf32>
    %156 = vector.extract_strided_slice %154 {offsets = [1, 0], sizes = [1, 8], strides = [1, 1]} : vector<8x8xf32> to vector<1x8xf32>
    %157 = vector.extract_strided_slice %154 {offsets = [2, 0], sizes = [1, 8], strides = [1, 1]} : vector<8x8xf32> to vector<1x8xf32>
    %158 = vector.extract_strided_slice %154 {offsets = [3, 0], sizes = [1, 8], strides = [1, 1]} : vector<8x8xf32> to vector<1x8xf32>
    %159 = tpu.concatenate %155, %156, %157, %158 in 1 : vector<1x8xf32>, vector<1x8xf32>, vector<1x8xf32>, vector<1x8xf32> -> vector<1x32xf32>
    %160 = vector.extract_strided_slice %154 {offsets = [4, 0], sizes = [1, 8], strides = [1, 1]} : vector<8x8xf32> to vector<1x8xf32>
    %161 = vector.extract_strided_slice %154 {offsets = [5, 0], sizes = [1, 8], strides = [1, 1]} : vector<8x8xf32> to vector<1x8xf32>
    %162 = vector.extract_strided_slice %154 {offsets = [6, 0], sizes = [1, 8], strides = [1, 1]} : vector<8x8xf32> to vector<1x8xf32>
    %163 = vector.extract_strided_slice %154 {offsets = [7, 0], sizes = [1, 8], strides = [1, 1]} : vector<8x8xf32> to vector<1x8xf32>
    %164 = tpu.concatenate %160, %161, %162, %163 in 1 : vector<1x8xf32>, vector<1x8xf32>, vector<1x8xf32>, vector<1x8xf32> -> vector<1x32xf32>
    %165 = vector.extract_strided_slice %104 {offsets = [3, 0, 0], sizes = [1, 8, 8], strides = [1, 1, 1]} : vector<8x8x8xf32> to vector<1x8x8xf32>
    %166 = vector.shape_cast %165 : vector<1x8x8xf32> to vector<8x8xf32>
    %167 = vector.extract_strided_slice %166 {offsets = [0, 0], sizes = [1, 8], strides = [1, 1]} : vector<8x8xf32> to vector<1x8xf32>
    %168 = vector.extract_strided_slice %166 {offsets = [1, 0], sizes = [1, 8], strides = [1, 1]} : vector<8x8xf32> to vector<1x8xf32>
    %169 = vector.extract_strided_slice %166 {offsets = [2, 0], sizes = [1, 8], strides = [1, 1]} : vector<8x8xf32> to vector<1x8xf32>
    %170 = vector.extract_strided_slice %166 {offsets = [3, 0], sizes = [1, 8], strides = [1, 1]} : vector<8x8xf32> to vector<1x8xf32>
    %171 = tpu.concatenate %167, %168, %169, %170 in 1 : vector<1x8xf32>, vector<1x8xf32>, vector<1x8xf32>, vector<1x8xf32> -> vector<1x32xf32>
    %172 = vector.extract_strided_slice %166 {offsets = [4, 0], sizes = [1, 8], strides = [1, 1]} : vector<8x8xf32> to vector<1x8xf32>
    %173 = vector.extract_strided_slice %166 {offsets = [5, 0], sizes = [1, 8], strides = [1, 1]} : vector<8x8xf32> to vector<1x8xf32>
    %174 = vector.extract_strided_slice %166 {offsets = [6, 0], sizes = [1, 8], strides = [1, 1]} : vector<8x8xf32> to vector<1x8xf32>
    %175 = vector.extract_strided_slice %166 {offsets = [7, 0], sizes = [1, 8], strides = [1, 1]} : vector<8x8xf32> to vector<1x8xf32>
    %176 = tpu.concatenate %172, %173, %174, %175 in 1 : vector<1x8xf32>, vector<1x8xf32>, vector<1x8xf32>, vector<1x8xf32> -> vector<1x32xf32>
    %177 = vector.extract_strided_slice %104 {offsets = [5, 0, 0], sizes = [1, 8, 8], strides = [1, 1, 1]} : vector<8x8x8xf32> to vector<1x8x8xf32>
    %178 = vector.shape_cast %177 : vector<1x8x8xf32> to vector<8x8xf32>
    %179 = vector.extract_strided_slice %178 {offsets = [0, 0], sizes = [1, 8], strides = [1, 1]} : vector<8x8xf32> to vector<1x8xf32>
    %180 = vector.extract_strided_slice %178 {offsets = [1, 0], sizes = [1, 8], strides = [1, 1]} : vector<8x8xf32> to vector<1x8xf32>
    %181 = vector.extract_strided_slice %178 {offsets = [2, 0], sizes = [1, 8], strides = [1, 1]} : vector<8x8xf32> to vector<1x8xf32>
    %182 = vector.extract_strided_slice %178 {offsets = [3, 0], sizes = [1, 8], strides = [1, 1]} : vector<8x8xf32> to vector<1x8xf32>
    %183 = tpu.concatenate %179, %180, %181, %182 in 1 : vector<1x8xf32>, vector<1x8xf32>, vector<1x8xf32>, vector<1x8xf32> -> vector<1x32xf32>
    %184 = vector.extract_strided_slice %178 {offsets = [4, 0], sizes = [1, 8], strides = [1, 1]} : vector<8x8xf32> to vector<1x8xf32>
    %185 = vector.extract_strided_slice %178 {offsets = [5, 0], sizes = [1, 8], strides = [1, 1]} : vector<8x8xf32> to vector<1x8xf32>
    %186 = vector.extract_strided_slice %178 {offsets = [6, 0], sizes = [1, 8], strides = [1, 1]} : vector<8x8xf32> to vector<1x8xf32>
    %187 = vector.extract_strided_slice %178 {offsets = [7, 0], sizes = [1, 8], strides = [1, 1]} : vector<8x8xf32> to vector<1x8xf32>
    %188 = tpu.concatenate %184, %185, %186, %187 in 1 : vector<1x8xf32>, vector<1x8xf32>, vector<1x8xf32>, vector<1x8xf32> -> vector<1x32xf32>
    %189 = vector.extract_strided_slice %104 {offsets = [7, 0, 0], sizes = [1, 8, 8], strides = [1, 1, 1]} : vector<8x8x8xf32> to vector<1x8x8xf32>
    %190 = vector.shape_cast %189 : vector<1x8x8xf32> to vector<8x8xf32>
    %191 = vector.extract_strided_slice %190 {offsets = [0, 0], sizes = [1, 8], strides = [1, 1]} : vector<8x8xf32> to vector<1x8xf32>
    %192 = vector.extract_strided_slice %190 {offsets = [1, 0], sizes = [1, 8], strides = [1, 1]} : vector<8x8xf32> to vector<1x8xf32>
    %193 = vector.extract_strided_slice %190 {offsets = [2, 0], sizes = [1, 8], strides = [1, 1]} : vector<8x8xf32> to vector<1x8xf32>
    %194 = vector.extract_strided_slice %190 {offsets = [3, 0], sizes = [1, 8], strides = [1, 1]} : vector<8x8xf32> to vector<1x8xf32>
    %195 = tpu.concatenate %191, %192, %193, %194 in 1 : vector<1x8xf32>, vector<1x8xf32>, vector<1x8xf32>, vector<1x8xf32> -> vector<1x32xf32>
    %196 = vector.extract_strided_slice %190 {offsets = [4, 0], sizes = [1, 8], strides = [1, 1]} : vector<8x8xf32> to vector<1x8xf32>
    %197 = vector.extract_strided_slice %190 {offsets = [5, 0], sizes = [1, 8], strides = [1, 1]} : vector<8x8xf32> to vector<1x8xf32>
    %198 = vector.extract_strided_slice %190 {offsets = [6, 0], sizes = [1, 8], strides = [1, 1]} : vector<8x8xf32> to vector<1x8xf32>
    %199 = vector.extract_strided_slice %190 {offsets = [7, 0], sizes = [1, 8], strides = [1, 1]} : vector<8x8xf32> to vector<1x8xf32>
    %200 = tpu.concatenate %196, %197, %198, %199 in 1 : vector<1x8xf32>, vector<1x8xf32>, vector<1x8xf32>, vector<1x8xf32> -> vector<1x32xf32>
    %201 = tpu.concatenate %111, %116, %123, %128, %135, %140, %147, %152, %159, %164, %171, %176, %183, %188, %195, %200 in 0 : vector<1x32xf32>, vector<1x32xf32>, vector<1x32xf32>, vector<1x32xf32>, vector<1x32xf32>, vector<1x32xf32>, vector<1x32xf32>, vector<1x32xf32>, vector<1x32xf32>, vector<1x32xf32>, vector<1x32xf32>, vector<1x32xf32>, vector<1x32xf32>, vector<1x32xf32>, vector<1x32xf32>, vector<1x32xf32> -> vector<16x32xf32>
    %c0_28 = arith.constant 0 : index
    %c0_29 = arith.constant 0 : index
    %202 = vector.load %arg4[%c0_28, %c0_29] : memref<32x32xf32, #tpu.memory_space<vmem>>, vector<32x32xf32>
    %cst_30 = arith.constant dense<0.000000e+00> : vector<16x32xf32>
    %203 = tpu.matmul %201, %202, %cst_30 {dimension_numbers = #tpu.dot_dimension_numbers<[1], [0], [0], [1], [0, 0, 1, 1], [], []>} : vector<16x32xf32>, vector<32x32xf32>, vector<16x32xf32> -> vector<16x32xf32>
    %c0_31 = arith.constant 0 : index
    %c0_32 = arith.constant 0 : index
    %204 = vector.load %arg5[%c0_31, %c0_32] : memref<1x32xf32, #tpu.memory_space<vmem>>, vector<1x32xf32>
    %205 = vector.broadcast %204 : vector<1x32xf32> to vector<16x32xf32>
    %206 = arith.addf %203, %205 : vector<16x32xf32>
    %207 = arith.addf %206, %9 : vector<16x32xf32>
    %c0_33 = arith.constant 0 : index
    %c0_34 = arith.constant 0 : index
    %208 = vector.load %arg6[%c0_33, %c0_34] : memref<1x32xf32, #tpu.memory_space<vmem>>, vector<1x32xf32>
    %c0_35 = arith.constant 0 : index
    %c0_36 = arith.constant 0 : index
    %209 = vector.load %arg7[%c0_35, %c0_36] : memref<1x32xf32, #tpu.memory_space<vmem>>, vector<1x32xf32>
    %cst_37 = arith.constant dense<0.000000e+00> : vector<16xf32>
    %210 = vector.multi_reduction <add>, %207, %cst_37 [1] : vector<16x32xf32> to vector<16xf32>
    %211 = vector.shape_cast %210 : vector<16xf32> to vector<16x1xf32>
    %cst_38 = arith.constant 3.200000e+01 : f32
    %212 = vector.broadcast %cst_38 : f32 to vector<16x1xf32>
    %213 = arith.divf %211, %212 : vector<16x1xf32>
    %214 = vector.broadcast %213 : vector<16x1xf32> to vector<16x32xf32>
    %215 = arith.subf %207, %214 : vector<16x32xf32>
    %216 = arith.mulf %215, %215 : vector<16x32xf32>
    %cst_39 = arith.constant dense<0.000000e+00> : vector<16xf32>
    %217 = vector.multi_reduction <add>, %216, %cst_39 [1] : vector<16x32xf32> to vector<16xf32>
    %218 = vector.shape_cast %217 : vector<16xf32> to vector<16x1xf32>
    %cst_40 = arith.constant 3.200000e+01 : f32
    %219 = vector.broadcast %cst_40 : f32 to vector<16x1xf32>
    %220 = arith.divf %218, %219 : vector<16x1xf32>
    %cst_41 = arith.constant 9.99999974E-6 : f32
    %221 = vector.broadcast %cst_41 : f32 to vector<16x1xf32>
    %222 = arith.addf %220, %221 : vector<16x1xf32>
    %223 = math.rsqrt %222 : vector<16x1xf32>
    %224 = vector.broadcast %223 : vector<16x1xf32> to vector<16x32xf32>
    %225 = arith.mulf %215, %224 : vector<16x32xf32>
    %226 = vector.broadcast %208 : vector<1x32xf32> to vector<16x32xf32>
    %227 = arith.mulf %225, %226 : vector<16x32xf32>
    %228 = vector.broadcast %209 : vector<1x32xf32> to vector<16x32xf32>
    %229 = arith.addf %227, %228 : vector<16x32xf32>
    %c0_42 = arith.constant 0 : index
    %c0_43 = arith.constant 0 : index
    %230 = vector.load %arg8[%c0_42, %c0_43] : memref<32x128xf32, #tpu.memory_space<vmem>>, vector<32x128xf32>
    %cst_44 = arith.constant dense<0.000000e+00> : vector<16x128xf32>
    %231 = tpu.matmul %229, %230, %cst_44 {dimension_numbers = #tpu.dot_dimension_numbers<[1], [0], [0], [1], [0, 0, 1, 1], [], []>} : vector<16x32xf32>, vector<32x128xf32>, vector<16x128xf32> -> vector<16x128xf32>
    %c0_45 = arith.constant 0 : index
    %c0_46 = arith.constant 0 : index
    %232 = vector.load %arg9[%c0_45, %c0_46] : memref<1x128xf32, #tpu.memory_space<vmem>>, vector<1x128xf32>
    %233 = vector.broadcast %232 : vector<1x128xf32> to vector<16x128xf32>
    %234 = arith.addf %231, %233 : vector<16x128xf32>
    %cst_47 = arith.constant 0.000000e+00 : f32
    %235 = vector.broadcast %cst_47 : f32 to vector<16x128xf32>
    %236 = arith.maximumf %234, %235 : vector<16x128xf32>
    %c0_48 = arith.constant 0 : index
    %c0_49 = arith.constant 0 : index
    %237 = vector.load %arg10[%c0_48, %c0_49] : memref<128x32xf32, #tpu.memory_space<vmem>>, vector<128x32xf32>
    %cst_50 = arith.constant dense<0.000000e+00> : vector<16x32xf32>
    %238 = tpu.matmul %236, %237, %cst_50 {dimension_numbers = #tpu.dot_dimension_numbers<[1], [0], [0], [1], [0, 0, 1, 1], [], []>} : vector<16x128xf32>, vector<128x32xf32>, vector<16x32xf32> -> vector<16x32xf32>
    %c0_51 = arith.constant 0 : index
    %c0_52 = arith.constant 0 : index
    %239 = vector.load %arg11[%c0_51, %c0_52] : memref<1x32xf32, #tpu.memory_space<vmem>>, vector<1x32xf32>
    %240 = vector.broadcast %239 : vector<1x32xf32> to vector<16x32xf32>
    %241 = arith.addf %238, %240 : vector<16x32xf32>
    %242 = arith.addf %241, %229 : vector<16x32xf32>
    %c0_53 = arith.constant 0 : index
    %c0_54 = arith.constant 0 : index
    %243 = vector.load %arg12[%c0_53, %c0_54] : memref<1x32xf32, #tpu.memory_space<vmem>>, vector<1x32xf32>
    %c0_55 = arith.constant 0 : index
    %c0_56 = arith.constant 0 : index
    %244 = vector.load %arg13[%c0_55, %c0_56] : memref<1x32xf32, #tpu.memory_space<vmem>>, vector<1x32xf32>
    %cst_57 = arith.constant dense<0.000000e+00> : vector<16xf32>
    %245 = vector.multi_reduction <add>, %242, %cst_57 [1] : vector<16x32xf32> to vector<16xf32>
    %246 = vector.shape_cast %245 : vector<16xf32> to vector<16x1xf32>
    %cst_58 = arith.constant 3.200000e+01 : f32
    %247 = vector.broadcast %cst_58 : f32 to vector<16x1xf32>
    %248 = arith.divf %246, %247 : vector<16x1xf32>
    %249 = vector.broadcast %248 : vector<16x1xf32> to vector<16x32xf32>
    %250 = arith.subf %242, %249 : vector<16x32xf32>
    %251 = arith.mulf %250, %250 : vector<16x32xf32>
    %cst_59 = arith.constant dense<0.000000e+00> : vector<16xf32>
    %252 = vector.multi_reduction <add>, %251, %cst_59 [1] : vector<16x32xf32> to vector<16xf32>
    %253 = vector.shape_cast %252 : vector<16xf32> to vector<16x1xf32>
    %cst_60 = arith.constant 3.200000e+01 : f32
    %254 = vector.broadcast %cst_60 : f32 to vector<16x1xf32>
    %255 = arith.divf %253, %254 : vector<16x1xf32>
    %cst_61 = arith.constant 9.99999974E-6 : f32
    %256 = vector.broadcast %cst_61 : f32 to vector<16x1xf32>
    %257 = arith.addf %255, %256 : vector<16x1xf32>
    %258 = math.rsqrt %257 : vector<16x1xf32>
    %259 = vector.broadcast %258 : vector<16x1xf32> to vector<16x32xf32>
    %260 = arith.mulf %250, %259 : vector<16x32xf32>
    %261 = vector.broadcast %243 : vector<1x32xf32> to vector<16x32xf32>
    %262 = arith.mulf %260, %261 : vector<16x32xf32>
    %263 = vector.broadcast %244 : vector<1x32xf32> to vector<16x32xf32>
    %264 = arith.addf %262, %263 : vector<16x32xf32>
    %c0_62 = arith.constant 0 : index
    %c0_63 = arith.constant 0 : index
    %265 = vector.load %arg14[%c0_62, %c0_63] : memref<32x96xf32, #tpu.memory_space<vmem>>, vector<32x96xf32>
    %cst_64 = arith.constant dense<0.000000e+00> : vector<16x96xf32>
    %266 = tpu.matmul %264, %265, %cst_64 {dimension_numbers = #tpu.dot_dimension_numbers<[1], [0], [0], [1], [0, 0, 1, 1], [], []>} : vector<16x32xf32>, vector<32x96xf32>, vector<16x96xf32> -> vector<16x96xf32>
    %267 = vector.extract_strided_slice %266 {offsets = [0, 0], sizes = [16, 8], strides = [1, 1]} : vector<16x96xf32> to vector<16x8xf32>
    %268 = vector.shape_cast %267 : vector<16x8xf32> to vector<2x8x8xf32>
    %269 = vector.extract_strided_slice %266 {offsets = [0, 8], sizes = [16, 8], strides = [1, 1]} : vector<16x96xf32> to vector<16x8xf32>
    %270 = vector.shape_cast %269 : vector<16x8xf32> to vector<2x8x8xf32>
    %271 = vector.extract_strided_slice %266 {offsets = [0, 16], sizes = [16, 8], strides = [1, 1]} : vector<16x96xf32> to vector<16x8xf32>
    %272 = vector.shape_cast %271 : vector<16x8xf32> to vector<2x8x8xf32>
    %273 = vector.extract_strided_slice %266 {offsets = [0, 24], sizes = [16, 8], strides = [1, 1]} : vector<16x96xf32> to vector<16x8xf32>
    %274 = vector.shape_cast %273 : vector<16x8xf32> to vector<2x8x8xf32>
    %275 = tpu.concatenate %268, %270, %272, %274 in 0 : vector<2x8x8xf32>, vector<2x8x8xf32>, vector<2x8x8xf32>, vector<2x8x8xf32> -> vector<8x8x8xf32>
    %276 = vector.extract_strided_slice %266 {offsets = [0, 32], sizes = [16, 8], strides = [1, 1]} : vector<16x96xf32> to vector<16x8xf32>
    %277 = vector.shape_cast %276 : vector<16x8xf32> to vector<2x8x8xf32>
    %278 = vector.extract_strided_slice %266 {offsets = [0, 40], sizes = [16, 8], strides = [1, 1]} : vector<16x96xf32> to vector<16x8xf32>
    %279 = vector.shape_cast %278 : vector<16x8xf32> to vector<2x8x8xf32>
    %280 = vector.extract_strided_slice %266 {offsets = [0, 48], sizes = [16, 8], strides = [1, 1]} : vector<16x96xf32> to vector<16x8xf32>
    %281 = vector.shape_cast %280 : vector<16x8xf32> to vector<2x8x8xf32>
    %282 = vector.extract_strided_slice %266 {offsets = [0, 56], sizes = [16, 8], strides = [1, 1]} : vector<16x96xf32> to vector<16x8xf32>
    %283 = vector.shape_cast %282 : vector<16x8xf32> to vector<2x8x8xf32>
    %284 = tpu.concatenate %277, %279, %281, %283 in 0 : vector<2x8x8xf32>, vector<2x8x8xf32>, vector<2x8x8xf32>, vector<2x8x8xf32> -> vector<8x8x8xf32>
    %285 = vector.extract_strided_slice %266 {offsets = [0, 64], sizes = [16, 8], strides = [1, 1]} : vector<16x96xf32> to vector<16x8xf32>
    %286 = vector.shape_cast %285 : vector<16x8xf32> to vector<2x8x8xf32>
    %287 = vector.extract_strided_slice %266 {offsets = [0, 72], sizes = [16, 8], strides = [1, 1]} : vector<16x96xf32> to vector<16x8xf32>
    %288 = vector.shape_cast %287 : vector<16x8xf32> to vector<2x8x8xf32>
    %289 = vector.extract_strided_slice %266 {offsets = [0, 80], sizes = [16, 8], strides = [1, 1]} : vector<16x96xf32> to vector<16x8xf32>
    %290 = vector.shape_cast %289 : vector<16x8xf32> to vector<2x8x8xf32>
    %291 = vector.extract_strided_slice %266 {offsets = [0, 88], sizes = [16, 8], strides = [1, 1]} : vector<16x96xf32> to vector<16x8xf32>
    %292 = vector.shape_cast %291 : vector<16x8xf32> to vector<2x8x8xf32>
    %293 = tpu.concatenate %286, %288, %290, %292 in 0 : vector<2x8x8xf32>, vector<2x8x8xf32>, vector<2x8x8xf32>, vector<2x8x8xf32> -> vector<8x8x8xf32>
    "tpu.trace_start"() <{level = 10 : i32, message = "bqd,bkd->bqk"}> : () -> ()
    %cst_65 = arith.constant dense<0.000000e+00> : vector<8x8x8xf32>
    %294 = tpu.matmul %275, %284, %cst_65 {dimension_numbers = #tpu.dot_dimension_numbers<[2], [2], [1], [1], [0, 0, 0, 1, 1, 1], [0], [0]>} : vector<8x8x8xf32>, vector<8x8x8xf32>, vector<8x8x8xf32> -> vector<8x8x8xf32>
    "tpu.trace_stop"() : () -> ()
    %295 = tpu.iota {dimensions = array<i32: 2>} : vector<8x8x8xi32>
    %296 = arith.sitofp %295 : vector<8x8x8xi32> to vector<8x8x8xf32>
    %cst_66 = arith.constant dense<0xFF800000> : vector<8x8xf32>
    %297 = vector.multi_reduction <maximumf>, %294, %cst_66 [2] : vector<8x8x8xf32> to vector<8x8xf32>
    %298 = vector.shape_cast %297 : vector<8x8xf32> to vector<8x8x1xf32>
    %false_67 = arith.constant false
    %299 = vector.broadcast %false_67 : i1 to vector<8x8x8xi1>
    %cst_68 = arith.constant dense<0xFF800000> : vector<8x8xf32>
    %300 = vector.multi_reduction <maximumf>, %294, %cst_68 [2] : vector<8x8x8xf32> to vector<8x8xf32>
    %301 = vector.shape_cast %300 : vector<8x8xf32> to vector<8x8x1xf32>
    %302 = vector.broadcast %301 : vector<8x8x1xf32> to vector<8x8x8xf32>
    %303 = arith.cmpf oeq, %294, %302 : vector<8x8x8xf32>
    %cst_69 = arith.constant 8.000000e+00 : f32
    %304 = vector.broadcast %cst_69 : f32 to vector<8x8x8xf32>
    %305 = arith.select %303, %296, %304 : vector<8x8x8xi1>, vector<8x8x8xf32>
    %cst_70 = arith.constant dense<0x7F800000> : vector<8x8xf32>
    %306 = vector.multi_reduction <minimumf>, %305, %cst_70 [2] : vector<8x8x8xf32> to vector<8x8xf32>
    %307 = vector.shape_cast %306 : vector<8x8xf32> to vector<8x8x1xf32>
    %308 = vector.broadcast %307 : vector<8x8x1xf32> to vector<8x8x8xf32>
    %309 = arith.cmpf oeq, %296, %308 : vector<8x8x8xf32>
    %310 = arith.ori %299, %309 : vector<8x8x8xi1>
    %cst_71 = arith.constant -1.000000e+30 : f32
    %311 = vector.broadcast %cst_71 : f32 to vector<8x8x8xf32>
    %312 = arith.select %309, %311, %294 : vector<8x8x8xi1>, vector<8x8x8xf32>
    %cst_72 = arith.constant dense<0xFF800000> : vector<8x8xf32>
    %313 = vector.multi_reduction <maximumf>, %312, %cst_72 [2] : vector<8x8x8xf32> to vector<8x8xf32>
    %314 = vector.shape_cast %313 : vector<8x8xf32> to vector<8x8x1xf32>
    %315 = vector.broadcast %314 : vector<8x8x1xf32> to vector<8x8x8xf32>
    %316 = arith.cmpf oeq, %312, %315 : vector<8x8x8xf32>
    %cst_73 = arith.constant 8.000000e+00 : f32
    %317 = vector.broadcast %cst_73 : f32 to vector<8x8x8xf32>
    %318 = arith.select %316, %296, %317 : vector<8x8x8xi1>, vector<8x8x8xf32>
    %cst_74 = arith.constant dense<0x7F800000> : vector<8x8xf32>
    %319 = vector.multi_reduction <minimumf>, %318, %cst_74 [2] : vector<8x8x8xf32> to vector<8x8xf32>
    %320 = vector.shape_cast %319 : vector<8x8xf32> to vector<8x8x1xf32>
    %321 = vector.broadcast %320 : vector<8x8x1xf32> to vector<8x8x8xf32>
    %322 = arith.cmpf oeq, %296, %321 : vector<8x8x8xf32>
    %323 = arith.ori %310, %322 : vector<8x8x8xi1>
    %cst_75 = arith.constant -1.000000e+30 : f32
    %324 = vector.broadcast %cst_75 : f32 to vector<8x8x8xf32>
    %325 = arith.select %322, %324, %312 : vector<8x8x8xi1>, vector<8x8x8xf32>
    %cst_76 = arith.constant dense<0xFF800000> : vector<8x8xf32>
    %326 = vector.multi_reduction <maximumf>, %325, %cst_76 [2] : vector<8x8x8xf32> to vector<8x8xf32>
    %327 = vector.shape_cast %326 : vector<8x8xf32> to vector<8x8x1xf32>
    %328 = vector.broadcast %327 : vector<8x8x1xf32> to vector<8x8x8xf32>
    %329 = arith.cmpf oeq, %325, %328 : vector<8x8x8xf32>
    %cst_77 = arith.constant 8.000000e+00 : f32
    %330 = vector.broadcast %cst_77 : f32 to vector<8x8x8xf32>
    %331 = arith.select %329, %296, %330 : vector<8x8x8xi1>, vector<8x8x8xf32>
    %cst_78 = arith.constant dense<0x7F800000> : vector<8x8xf32>
    %332 = vector.multi_reduction <minimumf>, %331, %cst_78 [2] : vector<8x8x8xf32> to vector<8x8xf32>
    %333 = vector.shape_cast %332 : vector<8x8xf32> to vector<8x8x1xf32>
    %334 = vector.broadcast %333 : vector<8x8x1xf32> to vector<8x8x8xf32>
    %335 = arith.cmpf oeq, %296, %334 : vector<8x8x8xf32>
    %336 = arith.ori %323, %335 : vector<8x8x8xi1>
    %cst_79 = arith.constant -1.000000e+30 : f32
    %337 = vector.broadcast %cst_79 : f32 to vector<8x8x8xf32>
    %338 = arith.select %335, %337, %325 : vector<8x8x8xi1>, vector<8x8x8xf32>
    %cst_80 = arith.constant dense<0xFF800000> : vector<8x8xf32>
    %339 = vector.multi_reduction <maximumf>, %338, %cst_80 [2] : vector<8x8x8xf32> to vector<8x8xf32>
    %340 = vector.shape_cast %339 : vector<8x8xf32> to vector<8x8x1xf32>
    %341 = vector.broadcast %340 : vector<8x8x1xf32> to vector<8x8x8xf32>
    %342 = arith.cmpf oeq, %338, %341 : vector<8x8x8xf32>
    %cst_81 = arith.constant 8.000000e+00 : f32
    %343 = vector.broadcast %cst_81 : f32 to vector<8x8x8xf32>
    %344 = arith.select %342, %296, %343 : vector<8x8x8xi1>, vector<8x8x8xf32>
    %cst_82 = arith.constant dense<0x7F800000> : vector<8x8xf32>
    %345 = vector.multi_reduction <minimumf>, %344, %cst_82 [2] : vector<8x8x8xf32> to vector<8x8xf32>
    %346 = vector.shape_cast %345 : vector<8x8xf32> to vector<8x8x1xf32>
    %347 = vector.broadcast %346 : vector<8x8x1xf32> to vector<8x8x8xf32>
    %348 = arith.cmpf oeq, %296, %347 : vector<8x8x8xf32>
    %349 = arith.ori %336, %348 : vector<8x8x8xi1>
    %350 = vector.broadcast %298 : vector<8x8x1xf32> to vector<8x8x8xf32>
    %351 = arith.subf %294, %350 : vector<8x8x8xf32>
    %352 = math.exp %351 : vector<8x8x8xf32>
    %cst_83 = arith.constant 0.000000e+00 : f32
    %353 = vector.broadcast %cst_83 : f32 to vector<8x8x8xf32>
    %354 = arith.select %349, %352, %353 : vector<8x8x8xi1>, vector<8x8x8xf32>
    %cst_84 = arith.constant dense<0.000000e+00> : vector<8x8xf32>
    %355 = vector.multi_reduction <add>, %354, %cst_84 [2] : vector<8x8x8xf32> to vector<8x8xf32>
    %356 = vector.shape_cast %355 : vector<8x8xf32> to vector<8x8x1xf32>
    %357 = vector.broadcast %356 : vector<8x8x1xf32> to vector<8x8x8xf32>
    %358 = arith.divf %354, %357 : vector<8x8x8xf32>
    "tpu.trace_start"() <{level = 10 : i32, message = "bqk,bkd->bqd"}> : () -> ()
    %cst_85 = arith.constant dense<0.000000e+00> : vector<8x8x8xf32>
    %359 = tpu.matmul %358, %293, %cst_85 {dimension_numbers = #tpu.dot_dimension_numbers<[2], [1], [1], [2], [0, 0, 0, 1, 1, 2], [0], [0]>} : vector<8x8x8xf32>, vector<8x8x8xf32>, vector<8x8x8xf32> -> vector<8x8x8xf32>
    "tpu.trace_stop"() : () -> ()
    %360 = vector.extract_strided_slice %359 {offsets = [0, 0, 0], sizes = [1, 8, 8], strides = [1, 1, 1]} : vector<8x8x8xf32> to vector<1x8x8xf32>
    %361 = vector.shape_cast %360 : vector<1x8x8xf32> to vector<8x8xf32>
    %362 = vector.extract_strided_slice %361 {offsets = [0, 0], sizes = [1, 8], strides = [1, 1]} : vector<8x8xf32> to vector<1x8xf32>
    %363 = vector.extract_strided_slice %361 {offsets = [1, 0], sizes = [1, 8], strides = [1, 1]} : vector<8x8xf32> to vector<1x8xf32>
    %364 = vector.extract_strided_slice %361 {offsets = [2, 0], sizes = [1, 8], strides = [1, 1]} : vector<8x8xf32> to vector<1x8xf32>
    %365 = vector.extract_strided_slice %361 {offsets = [3, 0], sizes = [1, 8], strides = [1, 1]} : vector<8x8xf32> to vector<1x8xf32>
    %366 = tpu.concatenate %362, %363, %364, %365 in 1 : vector<1x8xf32>, vector<1x8xf32>, vector<1x8xf32>, vector<1x8xf32> -> vector<1x32xf32>
    %367 = vector.extract_strided_slice %361 {offsets = [4, 0], sizes = [1, 8], strides = [1, 1]} : vector<8x8xf32> to vector<1x8xf32>
    %368 = vector.extract_strided_slice %361 {offsets = [5, 0], sizes = [1, 8], strides = [1, 1]} : vector<8x8xf32> to vector<1x8xf32>
    %369 = vector.extract_strided_slice %361 {offsets = [6, 0], sizes = [1, 8], strides = [1, 1]} : vector<8x8xf32> to vector<1x8xf32>
    %370 = vector.extract_strided_slice %361 {offsets = [7, 0], sizes = [1, 8], strides = [1, 1]} : vector<8x8xf32> to vector<1x8xf32>
    %371 = tpu.concatenate %367, %368, %369, %370 in 1 : vector<1x8xf32>, vector<1x8xf32>, vector<1x8xf32>, vector<1x8xf32> -> vector<1x32xf32>
    %372 = vector.extract_strided_slice %359 {offsets = [2, 0, 0], sizes = [1, 8, 8], strides = [1, 1, 1]} : vector<8x8x8xf32> to vector<1x8x8xf32>
    %373 = vector.shape_cast %372 : vector<1x8x8xf32> to vector<8x8xf32>
    %374 = vector.extract_strided_slice %373 {offsets = [0, 0], sizes = [1, 8], strides = [1, 1]} : vector<8x8xf32> to vector<1x8xf32>
    %375 = vector.extract_strided_slice %373 {offsets = [1, 0], sizes = [1, 8], strides = [1, 1]} : vector<8x8xf32> to vector<1x8xf32>
    %376 = vector.extract_strided_slice %373 {offsets = [2, 0], sizes = [1, 8], strides = [1, 1]} : vector<8x8xf32> to vector<1x8xf32>
    %377 = vector.extract_strided_slice %373 {offsets = [3, 0], sizes = [1, 8], strides = [1, 1]} : vector<8x8xf32> to vector<1x8xf32>
    %378 = tpu.concatenate %374, %375, %376, %377 in 1 : vector<1x8xf32>, vector<1x8xf32>, vector<1x8xf32>, vector<1x8xf32> -> vector<1x32xf32>
    %379 = vector.extract_strided_slice %373 {offsets = [4, 0], sizes = [1, 8], strides = [1, 1]} : vector<8x8xf32> to vector<1x8xf32>
    %380 = vector.extract_strided_slice %373 {offsets = [5, 0], sizes = [1, 8], strides = [1, 1]} : vector<8x8xf32> to vector<1x8xf32>
    %381 = vector.extract_strided_slice %373 {offsets = [6, 0], sizes = [1, 8], strides = [1, 1]} : vector<8x8xf32> to vector<1x8xf32>
    %382 = vector.extract_strided_slice %373 {offsets = [7, 0], sizes = [1, 8], strides = [1, 1]} : vector<8x8xf32> to vector<1x8xf32>
    %383 = tpu.concatenate %379, %380, %381, %382 in 1 : vector<1x8xf32>, vector<1x8xf32>, vector<1x8xf32>, vector<1x8xf32> -> vector<1x32xf32>
    %384 = vector.extract_strided_slice %359 {offsets = [4, 0, 0], sizes = [1, 8, 8], strides = [1, 1, 1]} : vector<8x8x8xf32> to vector<1x8x8xf32>
    %385 = vector.shape_cast %384 : vector<1x8x8xf32> to vector<8x8xf32>
    %386 = vector.extract_strided_slice %385 {offsets = [0, 0], sizes = [1, 8], strides = [1, 1]} : vector<8x8xf32> to vector<1x8xf32>
    %387 = vector.extract_strided_slice %385 {offsets = [1, 0], sizes = [1, 8], strides = [1, 1]} : vector<8x8xf32> to vector<1x8xf32>
    %388 = vector.extract_strided_slice %385 {offsets = [2, 0], sizes = [1, 8], strides = [1, 1]} : vector<8x8xf32> to vector<1x8xf32>
    %389 = vector.extract_strided_slice %385 {offsets = [3, 0], sizes = [1, 8], strides = [1, 1]} : vector<8x8xf32> to vector<1x8xf32>
    %390 = tpu.concatenate %386, %387, %388, %389 in 1 : vector<1x8xf32>, vector<1x8xf32>, vector<1x8xf32>, vector<1x8xf32> -> vector<1x32xf32>
    %391 = vector.extract_strided_slice %385 {offsets = [4, 0], sizes = [1, 8], strides = [1, 1]} : vector<8x8xf32> to vector<1x8xf32>
    %392 = vector.extract_strided_slice %385 {offsets = [5, 0], sizes = [1, 8], strides = [1, 1]} : vector<8x8xf32> to vector<1x8xf32>
    %393 = vector.extract_strided_slice %385 {offsets = [6, 0], sizes = [1, 8], strides = [1, 1]} : vector<8x8xf32> to vector<1x8xf32>
    %394 = vector.extract_strided_slice %385 {offsets = [7, 0], sizes = [1, 8], strides = [1, 1]} : vector<8x8xf32> to vector<1x8xf32>
    %395 = tpu.concatenate %391, %392, %393, %394 in 1 : vector<1x8xf32>, vector<1x8xf32>, vector<1x8xf32>, vector<1x8xf32> -> vector<1x32xf32>
    %396 = vector.extract_strided_slice %359 {offsets = [6, 0, 0], sizes = [1, 8, 8], strides = [1, 1, 1]} : vector<8x8x8xf32> to vector<1x8x8xf32>
    %397 = vector.shape_cast %396 : vector<1x8x8xf32> to vector<8x8xf32>
    %398 = vector.extract_strided_slice %397 {offsets = [0, 0], sizes = [1, 8], strides = [1, 1]} : vector<8x8xf32> to vector<1x8xf32>
    %399 = vector.extract_strided_slice %397 {offsets = [1, 0], sizes = [1, 8], strides = [1, 1]} : vector<8x8xf32> to vector<1x8xf32>
    %400 = vector.extract_strided_slice %397 {offsets = [2, 0], sizes = [1, 8], strides = [1, 1]} : vector<8x8xf32> to vector<1x8xf32>
    %401 = vector.extract_strided_slice %397 {offsets = [3, 0], sizes = [1, 8], strides = [1, 1]} : vector<8x8xf32> to vector<1x8xf32>
    %402 = tpu.concatenate %398, %399, %400, %401 in 1 : vector<1x8xf32>, vector<1x8xf32>, vector<1x8xf32>, vector<1x8xf32> -> vector<1x32xf32>
    %403 = vector.extract_strided_slice %397 {offsets = [4, 0], sizes = [1, 8], strides = [1, 1]} : vector<8x8xf32> to vector<1x8xf32>
    %404 = vector.extract_strided_slice %397 {offsets = [5, 0], sizes = [1, 8], strides = [1, 1]} : vector<8x8xf32> to vector<1x8xf32>
    %405 = vector.extract_strided_slice %397 {offsets = [6, 0], sizes = [1, 8], strides = [1, 1]} : vector<8x8xf32> to vector<1x8xf32>
    %406 = vector.extract_strided_slice %397 {offsets = [7, 0], sizes = [1, 8], strides = [1, 1]} : vector<8x8xf32> to vector<1x8xf32>
    %407 = tpu.concatenate %403, %404, %405, %406 in 1 : vector<1x8xf32>, vector<1x8xf32>, vector<1x8xf32>, vector<1x8xf32> -> vector<1x32xf32>
    %408 = vector.extract_strided_slice %359 {offsets = [1, 0, 0], sizes = [1, 8, 8], strides = [1, 1, 1]} : vector<8x8x8xf32> to vector<1x8x8xf32>
    %409 = vector.shape_cast %408 : vector<1x8x8xf32> to vector<8x8xf32>
    %410 = vector.extract_strided_slice %409 {offsets = [0, 0], sizes = [1, 8], strides = [1, 1]} : vector<8x8xf32> to vector<1x8xf32>
    %411 = vector.extract_strided_slice %409 {offsets = [1, 0], sizes = [1, 8], strides = [1, 1]} : vector<8x8xf32> to vector<1x8xf32>
    %412 = vector.extract_strided_slice %409 {offsets = [2, 0], sizes = [1, 8], strides = [1, 1]} : vector<8x8xf32> to vector<1x8xf32>
    %413 = vector.extract_strided_slice %409 {offsets = [3, 0], sizes = [1, 8], strides = [1, 1]} : vector<8x8xf32> to vector<1x8xf32>
    %414 = tpu.concatenate %410, %411, %412, %413 in 1 : vector<1x8xf32>, vector<1x8xf32>, vector<1x8xf32>, vector<1x8xf32> -> vector<1x32xf32>
    %415 = vector.extract_strided_slice %409 {offsets = [4, 0], sizes = [1, 8], strides = [1, 1]} : vector<8x8xf32> to vector<1x8xf32>
    %416 = vector.extract_strided_slice %409 {offsets = [5, 0], sizes = [1, 8], strides = [1, 1]} : vector<8x8xf32> to vector<1x8xf32>
    %417 = vector.extract_strided_slice %409 {offsets = [6, 0], sizes = [1, 8], strides = [1, 1]} : vector<8x8xf32> to vector<1x8xf32>
    %418 = vector.extract_strided_slice %409 {offsets = [7, 0], sizes = [1, 8], strides = [1, 1]} : vector<8x8xf32> to vector<1x8xf32>
    %419 = tpu.concatenate %415, %416, %417, %418 in 1 : vector<1x8xf32>, vector<1x8xf32>, vector<1x8xf32>, vector<1x8xf32> -> vector<1x32xf32>
    %420 = vector.extract_strided_slice %359 {offsets = [3, 0, 0], sizes = [1, 8, 8], strides = [1, 1, 1]} : vector<8x8x8xf32> to vector<1x8x8xf32>
    %421 = vector.shape_cast %420 : vector<1x8x8xf32> to vector<8x8xf32>
    %422 = vector.extract_strided_slice %421 {offsets = [0, 0], sizes = [1, 8], strides = [1, 1]} : vector<8x8xf32> to vector<1x8xf32>
    %423 = vector.extract_strided_slice %421 {offsets = [1, 0], sizes = [1, 8], strides = [1, 1]} : vector<8x8xf32> to vector<1x8xf32>
    %424 = vector.extract_strided_slice %421 {offsets = [2, 0], sizes = [1, 8], strides = [1, 1]} : vector<8x8xf32> to vector<1x8xf32>
    %425 = vector.extract_strided_slice %421 {offsets = [3, 0], sizes = [1, 8], strides = [1, 1]} : vector<8x8xf32> to vector<1x8xf32>
    %426 = tpu.concatenate %422, %423, %424, %425 in 1 : vector<1x8xf32>, vector<1x8xf32>, vector<1x8xf32>, vector<1x8xf32> -> vector<1x32xf32>
    %427 = vector.extract_strided_slice %421 {offsets = [4, 0], sizes = [1, 8], strides = [1, 1]} : vector<8x8xf32> to vector<1x8xf32>
    %428 = vector.extract_strided_slice %421 {offsets = [5, 0], sizes = [1, 8], strides = [1, 1]} : vector<8x8xf32> to vector<1x8xf32>
    %429 = vector.extract_strided_slice %421 {offsets = [6, 0], sizes = [1, 8], strides = [1, 1]} : vector<8x8xf32> to vector<1x8xf32>
    %430 = vector.extract_strided_slice %421 {offsets = [7, 0], sizes = [1, 8], strides = [1, 1]} : vector<8x8xf32> to vector<1x8xf32>
    %431 = tpu.concatenate %427, %428, %429, %430 in 1 : vector<1x8xf32>, vector<1x8xf32>, vector<1x8xf32>, vector<1x8xf32> -> vector<1x32xf32>
    %432 = vector.extract_strided_slice %359 {offsets = [5, 0, 0], sizes = [1, 8, 8], strides = [1, 1, 1]} : vector<8x8x8xf32> to vector<1x8x8xf32>
    %433 = vector.shape_cast %432 : vector<1x8x8xf32> to vector<8x8xf32>
    %434 = vector.extract_strided_slice %433 {offsets = [0, 0], sizes = [1, 8], strides = [1, 1]} : vector<8x8xf32> to vector<1x8xf32>
    %435 = vector.extract_strided_slice %433 {offsets = [1, 0], sizes = [1, 8], strides = [1, 1]} : vector<8x8xf32> to vector<1x8xf32>
    %436 = vector.extract_strided_slice %433 {offsets = [2, 0], sizes = [1, 8], strides = [1, 1]} : vector<8x8xf32> to vector<1x8xf32>
    %437 = vector.extract_strided_slice %433 {offsets = [3, 0], sizes = [1, 8], strides = [1, 1]} : vector<8x8xf32> to vector<1x8xf32>
    %438 = tpu.concatenate %434, %435, %436, %437 in 1 : vector<1x8xf32>, vector<1x8xf32>, vector<1x8xf32>, vector<1x8xf32> -> vector<1x32xf32>
    %439 = vector.extract_strided_slice %433 {offsets = [4, 0], sizes = [1, 8], strides = [1, 1]} : vector<8x8xf32> to vector<1x8xf32>
    %440 = vector.extract_strided_slice %433 {offsets = [5, 0], sizes = [1, 8], strides = [1, 1]} : vector<8x8xf32> to vector<1x8xf32>
    %441 = vector.extract_strided_slice %433 {offsets = [6, 0], sizes = [1, 8], strides = [1, 1]} : vector<8x8xf32> to vector<1x8xf32>
    %442 = vector.extract_strided_slice %433 {offsets = [7, 0], sizes = [1, 8], strides = [1, 1]} : vector<8x8xf32> to vector<1x8xf32>
    %443 = tpu.concatenate %439, %440, %441, %442 in 1 : vector<1x8xf32>, vector<1x8xf32>, vector<1x8xf32>, vector<1x8xf32> -> vector<1x32xf32>
    %444 = vector.extract_strided_slice %359 {offsets = [7, 0, 0], sizes = [1, 8, 8], strides = [1, 1, 1]} : vector<8x8x8xf32> to vector<1x8x8xf32>
    %445 = vector.shape_cast %444 : vector<1x8x8xf32> to vector<8x8xf32>
    %446 = vector.extract_strided_slice %445 {offsets = [0, 0], sizes = [1, 8], strides = [1, 1]} : vector<8x8xf32> to vector<1x8xf32>
    %447 = vector.extract_strided_slice %445 {offsets = [1, 0], sizes = [1, 8], strides = [1, 1]} : vector<8x8xf32> to vector<1x8xf32>
    %448 = vector.extract_strided_slice %445 {offsets = [2, 0], sizes = [1, 8], strides = [1, 1]} : vector<8x8xf32> to vector<1x8xf32>
    %449 = vector.extract_strided_slice %445 {offsets = [3, 0], sizes = [1, 8], strides = [1, 1]} : vector<8x8xf32> to vector<1x8xf32>
    %450 = tpu.concatenate %446, %447, %448, %449 in 1 : vector<1x8xf32>, vector<1x8xf32>, vector<1x8xf32>, vector<1x8xf32> -> vector<1x32xf32>
    %451 = vector.extract_strided_slice %445 {offsets = [4, 0], sizes = [1, 8], strides = [1, 1]} : vector<8x8xf32> to vector<1x8xf32>
    %452 = vector.extract_strided_slice %445 {offsets = [5, 0], sizes = [1, 8], strides = [1, 1]} : vector<8x8xf32> to vector<1x8xf32>
    %453 = vector.extract_strided_slice %445 {offsets = [6, 0], sizes = [1, 8], strides = [1, 1]} : vector<8x8xf32> to vector<1x8xf32>
    %454 = vector.extract_strided_slice %445 {offsets = [7, 0], sizes = [1, 8], strides = [1, 1]} : vector<8x8xf32> to vector<1x8xf32>
    %455 = tpu.concatenate %451, %452, %453, %454 in 1 : vector<1x8xf32>, vector<1x8xf32>, vector<1x8xf32>, vector<1x8xf32> -> vector<1x32xf32>
    %456 = tpu.concatenate %366, %371, %378, %383, %390, %395, %402, %407, %414, %419, %426, %431, %438, %443, %450, %455 in 0 : vector<1x32xf32>, vector<1x32xf32>, vector<1x32xf32>, vector<1x32xf32>, vector<1x32xf32>, vector<1x32xf32>, vector<1x32xf32>, vector<1x32xf32>, vector<1x32xf32>, vector<1x32xf32>, vector<1x32xf32>, vector<1x32xf32>, vector<1x32xf32>, vector<1x32xf32>, vector<1x32xf32>, vector<1x32xf32> -> vector<16x32xf32>
    %c0_86 = arith.constant 0 : index
    %c0_87 = arith.constant 0 : index
    %457 = vector.load %arg15[%c0_86, %c0_87] : memref<32x32xf32, #tpu.memory_space<vmem>>, vector<32x32xf32>
    %cst_88 = arith.constant dense<0.000000e+00> : vector<16x32xf32>
    %458 = tpu.matmul %456, %457, %cst_88 {dimension_numbers = #tpu.dot_dimension_numbers<[1], [0], [0], [1], [0, 0, 1, 1], [], []>} : vector<16x32xf32>, vector<32x32xf32>, vector<16x32xf32> -> vector<16x32xf32>
    %c0_89 = arith.constant 0 : index
    %c0_90 = arith.constant 0 : index
    %459 = vector.load %arg16[%c0_89, %c0_90] : memref<1x32xf32, #tpu.memory_space<vmem>>, vector<1x32xf32>
    %460 = vector.broadcast %459 : vector<1x32xf32> to vector<16x32xf32>
    %461 = arith.addf %458, %460 : vector<16x32xf32>
    %462 = arith.addf %461, %264 : vector<16x32xf32>
    %c0_91 = arith.constant 0 : index
    %c0_92 = arith.constant 0 : index
    %463 = vector.load %arg17[%c0_91, %c0_92] : memref<1x32xf32, #tpu.memory_space<vmem>>, vector<1x32xf32>
    %c0_93 = arith.constant 0 : index
    %c0_94 = arith.constant 0 : index
    %464 = vector.load %arg18[%c0_93, %c0_94] : memref<1x32xf32, #tpu.memory_space<vmem>>, vector<1x32xf32>
    %cst_95 = arith.constant dense<0.000000e+00> : vector<16xf32>
    %465 = vector.multi_reduction <add>, %462, %cst_95 [1] : vector<16x32xf32> to vector<16xf32>
    %466 = vector.shape_cast %465 : vector<16xf32> to vector<16x1xf32>
    %cst_96 = arith.constant 3.200000e+01 : f32
    %467 = vector.broadcast %cst_96 : f32 to vector<16x1xf32>
    %468 = arith.divf %466, %467 : vector<16x1xf32>
    %469 = vector.broadcast %468 : vector<16x1xf32> to vector<16x32xf32>
    %470 = arith.subf %462, %469 : vector<16x32xf32>
    %471 = arith.mulf %470, %470 : vector<16x32xf32>
    %cst_97 = arith.constant dense<0.000000e+00> : vector<16xf32>
    %472 = vector.multi_reduction <add>, %471, %cst_97 [1] : vector<16x32xf32> to vector<16xf32>
    %473 = vector.shape_cast %472 : vector<16xf32> to vector<16x1xf32>
    %cst_98 = arith.constant 3.200000e+01 : f32
    %474 = vector.broadcast %cst_98 : f32 to vector<16x1xf32>
    %475 = arith.divf %473, %474 : vector<16x1xf32>
    %cst_99 = arith.constant 9.99999974E-6 : f32
    %476 = vector.broadcast %cst_99 : f32 to vector<16x1xf32>
    %477 = arith.addf %475, %476 : vector<16x1xf32>
    %478 = math.rsqrt %477 : vector<16x1xf32>
    %479 = vector.broadcast %478 : vector<16x1xf32> to vector<16x32xf32>
    %480 = arith.mulf %470, %479 : vector<16x32xf32>
    %481 = vector.broadcast %463 : vector<1x32xf32> to vector<16x32xf32>
    %482 = arith.mulf %480, %481 : vector<16x32xf32>
    %483 = vector.broadcast %464 : vector<1x32xf32> to vector<16x32xf32>
    %484 = arith.addf %482, %483 : vector<16x32xf32>
    %c0_100 = arith.constant 0 : index
    %c0_101 = arith.constant 0 : index
    %485 = vector.load %arg19[%c0_100, %c0_101] : memref<32x128xf32, #tpu.memory_space<vmem>>, vector<32x128xf32>
    %cst_102 = arith.constant dense<0.000000e+00> : vector<16x128xf32>
    %486 = tpu.matmul %484, %485, %cst_102 {dimension_numbers = #tpu.dot_dimension_numbers<[1], [0], [0], [1], [0, 0, 1, 1], [], []>} : vector<16x32xf32>, vector<32x128xf32>, vector<16x128xf32> -> vector<16x128xf32>
    %c0_103 = arith.constant 0 : index
    %c0_104 = arith.constant 0 : index
    %487 = vector.load %arg20[%c0_103, %c0_104] : memref<1x128xf32, #tpu.memory_space<vmem>>, vector<1x128xf32>
    %488 = vector.broadcast %487 : vector<1x128xf32> to vector<16x128xf32>
    %489 = arith.addf %486, %488 : vector<16x128xf32>
    %cst_105 = arith.constant 0.000000e+00 : f32
    %490 = vector.broadcast %cst_105 : f32 to vector<16x128xf32>
    %491 = arith.maximumf %489, %490 : vector<16x128xf32>
    %c0_106 = arith.constant 0 : index
    %c0_107 = arith.constant 0 : index
    %492 = vector.load %arg21[%c0_106, %c0_107] : memref<128x32xf32, #tpu.memory_space<vmem>>, vector<128x32xf32>
    %cst_108 = arith.constant dense<0.000000e+00> : vector<16x32xf32>
    %493 = tpu.matmul %491, %492, %cst_108 {dimension_numbers = #tpu.dot_dimension_numbers<[1], [0], [0], [1], [0, 0, 1, 1], [], []>} : vector<16x128xf32>, vector<128x32xf32>, vector<16x32xf32> -> vector<16x32xf32>
    %c0_109 = arith.constant 0 : index
    %c0_110 = arith.constant 0 : index
    %494 = vector.load %arg22[%c0_109, %c0_110] : memref<1x32xf32, #tpu.memory_space<vmem>>, vector<1x32xf32>
    %495 = vector.broadcast %494 : vector<1x32xf32> to vector<16x32xf32>
    %496 = arith.addf %493, %495 : vector<16x32xf32>
    %497 = arith.addf %496, %484 : vector<16x32xf32>
    %c0_111 = arith.constant 0 : index
    %c0_112 = arith.constant 0 : index
    %498 = vector.load %arg23[%c0_111, %c0_112] : memref<1x32xf32, #tpu.memory_space<vmem>>, vector<1x32xf32>
    %c0_113 = arith.constant 0 : index
    %c0_114 = arith.constant 0 : index
    %499 = vector.load %arg24[%c0_113, %c0_114] : memref<1x32xf32, #tpu.memory_space<vmem>>, vector<1x32xf32>
    %cst_115 = arith.constant dense<0.000000e+00> : vector<16xf32>
    %500 = vector.multi_reduction <add>, %497, %cst_115 [1] : vector<16x32xf32> to vector<16xf32>
    %501 = vector.shape_cast %500 : vector<16xf32> to vector<16x1xf32>
    %cst_116 = arith.constant 3.200000e+01 : f32
    %502 = vector.broadcast %cst_116 : f32 to vector<16x1xf32>
    %503 = arith.divf %501, %502 : vector<16x1xf32>
    %504 = vector.broadcast %503 : vector<16x1xf32> to vector<16x32xf32>
    %505 = arith.subf %497, %504 : vector<16x32xf32>
    %506 = arith.mulf %505, %505 : vector<16x32xf32>
    %cst_117 = arith.constant dense<0.000000e+00> : vector<16xf32>
    %507 = vector.multi_reduction <add>, %506, %cst_117 [1] : vector<16x32xf32> to vector<16xf32>
    %508 = vector.shape_cast %507 : vector<16xf32> to vector<16x1xf32>
    %cst_118 = arith.constant 3.200000e+01 : f32
    %509 = vector.broadcast %cst_118 : f32 to vector<16x1xf32>
    %510 = arith.divf %508, %509 : vector<16x1xf32>
    %cst_119 = arith.constant 9.99999974E-6 : f32
    %511 = vector.broadcast %cst_119 : f32 to vector<16x1xf32>
    %512 = arith.addf %510, %511 : vector<16x1xf32>
    %513 = math.rsqrt %512 : vector<16x1xf32>
    %514 = vector.broadcast %513 : vector<16x1xf32> to vector<16x32xf32>
    %515 = arith.mulf %505, %514 : vector<16x32xf32>
    %516 = vector.broadcast %498 : vector<1x32xf32> to vector<16x32xf32>
    %517 = arith.mulf %515, %516 : vector<16x32xf32>
    %518 = vector.broadcast %499 : vector<1x32xf32> to vector<16x32xf32>
    %519 = arith.addf %517, %518 : vector<16x32xf32>
    %520 = vector.shape_cast %519 : vector<16x32xf32> to vector<2x8x32xf32>
    %cst_120 = arith.constant dense<0.000000e+00> : vector<2x32xf32>
    %521 = vector.multi_reduction <add>, %520, %cst_120 [1] : vector<2x8x32xf32> to vector<2x32xf32>
    %cst_121 = arith.constant 8.000000e+00 : f32
    %522 = vector.broadcast %cst_121 : f32 to vector<2x32xf32>
    %523 = arith.divf %521, %522 : vector<2x32xf32>
    %c0_122 = arith.constant 0 : index
    %c0_123 = arith.constant 0 : index
    %524 = vector.load %arg25[%c0_122, %c0_123] : memref<32x5xf32, #tpu.memory_space<vmem>>, vector<32x5xf32>
    %cst_124 = arith.constant dense<0.000000e+00> : vector<2x5xf32>
    %525 = tpu.matmul %523, %524, %cst_124 {dimension_numbers = #tpu.dot_dimension_numbers<[1], [0], [0], [1], [0, 0, 1, 1], [], []>} : vector<2x32xf32>, vector<32x5xf32>, vector<2x5xf32> -> vector<2x5xf32>
    %c0_125 = arith.constant 0 : index
    %c0_126 = arith.constant 0 : index
    %526 = vector.load %arg26[%c0_125, %c0_126] : memref<1x5xf32, #tpu.memory_space<vmem>>, vector<1x5xf32>
    %527 = vector.broadcast %526 : vector<1x5xf32> to vector<2x5xf32>
    %528 = arith.addf %525, %527 : vector<2x5xf32>
    %c0_127 = arith.constant 0 : index
    %c0_128 = arith.constant 0 : index
    %529 = vector.load %arg27[%c0_127, %c0_128] : memref<2x5xf32, #tpu.memory_space<vmem>>, vector<2x5xf32>
    tpu.vector_store %arg27[%c0_127, %c0_128], %528 {strides = array<i32>} : memref<2x5xf32, #tpu.memory_space<vmem>>, vector<2x5xf32>,
    return
  }
}

</mosaic_0001>

<llo_original>
// kernel: dga_forward.1
$region0: #{dga_forward.1}
  #allocation0 [shape = 'u32[]', space=smem, size = 0x4, offset = 0x4, fixed_abs, tag = 'smem constant byte address 0x4 - core index']
  #allocation1 [shape = 'u32[144,128]{1,0:T(1,128)}', space=vmem, size = 0x12000, scoped, tag = 'internal scratch']
  %s0 = inlined_call_operand.vmem [shape: s32[16,1], index: 0, kind: input, shape index: {}]
  %s1 = inlined_call_operand.vmem [shape: f32[64,32], index: 1, kind: input, shape index: {}]
  %s2 = inlined_call_operand.vmem [shape: f32[16,32], index: 2, kind: input, shape index: {}]
  %s3 = inlined_call_operand.vmem [shape: f32[32,96], index: 3, kind: input, shape index: {}]
  %s4 = inlined_call_operand.vmem [shape: f32[32,32], index: 4, kind: input, shape index: {}]
  %s5 = inlined_call_operand.vmem [shape: f32[1,32], index: 5, kind: input, shape index: {}]
  %s6 = inlined_call_operand.vmem [shape: f32[1,32], index: 6, kind: input, shape index: {}]
  %s7 = inlined_call_operand.vmem [shape: f32[1,32], index: 7, kind: input, shape index: {}]
  %s8 = inlined_call_operand.vmem [shape: f32[32,128], index: 8, kind: input, shape index: {}]
  %s9 = inlined_call_operand.vmem [shape: f32[1,128], index: 9, kind: input, shape index: {}]
  %s10 = inlined_call_operand.vmem [shape: f32[128,32], index: 10, kind: input, shape index: {}]
  %s11 = inlined_call_operand.vmem [shape: f32[1,32], index: 11, kind: input, shape index: {}]
  %s12 = inlined_call_operand.vmem [shape: f32[1,32], index: 12, kind: input, shape index: {}]
  %s13 = inlined_call_operand.vmem [shape: f32[1,32], index: 13, kind: input, shape index: {}]
  %s14 = inlined_call_operand.vmem [shape: f32[32,96], index: 14, kind: input, shape index: {}]
  %s15 = inlined_call_operand.vmem [shape: f32[32,32], index: 15, kind: input, shape index: {}]
  %s16 = inlined_call_operand.vmem [shape: f32[1,32], index: 16, kind: input, shape index: {}]
  %s17 = inlined_call_operand.vmem [shape: f32[1,32], index: 17, kind: input, shape index: {}]
  %s18 = inlined_call_operand.vmem [shape: f32[1,32], index: 18, kind: input, shape index: {}]
  %s19 = inlined_call_operand.vmem [shape: f32[32,128], index: 19, kind: input, shape index: {}]
  %s20 = inlined_call_operand.vmem [shape: f32[1,128], index: 20, kind: input, shape index: {}]
  %s21 = inlined_call_operand.vmem [shape: f32[128,32], index: 21, kind: input, shape index: {}]
  %s22 = inlined_call_operand.vmem [shape: f32[1,32], index: 22, kind: input, shape index: {}]
  %s23 = inlined_call_operand.vmem [shape: f32[1,32], index: 23, kind: input, shape index: {}]
  %s24 = inlined_call_operand.vmem [shape: f32[1,32], index: 24, kind: input, shape index: {}]
  %s25 = inlined_call_operand.vmem [shape: f32[32,5], index: 25, kind: input, shape index: {}]
  %s26 = inlined_call_operand.vmem [shape: f32[1,5], index: 26, kind: input, shape index: {}]
  %s27 = inlined_call_operand.hbm [shape: f32[2,5], index: 27, kind: output, shape index: {}]
  %s28 = sld [smem:[#allocation0]]
  $region118: #{dga_forward.1} parent=0
    _
  %s30 = ssub.s32 1, %s28
  %s31 = scalar_select 0, %s30, %s28
  $region1: #{dga_forward.1} parent=0
    #allocation2 [shape = 'u8[1024]{0}', space=vmem, size = 0x400, scoped, tag = 'output window, operand 0, single buffered']
    #allocation3 [shape = 's32[1]{0}', space=sflag, size = 0x4, scoped, tag = 'scoped memory for dga_forward.1']
    %32 = vsyncpa [#allocation3], 0
    // Predicated region
    $region2: #{dga_forward.1} parent=1 // pred_check
      _
    $region3: #{dga_forward.1} parent=1 // pred_check_branch
      %34 = sbr.rel (0) target = $region5
    $region4: #{dga_forward.1} parent=1 // pred_region
      _
    $region5: #{dga_forward.1} parent=1 // pred_fallthru
      _
    // Predicated region
    $region6: #{dga_forward.1} parent=1 // pred_check
      _
    $region7: #{dga_forward.1} parent=1 // pred_check_branch
      %36 = sbr.rel (0) target = $region9
    $region8: #{dga_forward.1} parent=1 // pred_region
      _
    $region9: #{dga_forward.1} parent=1 // pred_fallthru
      _
    // Predicated region
    $region10: #{dga_forward.1} parent=1 // pred_check
      _
    $region11: #{dga_forward.1} parent=1 // pred_check_branch
      %38 = sbr.rel (0) target = $region13
    $region12: #{dga_forward.1} parent=1 // pred_region
      _
    $region13: #{dga_forward.1} parent=1 // pred_fallthru
      _
    // Predicated region
    $region14: #{dga_forward.1} parent=1 // pred_check
      _
    $region15: #{dga_forward.1} parent=1 // pred_check_branch
      %40 = sbr.rel (0) target = $region17
    $region16: #{dga_forward.1} parent=1 // pred_region
      _
    $region17: #{dga_forward.1} parent=1 // pred_fallthru
      _
    // Predicated region
    $region18: #{dga_forward.1} parent=1 // pred_check
      _
    $region19: #{dga_forward.1} parent=1 // pred_check_branch
      %42 = sbr.rel (0) target = $region21
    $region20: #{dga_forward.1} parent=1 // pred_region
      _
    $region21: #{dga_forward.1} parent=1 // pred_fallthru
      _
    // Predicated region
    $region22: #{dga_forward.1} parent=1 // pred_check
      _
    $region23: #{dga_forward.1} parent=1 // pred_check_branch
      %44 = sbr.rel (0) target = $region25
    $region24: #{dga_forward.1} parent=1 // pred_region
      _
    $region25: #{dga_forward.1} parent=1 // pred_fallthru
      _
    // Predicated region
    $region26: #{dga_forward.1} parent=1 // pred_check
      _
    $region27: #{dga_forward.1} parent=1 // pred_check_branch
      %46 = sbr.rel (0) target = $region29
    $region28: #{dga_forward.1} parent=1 // pred_region
      _
    $region29: #{dga_forward.1} parent=1 // pred_fallthru
      _
    // Predicated region
    $region30: #{dga_forward.1} parent=1 // pred_check
      _
    $region31: #{dga_forward.1} parent=1 // pred_check_branch
      %48 = sbr.rel (0) target = $region33
    $region32: #{dga_forward.1} parent=1 // pred_region
      _
    $region33: #{dga_forward.1} parent=1 // pred_fallthru
      _
    // Predicated region
    $region34: #{dga_forward.1} parent=1 // pred_check
      _
    $region35: #{dga_forward.1} parent=1 // pred_check_branch
      %50 = sbr.rel (0) target = $region37
    $region36: #{dga_forward.1} parent=1 // pred_region
      _
    $region37: #{dga_forward.1} parent=1 // pred_fallthru
      _
    // Predicated region
    $region38: #{dga_forward.1} parent=1 // pred_check
      _
    $region39: #{dga_forward.1} parent=1 // pred_check_branch
      %52 = sbr.rel (0) target = $region41
    $region40: #{dga_forward.1} parent=1 // pred_region
      _
    $region41: #{dga_forward.1} parent=1 // pred_fallthru
      _
    // Predicated region
    $region42: #{dga_forward.1} parent=1 // pred_check
      _
    $region43: #{dga_forward.1} parent=1 // pred_check_branch
      %54 = sbr.rel (0) target = $region45
    $region44: #{dga_forward.1} parent=1 // pred_region
      _
    $region45: #{dga_forward.1} parent=1 // pred_fallthru
      _
    // Predicated region
    $region46: #{dga_forward.1} parent=1 // pred_check
      _
    $region47: #{dga_forward.1} parent=1 // pred_check_branch
      %56 = sbr.rel (0) target = $region49
    $region48: #{dga_forward.1} parent=1 // pred_region
      _
    $region49: #{dga_forward.1} parent=1 // pred_fallthru
      _
    // Predicated region
    $region50: #{dga_forward.1} parent=1 // pred_check
      _
    $region51: #{dga_forward.1} parent=1 // pred_check_branch
      %58 = sbr.rel (0) target = $region53
    $region52: #{dga_forward.1} parent=1 // pred_region
      _
    $region53: #{dga_forward.1} parent=1 // pred_fallthru
      _
    // Predicated region
    $region54: #{dga_forward.1} parent=1 // pred_check
      _
    $region55: #{dga_forward.1} parent=1 // pred_check_branch
      %60 = sbr.rel (0) target = $region57
    $region56: #{dga_forward.1} parent=1 // pred_region
      _
    $region57: #{dga_forward.1} parent=1 // pred_fallthru
      _
    // Predicated region
    $region58: #{dga_forward.1} parent=1 // pred_check
      _
    $region59: #{dga_forward.1} parent=1 // pred_check_branch
      %62 = sbr.rel (0) target = $region61
    $region60: #{dga_forward.1} parent=1 // pred_region
      _
    $region61: #{dga_forward.1} parent=1 // pred_fallthru
      _
    // Predicated region
    $region62: #{dga_forward.1} parent=1 // pred_check
      _
    $region63: #{dga_forward.1} parent=1 // pred_check_branch
      %64 = sbr.rel (0) target = $region65
    $region64: #{dga_forward.1} parent=1 // pred_region
      _
    $region65: #{dga_forward.1} parent=1 // pred_fallthru
      _
    // Predicated region
    $region66: #{dga_forward.1} parent=1 // pred_check
      _
    $region67: #{dga_forward.1} parent=1 // pred_check_branch
      %66 = sbr.rel (0) target = $region69
    $region68: #{dga_forward.1} parent=1 // pred_region
      _
    $region69: #{dga_forward.1} parent=1 // pred_fallthru
      _
    // Predicated region
    $region70: #{dga_forward.1} parent=1 // pred_check
      _
    $region71: #{dga_forward.1} parent=1 // pred_check_branch
      %68 = sbr.rel (0) target = $region73
    $region72: #{dga_forward.1} parent=1 // pred_region
      _
    $region73: #{dga_forward.1} parent=1 // pred_fallthru
      _
    // Predicated region
    $region74: #{dga_forward.1} parent=1 // pred_check
      _
    $region75: #{dga_forward.1} parent=1 // pred_check_branch
      %70 = sbr.rel (0) target = $region77
    $region76: #{dga_forward.1} parent=1 // pred_region
      _
    $region77: #{dga_forward.1} parent=1 // pred_fallthru
      _
    // Predicated region
    $region78: #{dga_forward.1} parent=1 // pred_check
      _
    $region79: #{dga_forward.1} parent=1 // pred_check_branch
      %72 = sbr.rel (0) target = $region81
    $region80: #{dga_forward.1} parent=1 // pred_region
      _
    $region81: #{dga_forward.1} parent=1 // pred_fallthru
      _
    // Predicated region
    $region82: #{dga_forward.1} parent=1 // pred_check
      _
    $region83: #{dga_forward.1} parent=1 // pred_check_branch
      %74 = sbr.rel (0) target = $region85
    $region84: #{dga_forward.1} parent=1 // pred_region
      _
    $region85: #{dga_forward.1} parent=1 // pred_fallthru
      _
    // Predicated region
    $region86: #{dga_forward.1} parent=1 // pred_check
      _
    $region87: #{dga_forward.1} parent=1 // pred_check_branch
      %76 = sbr.rel (0) target = $region89
    $region88: #{dga_forward.1} parent=1 // pred_region
      _
    $region89: #{dga_forward.1} parent=1 // pred_fallthru
      _
    // Predicated region
    $region90: #{dga_forward.1} parent=1 // pred_check
      _
    $region91: #{dga_forward.1} parent=1 // pred_check_branch
      %78 = sbr.rel (0) target = $region93
    $region92: #{dga_forward.1} parent=1 // pred_region
      _
    $region93: #{dga_forward.1} parent=1 // pred_fallthru
      _
    // Predicated region
    $region94: #{dga_forward.1} parent=1 // pred_check
      _
    $region95: #{dga_forward.1} parent=1 // pred_check_branch
      %80 = sbr.rel (0) target = $region97
    $region96: #{dga_forward.1} parent=1 // pred_region
      _
    $region97: #{dga_forward.1} parent=1 // pred_fallthru
      _
    // Predicated region
    $region98: #{dga_forward.1} parent=1 // pred_check
      _
    $region99: #{dga_forward.1} parent=1 // pred_check_branch
      %82 = sbr.rel (0) target = $region101
    $region100: #{dga_forward.1} parent=1 // pred_region
      _
    $region101: #{dga_forward.1} parent=1 // pred_fallthru
      _
    // Predicated region
    $region102: #{dga_forward.1} parent=1 // pred_check
      _
    $region103: #{dga_forward.1} parent=1 // pred_check_branch
      %84 = sbr.rel (0) target = $region105
    $region104: #{dga_forward.1} parent=1 // pred_region
      _
    $region105: #{dga_forward.1} parent=1 // pred_fallthru
      _
    // Predicated region
    $region106: #{dga_forward.1} parent=1 // pred_check
      _
    $region107: #{dga_forward.1} parent=1 // pred_check_branch
      %86 = sbr.rel (0) target = $region109
    $region108: #{dga_forward.1} parent=1 // pred_region
      _
    $region109: #{dga_forward.1} parent=1 // pred_fallthru
      _
    %v87 = vld [vmem:[%s0] sm:$0xff]
    %v88 = vld [vmem:[%s0 + $0x8] sm:$0xff]
    %v89 = vlaneseq
    %v90 = vand.u32 %v89, 127
    %91 = vset.pattern.permute.xlu0 0
    %92 = vperm.xlu0 %91, %v87
    %v93 = vpop.permute.xlu0 %92
    %94 = vset.pattern.permute.xlu0 0
    %95 = vperm.xlu0 %94, %v88
    %v96 = vpop.permute.xlu0 %95
    %vm97 = vcmp.eq.s32.totalorder %v90, %v93
    %vm98 = vcmp.eq.s32.totalorder %v90, %v96
    %v99 = vsel %vm97, 1, 0
    %v100 = vsel %vm98, 1, 0
    %v101 = vcvt.s32.f32 %v99
    %v102 = vcvt.s32.f32 %v100
    %v103 = vld [vmem:[%s1] sm:$0xff]
    %v104 = vld [vmem:[%s1 + $0x8] sm:$0xff]
    %v105 = vld [vmem:[%s1 + $0x10] sm:$0xff]
    %v106 = vld [vmem:[%s1 + $0x18] sm:$0xff]
    %v107 = vld [vmem:[%s1 + $0x20] sm:$0xff]
    %v108 = vld [vmem:[%s1 + $0x28] sm:$0xff]
    %v109 = vld [vmem:[%s1 + $0x30] sm:$0xff]
    %v110 = vld [vmem:[%s1 + $0x38] sm:$0xff]
    %v111 = vld [vmem:[%s2] sm:$0xff]
    %v112 = vld [vmem:[%s2 + $0x8] sm:$0xff]
    %vm113 = vcmask 523264
    %v115 = vsel %vm113, %v101, 0
    %v118 = vsel %vm113, %v102, 0
    %120 = vmatprep.subr.mxu0 0.0
    %121 = vmatpush1.msra.mxu0 0.0
    %122 = vmatprep.subr.mxu0 0.0
    %123 = vmatpush1.msra.mxu0 0.0
    %124 = vmatprep.subr.mxu0 0.0
    %125 = vmatpush1.msra.mxu0 0.0
    %126 = vmatprep.subr.mxu0 0.0
    %127 = vmatpush1.msra.mxu0 0.0
    %128 = vmatprep.subr.mxu0 0.0
    %129 = vmatpush1.msra.mxu0 0.0
    %130 = vmatprep.subr.mxu0 0.0
    %131 = vmatpush1.msra.mxu0 0.0
    %132 = vmatprep.subr.mxu0 0.0
    %133 = vmatpush1.msra.mxu0 0.0
    %134 = vmatprep.subr.mxu0 0.0
    %135 = vmatpush1.msra.mxu0 0.0
    %136 = vmatprep.subr.mxu0 0.0
    %137 = vmatpush1.msra.mxu0 %v110
    %138 = vmatprep.subr.mxu0 0.0
    %139 = vmatpush1.msra.mxu0 %v109
    %140 = vmatprep.subr.mxu0 0.0
    %141 = vmatpush1.msra.mxu0 %v108
    %142 = vmatprep.subr.mxu0 0.0
    %143 = vmatpush1.msra.mxu0 %v107
    %144 = vmatprep.subr.mxu0 0.0
    %145 = vmatpush1.msra.mxu0 %v106
    %146 = vmatprep.subr.mxu0 0.0
    %147 = vmatpush1.msra.mxu0 %v105
    %148 = vmatprep.subr.mxu0 0.0
    %149 = vmatpush1.msra.mxu0 %v104
    %150 = vmatprep.subr.mxu0 0.0
    %151 = vmatpush1.msra.mxu0 %v103
    %152 = vmatprep.subr.mxu0 0.0
    %153 = vmatpush2.msra.mxu0 0.0
    %154 = vmatprep.subr.mxu0 0.0
    %155 = vmatpush2.msra.mxu0 0.0
    %156 = vmatprep.subr.mxu0 0.0
    %157 = vmatpush2.msra.mxu0 0.0
    %158 = vmatprep.subr.mxu0 0.0
    %159 = vmatpush2.msra.mxu0 0.0
    %160 = vmatprep.subr.mxu0 0.0
    %161 = vmatpush2.msra.mxu0 0.0
    %162 = vmatprep.subr.mxu0 0.0
    %163 = vmatpush2.msra.mxu0 0.0
    %164 = vmatprep.subr.mxu0 0.0
    %165 = vmatpush2.msra.mxu0 0.0
    %166 = vmatprep.subr.mxu0 0.0
    %167 = vmatpush2.msra.mxu0 0.0
    %168 = vmatprep.subr.mxu0 0.0
    %169 = vmatpush2.msra.mxu0 0.0
    %170 = vmatprep.subr.mxu0 0.0
    %171 = vmatpush2.msra.mxu0 0.0
    %172 = vmatprep.subr.mxu0 0.0
    %173 = vmatpush2.msra.mxu0 0.0
    %174 = vmatprep.subr.mxu0 0.0
    %175 = vmatpush2.msra.mxu0 0.0
    %176 = vmatprep.subr.mxu0 0.0
    %177 = vmatpush2.msra.mxu0 0.0
    %178 = vmatprep.subr.mxu0 0.0
    %179 = vmatpush2.msra.mxu0 0.0
    %180 = vmatprep.subr.mxu0 0.0
    %181 = vmatpush2.msra.mxu0 0.0
    %182 = vmatprep.subr.mxu0 0.0
    %183 = vmatpush2.msra.mxu0 0.0
    %184 = vmatprep.mubr.f32.mxu0 0.0
    %185 = vmatmul.mubr.f32.gmra.mxu0 %v115
    %v186 = vpop.f32.mrf.mxu0
    %v187 = vadd.f32 %v111, %v186
    %v188 = vpop.f32.mrf.mxu0
    %189 = vmatprep.mubr.f32.mxu0 0.0
    %190 = vmatmul.mubr.f32.gmra.mxu0 %v118
    %v191 = vpop.f32.mrf.mxu0
    %v192 = vadd.f32 %v112, %v191
    %v193 = vpop.f32.mrf.mxu0
    %194 = vdwg.mxu0
    %v195 = vld [vmem:[%s3] sm:$0xff]
    %v196 = vld [vmem:[%s3 + $0x8] sm:$0xff]
    %v197 = vld [vmem:[%s3 + $0x10] sm:$0xff]
    %v198 = vld [vmem:[%s3 + $0x18] sm:$0xff]
    %vm199 = vcmask 261120
    %v201 = vsel %vm199, %v187, 0
    %v204 = vsel %vm199, %v192, 0
    %206 = vmatprep.subr.mxu0 0.0
    %207 = vmatpush1.msra.mxu0 0.0
    %208 = vmatprep.subr.mxu0 0.0
    %209 = vmatpush1.msra.mxu0 0.0
    %210 = vmatprep.subr.mxu0 0.0
    %211 = vmatpush1.msra.mxu0 0.0
    %212 = vmatprep.subr.mxu0 0.0
    %213 = vmatpush1.msra.mxu0 0.0
    %214 = vmatprep.subr.mxu0 0.0
    %215 = vmatpush1.msra.mxu0 0.0
    %216 = vmatprep.subr.mxu0 0.0
    %217 = vmatpush1.msra.mxu0 0.0
    %218 = vmatprep.subr.mxu0 0.0
    %219 = vmatpush1.msra.mxu0 0.0
    %220 = vmatprep.subr.mxu0 0.0
    %221 = vmatpush1.msra.mxu0 0.0
    %222 = vmatprep.subr.mxu0 0.0
    %223 = vmatpush1.msra.mxu0 0.0
    %224 = vmatprep.subr.mxu0 0.0
    %225 = vmatpush1.msra.mxu0 0.0
    %226 = vmatprep.subr.mxu0 0.0
    %227 = vmatpush1.msra.mxu0 0.0
    %228 = vmatprep.subr.mxu0 0.0
    %229 = vmatpush1.msra.mxu0 0.0
    %230 = vmatprep.subr.mxu0 0.0
    %231 = vmatpush1.msra.mxu0 %v198
    %232 = vmatprep.subr.mxu0 0.0
    %233 = vmatpush1.msra.mxu0 %v197
    %234 = vmatprep.subr.mxu0 0.0
    %235 = vmatpush1.msra.mxu0 %v196
    %236 = vmatprep.subr.mxu0 0.0
    %237 = vmatpush1.msra.mxu0 %v195
    %238 = vmatprep.subr.mxu0 0.0
    %239 = vmatpush2.msra.mxu0 0.0
    %240 = vmatprep.subr.mxu0 0.0
    %241 = vmatpush2.msra.mxu0 0.0
    %242 = vmatprep.subr.mxu0 0.0
    %243 = vmatpush2.msra.mxu0 0.0
    %244 = vmatprep.subr.mxu0 0.0
    %245 = vmatpush2.msra.mxu0 0.0
    %246 = vmatprep.subr.mxu0 0.0
    %247 = vmatpush2.msra.mxu0 0.0
    %248 = vmatprep.subr.mxu0 0.0
    %249 = vmatpush2.msra.mxu0 0.0
    %250 = vmatprep.subr.mxu0 0.0
    %251 = vmatpush2.msra.mxu0 0.0
    %252 = vmatprep.subr.mxu0 0.0
    %253 = vmatpush2.msra.mxu0 0.0
    %254 = vmatprep.subr.mxu0 0.0
    %255 = vmatpush2.msra.mxu0 0.0
    %256 = vmatprep.subr.mxu0 0.0
    %257 = vmatpush2.msra.mxu0 0.0
    %258 = vmatprep.subr.mxu0 0.0
    %259 = vmatpush2.msra.mxu0 0.0
    %260 = vmatprep.subr.mxu0 0.0
    %261 = vmatpush2.msra.mxu0 0.0
    %262 = vmatprep.subr.mxu0 0.0
    %263 = vmatpush2.msra.mxu0 0.0
    %264 = vmatprep.subr.mxu0 0.0
    %265 = vmatpush2.msra.mxu0 0.0
    %266 = vmatprep.subr.mxu0 0.0
    %267 = vmatpush2.msra.mxu0 0.0
    %268 = vmatprep.subr.mxu0 0.0
    %269 = vmatpush2.msra.mxu0 0.0
    %270 = vmatprep.mubr.f32.mxu0 0.0
    %271 = vmatmul.mubr.f32.gmra.mxu0 %v201
    %v272 = vpop.f32.mrf.mxu0
    %v273 = vadd.f32 0.0, %v272
    %v274 = vpop.f32.mrf.mxu0
    %275 = vmatprep.mubr.f32.mxu0 0.0
    %276 = vmatmul.mubr.f32.gmra.mxu0 %v204
    %v277 = vpop.f32.mrf.mxu0
    %v278 = vadd.f32 0.0, %v277
    %v279 = vpop.f32.mrf.mxu0
    %280 = vdwg.mxu0
    %283 = vrot.lane.b32.xlu0 %v273, 120
    %v284 = vpop.permute.xlu0 %283
    %285 = vrot.lane.b32.xlu0 %v278, 120
    %v286 = vpop.permute.xlu0 %285
    %287 = vrot.lane.b32.xlu0 %v273, 112
    %v288 = vpop.permute.xlu0 %287
    %289 = vrot.lane.b32.xlu0 %v278, 112
    %v290 = vpop.permute.xlu0 %289
    %291 = vrot.lane.b32.xlu0 %v273, 104
    %v292 = vpop.permute.xlu0 %291
    %293 = vrot.lane.b32.xlu0 %v278, 104
    %v294 = vpop.permute.xlu0 %293
    %295 = vrot.lane.b32.xlu0 %v273, 96
    %v296 = vpop.permute.xlu0 %295
    %vm297 = vcmask 64512
    %v298 = vsel %vm297, %v273, 0
    %v300 = vsel %vm297, %v296, 0
    %302 = vmatprep.subr.mxu0 0.0
    %303 = vmatpush1.xpose.msra.mxu0 0.0
    %304 = vmatprep.subr.mxu0 0.0
    %305 = vmatpush1.xpose.msra.mxu0 0.0
    %306 = vmatprep.subr.mxu0 0.0
    %307 = vmatpush1.xpose.msra.mxu0 0.0
    %308 = vmatprep.subr.mxu0 0.0
    %309 = vmatpush1.xpose.msra.mxu0 0.0
    %310 = vmatprep.subr.mxu0 0.0
    %311 = vmatpush1.xpose.msra.mxu0 0.0
    %312 = vmatprep.subr.mxu0 0.0
    %313 = vmatpush1.xpose.msra.mxu0 0.0
    %314 = vmatprep.subr.mxu0 0.0
    %315 = vmatpush1.xpose.msra.mxu0 0.0
    %316 = vmatprep.subr.mxu0 0.0
    %317 = vmatpush1.xpose.msra.mxu0 0.0
    %318 = vmatprep.subr.mxu0 0.0
    %319 = vmatpush1.xpose.msra.mxu0 0.0
    %320 = vmatprep.subr.mxu0 0.0
    %321 = vmatpush1.xpose.msra.mxu0 0.0
    %322 = vmatprep.subr.mxu0 0.0
    %323 = vmatpush1.xpose.msra.mxu0 0.0
    %324 = vmatprep.subr.mxu0 0.0
    %325 = vmatpush1.xpose.msra.mxu0 0.0
    %326 = vmatprep.subr.mxu0 0.0
    %327 = vmatpush1.xpose.msra.mxu0 0.0
    %328 = vmatprep.subr.mxu0 0.0
    %329 = vmatpush1.xpose.msra.mxu0 0.0
    %330 = vmatprep.subr.mxu0 0.0
    %331 = vmatpush1.xpose.msra.mxu0 0.0
    %332 = vmatprep.subr.mxu0 0.0
    %333 = vmatpush1.xpose.msra.mxu0 %v300
    %334 = vmatprep.subr.mxu0 0.0
    %335 = vmatpush2.xpose.msra.mxu0 0.0
    %336 = vmatprep.subr.mxu0 0.0
    %337 = vmatpush2.xpose.msra.mxu0 0.0
    %338 = vmatprep.subr.mxu0 0.0
    %339 = vmatpush2.xpose.msra.mxu0 0.0
    %340 = vmatprep.subr.mxu0 0.0
    %341 = vmatpush2.xpose.msra.mxu0 0.0
    %342 = vmatprep.subr.mxu0 0.0
    %343 = vmatpush2.xpose.msra.mxu0 0.0
    %344 = vmatprep.subr.mxu0 0.0
    %345 = vmatpush2.xpose.msra.mxu0 0.0
    %346 = vmatprep.subr.mxu0 0.0
    %347 = vmatpush2.xpose.msra.mxu0 0.0
    %348 = vmatprep.subr.mxu0 0.0
    %349 = vmatpush2.xpose.msra.mxu0 0.0
    %350 = vmatprep.subr.mxu0 0.0
    %351 = vmatpush2.xpose.msra.mxu0 0.0
    %352 = vmatprep.subr.mxu0 0.0
    %353 = vmatpush2.xpose.msra.mxu0 0.0
    %354 = vmatprep.subr.mxu0 0.0
    %355 = vmatpush2.xpose.msra.mxu0 0.0
    %356 = vmatprep.subr.mxu0 0.0
    %357 = vmatpush2.xpose.msra.mxu0 0.0
    %358 = vmatprep.subr.mxu0 0.0
    %359 = vmatpush2.xpose.msra.mxu0 0.0
    %360 = vmatprep.subr.mxu0 0.0
    %361 = vmatpush2.xpose.msra.mxu0 0.0
    %362 = vmatprep.subr.mxu0 0.0
    %363 = vmatpush2.xpose.msra.mxu0 0.0
    %364 = vmatprep.subr.mxu0 0.0
    %365 = vmatpush2.xpose.msra.mxu0 0.0
    %366 = vmatprep.mubr.f32.mxu0 0.0
    %367 = vmatmul.mubr.f32.gmra.mxu0 %v298
    %v368 = vpop.f32.mrf.mxu0
    %v369 = vadd.f32 0.0, %v368
    %v370 = vpop.f32.mrf.mxu0
    %371 = vdwg.mxu0
    %372 = vrot.lane.b32.xlu0 %v278, 96
    %v373 = vpop.permute.xlu0 %372
    %v374 = vsel %vm297, %v278, 0
    %v376 = vsel %vm297, %v373, 0
    %378 = vmatprep.subr.mxu0 0.0
    %379 = vmatpush1.xpose.msra.mxu0 0.0
    %380 = vmatprep.subr.mxu0 0.0
    %381 = vmatpush1.xpose.msra.mxu0 0.0
    %382 = vmatprep.subr.mxu0 0.0
    %383 = vmatpush1.xpose.msra.mxu0 0.0
    %384 = vmatprep.subr.mxu0 0.0
    %385 = vmatpush1.xpose.msra.mxu0 0.0
    %386 = vmatprep.subr.mxu0 0.0
    %387 = vmatpush1.xpose.msra.mxu0 0.0
    %388 = vmatprep.subr.mxu0 0.0
    %389 = vmatpush1.xpose.msra.mxu0 0.0
    %390 = vmatprep.subr.mxu0 0.0
    %391 = vmatpush1.xpose.msra.mxu0 0.0
    %392 = vmatprep.subr.mxu0 0.0
    %393 = vmatpush1.xpose.msra.mxu0 0.0
    %394 = vmatprep.subr.mxu0 0.0
    %395 = vmatpush1.xpose.msra.mxu0 0.0
    %396 = vmatprep.subr.mxu0 0.0
    %397 = vmatpush1.xpose.msra.mxu0 0.0
    %398 = vmatprep.subr.mxu0 0.0
    %399 = vmatpush1.xpose.msra.mxu0 0.0
    %400 = vmatprep.subr.mxu0 0.0
    %401 = vmatpush1.xpose.msra.mxu0 0.0
    %402 = vmatprep.subr.mxu0 0.0
    %403 = vmatpush1.xpose.msra.mxu0 0.0
    %404 = vmatprep.subr.mxu0 0.0
    %405 = vmatpush1.xpose.msra.mxu0 0.0
    %406 = vmatprep.subr.mxu0 0.0
    %407 = vmatpush1.xpose.msra.mxu0 0.0
    %408 = vmatprep.subr.mxu0 0.0
    %409 = vmatpush1.xpose.msra.mxu0 %v376
    %410 = vmatprep.subr.mxu0 0.0
    %411 = vmatpush2.xpose.msra.mxu0 0.0
    %412 = vmatprep.subr.mxu0 0.0
    %413 = vmatpush2.xpose.msra.mxu0 0.0
    %414 = vmatprep.subr.mxu0 0.0
    %415 = vmatpush2.xpose.msra.mxu0 0.0
    %416 = vmatprep.subr.mxu0 0.0
    %417 = vmatpush2.xpose.msra.mxu0 0.0
    %418 = vmatprep.subr.mxu0 0.0
    %419 = vmatpush2.xpose.msra.mxu0 0.0
    %420 = vmatprep.subr.mxu0 0.0
    %421 = vmatpush2.xpose.msra.mxu0 0.0
    %422 = vmatprep.subr.mxu0 0.0
    %423 = vmatpush2.xpose.msra.mxu0 0.0
    %424 = vmatprep.subr.mxu0 0.0
    %425 = vmatpush2.xpose.msra.mxu0 0.0
    %426 = vmatprep.subr.mxu0 0.0
    %427 = vmatpush2.xpose.msra.mxu0 0.0
    %428 = vmatprep.subr.mxu0 0.0
    %429 = vmatpush2.xpose.msra.mxu0 0.0
    %430 = vmatprep.subr.mxu0 0.0
    %431 = vmatpush2.xpose.msra.mxu0 0.0
    %432 = vmatprep.subr.mxu0 0.0
    %433 = vmatpush2.xpose.msra.mxu0 0.0
    %434 = vmatprep.subr.mxu0 0.0
    %435 = vmatpush2.xpose.msra.mxu0 0.0
    %436 = vmatprep.subr.mxu0 0.0
    %437 = vmatpush2.xpose.msra.mxu0 0.0
    %438 = vmatprep.subr.mxu0 0.0
    %439 = vmatpush2.xpose.msra.mxu0 0.0
    %440 = vmatprep.subr.mxu0 0.0
    %441 = vmatpush2.xpose.msra.mxu0 0.0
    %442 = vmatprep.mubr.f32.mxu0 0.0
    %443 = vmatmul.mubr.f32.gmra.mxu0 %v374
    %v444 = vpop.f32.mrf.mxu0
    %v445 = vadd.f32 0.0, %v444
    %v446 = vpop.f32.mrf.mxu0
    %447 = vdwg.mxu0
    %448 = vrot.lane.b32.xlu0 %v284, 96
    %v449 = vpop.permute.xlu0 %448
    %v450 = vsel %vm297, %v284, 0
    %v452 = vsel %vm297, %v449, 0
    %454 = vmatprep.subr.mxu0 0.0
    %455 = vmatpush1.xpose.msra.mxu0 0.0
    %456 = vmatprep.subr.mxu0 0.0
    %457 = vmatpush1.xpose.msra.mxu0 0.0
    %458 = vmatprep.subr.mxu0 0.0
    %459 = vmatpush1.xpose.msra.mxu0 0.0
    %460 = vmatprep.subr.mxu0 0.0
    %461 = vmatpush1.xpose.msra.mxu0 0.0
    %462 = vmatprep.subr.mxu0 0.0
    %463 = vmatpush1.xpose.msra.mxu0 0.0
    %464 = vmatprep.subr.mxu0 0.0
    %465 = vmatpush1.xpose.msra.mxu0 0.0
    %466 = vmatprep.subr.mxu0 0.0
    %467 = vmatpush1.xpose.msra.mxu0 0.0
    %468 = vmatprep.subr.mxu0 0.0
    %469 = vmatpush1.xpose.msra.mxu0 0.0
    %470 = vmatprep.subr.mxu0 0.0
    %471 = vmatpush1.xpose.msra.mxu0 0.0
    %472 = vmatprep.subr.mxu0 0.0
    %473 = vmatpush1.xpose.msra.mxu0 0.0
    %474 = vmatprep.subr.mxu0 0.0
    %475 = vmatpush1.xpose.msra.mxu0 0.0
    %476 = vmatprep.subr.mxu0 0.0
    %477 = vmatpush1.xpose.msra.mxu0 0.0
    %478 = vmatprep.subr.mxu0 0.0
    %479 = vmatpush1.xpose.msra.mxu0 0.0
    %480 = vmatprep.subr.mxu0 0.0
    %481 = vmatpush1.xpose.msra.mxu0 0.0
    %482 = vmatprep.subr.mxu0 0.0
    %483 = vmatpush1.xpose.msra.mxu0 0.0
    %484 = vmatprep.subr.mxu0 0.0
    %485 = vmatpush1.xpose.msra.mxu0 %v452
    %486 = vmatprep.subr.mxu0 0.0
    %487 = vmatpush2.xpose.msra.mxu0 0.0
    %488 = vmatprep.subr.mxu0 0.0
    %489 = vmatpush2.xpose.msra.mxu0 0.0
    %490 = vmatprep.subr.mxu0 0.0
    %491 = vmatpush2.xpose.msra.mxu0 0.0
    %492 = vmatprep.subr.mxu0 0.0
    %493 = vmatpush2.xpose.msra.mxu0 0.0
    %494 = vmatprep.subr.mxu0 0.0
    %495 = vmatpush2.xpose.msra.mxu0 0.0
    %496 = vmatprep.subr.mxu0 0.0
    %497 = vmatpush2.xpose.msra.mxu0 0.0
    %498 = vmatprep.subr.mxu0 0.0
    %499 = vmatpush2.xpose.msra.mxu0 0.0
    %500 = vmatprep.subr.mxu0 0.0
    %501 = vmatpush2.xpose.msra.mxu0 0.0
    %502 = vmatprep.subr.mxu0 0.0
    %503 = vmatpush2.xpose.msra.mxu0 0.0
    %504 = vmatprep.subr.mxu0 0.0
    %505 = vmatpush2.xpose.msra.mxu0 0.0
    %506 = vmatprep.subr.mxu0 0.0
    %507 = vmatpush2.xpose.msra.mxu0 0.0
    %508 = vmatprep.subr.mxu0 0.0
    %509 = vmatpush2.xpose.msra.mxu0 0.0
    %510 = vmatprep.subr.mxu0 0.0
    %511 = vmatpush2.xpose.msra.mxu0 0.0
    %512 = vmatprep.subr.mxu0 0.0
    %513 = vmatpush2.xpose.msra.mxu0 0.0
    %514 = vmatprep.subr.mxu0 0.0
    %515 = vmatpush2.xpose.msra.mxu0 0.0
    %516 = vmatprep.subr.mxu0 0.0
    %517 = vmatpush2.xpose.msra.mxu0 0.0
    %518 = vmatprep.mubr.f32.mxu0 0.0
    %519 = vmatmul.mubr.f32.gmra.mxu0 %v450
    %v520 = vpop.f32.mrf.mxu0
    %v521 = vadd.f32 0.0, %v520
    %v522 = vpop.f32.mrf.mxu0
    %523 = vdwg.mxu0
    %524 = vrot.lane.b32.xlu0 %v286, 96
    %v525 = vpop.permute.xlu0 %524
    %v526 = vsel %vm297, %v286, 0
    %v528 = vsel %vm297, %v525, 0
    %530 = vmatprep.subr.mxu0 0.0
    %531 = vmatpush1.xpose.msra.mxu0 0.0
    %532 = vmatprep.subr.mxu0 0.0
    %533 = vmatpush1.xpose.msra.mxu0 0.0
    %534 = vmatprep.subr.mxu0 0.0
    %535 = vmatpush1.xpose.msra.mxu0 0.0
    %536 = vmatprep.subr.mxu0 0.0
    %537 = vmatpush1.xpose.msra.mxu0 0.0
    %538 = vmatprep.subr.mxu0 0.0
    %539 = vmatpush1.xpose.msra.mxu0 0.0
    %540 = vmatprep.subr.mxu0 0.0
    %541 = vmatpush1.xpose.msra.mxu0 0.0
    %542 = vmatprep.subr.mxu0 0.0
    %543 = vmatpush1.xpose.msra.mxu0 0.0
    %544 = vmatprep.subr.mxu0 0.0
    %545 = vmatpush1.xpose.msra.mxu0 0.0
    %546 = vmatprep.subr.mxu0 0.0
    %547 = vmatpush1.xpose.msra.mxu0 0.0
    %548 = vmatprep.subr.mxu0 0.0
    %549 = vmatpush1.xpose.msra.mxu0 0.0
    %550 = vmatprep.subr.mxu0 0.0
    %551 = vmatpush1.xpose.msra.mxu0 0.0
    %552 = vmatprep.subr.mxu0 0.0
    %553 = vmatpush1.xpose.msra.mxu0 0.0
    %554 = vmatprep.subr.mxu0 0.0
    %555 = vmatpush1.xpose.msra.mxu0 0.0
    %556 = vmatprep.subr.mxu0 0.0
    %557 = vmatpush1.xpose.msra.mxu0 0.0
    %558 = vmatprep.subr.mxu0 0.0
    %559 = vmatpush1.xpose.msra.mxu0 0.0
    %560 = vmatprep.subr.mxu0 0.0
    %561 = vmatpush1.xpose.msra.mxu0 %v528
    %562 = vmatprep.subr.mxu0 0.0
    %563 = vmatpush2.xpose.msra.mxu0 0.0
    %564 = vmatprep.subr.mxu0 0.0
    %565 = vmatpush2.xpose.msra.mxu0 0.0
    %566 = vmatprep.subr.mxu0 0.0
    %567 = vmatpush2.xpose.msra.mxu0 0.0
    %568 = vmatprep.subr.mxu0 0.0
    %569 = vmatpush2.xpose.msra.mxu0 0.0
    %570 = vmatprep.subr.mxu0 0.0
    %571 = vmatpush2.xpose.msra.mxu0 0.0
    %572 = vmatprep.subr.mxu0 0.0
    %573 = vmatpush2.xpose.msra.mxu0 0.0
    %574 = vmatprep.subr.mxu0 0.0
    %575 = vmatpush2.xpose.msra.mxu0 0.0
    %576 = vmatprep.subr.mxu0 0.0
    %577 = vmatpush2.xpose.msra.mxu0 0.0
    %578 = vmatprep.subr.mxu0 0.0
    %579 = vmatpush2.xpose.msra.mxu0 0.0
    %580 = vmatprep.subr.mxu0 0.0
    %581 = vmatpush2.xpose.msra.mxu0 0.0
    %582 = vmatprep.subr.mxu0 0.0
    %583 = vmatpush2.xpose.msra.mxu0 0.0
    %584 = vmatprep.subr.mxu0 0.0
    %585 = vmatpush2.xpose.msra.mxu0 0.0
    %586 = vmatprep.subr.mxu0 0.0
    %587 = vmatpush2.xpose.msra.mxu0 0.0
    %588 = vmatprep.subr.mxu0 0.0
    %589 = vmatpush2.xpose.msra.mxu0 0.0
    %590 = vmatprep.subr.mxu0 0.0
    %591 = vmatpush2.xpose.msra.mxu0 0.0
    %592 = vmatprep.subr.mxu0 0.0
    %593 = vmatpush2.xpose.msra.mxu0 0.0
    %594 = vmatprep.mubr.f32.mxu0 0.0
    %595 = vmatmul.mubr.f32.gmra.mxu0 %v526
    %v596 = vpop.f32.mrf.mxu0
    %v597 = vadd.f32 0.0, %v596
    %v598 = vpop.f32.mrf.mxu0
    %599 = vdwg.mxu0
    %600 = vrot.lane.b32.xlu0 %v288, 96
    %v601 = vpop.permute.xlu0 %600
    %v602 = vsel %vm297, %v288, 0
    %v604 = vsel %vm297, %v601, 0
    %606 = vmatprep.subr.mxu0 0.0
    %607 = vmatpush1.xpose.msra.mxu0 0.0
    %608 = vmatprep.subr.mxu0 0.0
    %609 = vmatpush1.xpose.msra.mxu0 0.0
    %610 = vmatprep.subr.mxu0 0.0
    %611 = vmatpush1.xpose.msra.mxu0 0.0
    %612 = vmatprep.subr.mxu0 0.0
    %613 = vmatpush1.xpose.msra.mxu0 0.0
    %614 = vmatprep.subr.mxu0 0.0
    %615 = vmatpush1.xpose.msra.mxu0 0.0
    %616 = vmatprep.subr.mxu0 0.0
    %617 = vmatpush1.xpose.msra.mxu0 0.0
    %618 = vmatprep.subr.mxu0 0.0
    %619 = vmatpush1.xpose.msra.mxu0 0.0
    %620 = vmatprep.subr.mxu0 0.0
    %621 = vmatpush1.xpose.msra.mxu0 0.0
    %622 = vmatprep.subr.mxu0 0.0
    %623 = vmatpush1.xpose.msra.mxu0 0.0
    %624 = vmatprep.subr.mxu0 0.0
    %625 = vmatpush1.xpose.msra.mxu0 0.0
    %626 = vmatprep.subr.mxu0 0.0
    %627 = vmatpush1.xpose.msra.mxu0 0.0
    %628 = vmatprep.subr.mxu0 0.0
    %629 = vmatpush1.xpose.msra.mxu0 0.0
    %630 = vmatprep.subr.mxu0 0.0
    %631 = vmatpush1.xpose.msra.mxu0 0.0
    %632 = vmatprep.subr.mxu0 0.0
    %633 = vmatpush1.xpose.msra.mxu0 0.0
    %634 = vmatprep.subr.mxu0 0.0
    %635 = vmatpush1.xpose.msra.mxu0 0.0
    %636 = vmatprep.subr.mxu0 0.0
    %637 = vmatpush1.xpose.msra.mxu0 %v604
    %638 = vmatprep.subr.mxu0 0.0
    %639 = vmatpush2.xpose.msra.mxu0 0.0
    %640 = vmatprep.subr.mxu0 0.0
    %641 = vmatpush2.xpose.msra.mxu0 0.0
    %642 = vmatprep.subr.mxu0 0.0
    %643 = vmatpush2.xpose.msra.mxu0 0.0
    %644 = vmatprep.subr.mxu0 0.0
    %645 = vmatpush2.xpose.msra.mxu0 0.0
    %646 = vmatprep.subr.mxu0 0.0
    %647 = vmatpush2.xpose.msra.mxu0 0.0
    %648 = vmatprep.subr.mxu0 0.0
    %649 = vmatpush2.xpose.msra.mxu0 0.0
    %650 = vmatprep.subr.mxu0 0.0
    %651 = vmatpush2.xpose.msra.mxu0 0.0
    %652 = vmatprep.subr.mxu0 0.0
    %653 = vmatpush2.xpose.msra.mxu0 0.0
    %654 = vmatprep.subr.mxu0 0.0
    %655 = vmatpush2.xpose.msra.mxu0 0.0
    %656 = vmatprep.subr.mxu0 0.0
    %657 = vmatpush2.xpose.msra.mxu0 0.0
    %658 = vmatprep.subr.mxu0 0.0
    %659 = vmatpush2.xpose.msra.mxu0 0.0
    %660 = vmatprep.subr.mxu0 0.0
    %661 = vmatpush2.xpose.msra.mxu0 0.0
    %662 = vmatprep.subr.mxu0 0.0
    %663 = vmatpush2.xpose.msra.mxu0 0.0
    %664 = vmatprep.subr.mxu0 0.0
    %665 = vmatpush2.xpose.msra.mxu0 0.0
    %666 = vmatprep.subr.mxu0 0.0
    %667 = vmatpush2.xpose.msra.mxu0 0.0
    %668 = vmatprep.subr.mxu0 0.0
    %669 = vmatpush2.xpose.msra.mxu0 0.0
    %670 = vmatprep.mubr.f32.mxu0 0.0
    %671 = vmatmul.mubr.f32.gmra.mxu0 %v602
    %v672 = vpop.f32.mrf.mxu0
    %v673 = vadd.f32 0.0, %v672
    %v674 = vpop.f32.mrf.mxu0
    %675 = vdwg.mxu0
    %676 = vrot.lane.b32.xlu0 %v290, 96
    %v677 = vpop.permute.xlu0 %676
    %v678 = vsel %vm297, %v290, 0
    %v680 = vsel %vm297, %v677, 0
    %682 = vmatprep.subr.mxu0 0.0
    %683 = vmatpush1.xpose.msra.mxu0 0.0
    %684 = vmatprep.subr.mxu0 0.0
    %685 = vmatpush1.xpose.msra.mxu0 0.0
    %686 = vmatprep.subr.mxu0 0.0
    %687 = vmatpush1.xpose.msra.mxu0 0.0
    %688 = vmatprep.subr.mxu0 0.0
    %689 = vmatpush1.xpose.msra.mxu0 0.0
    %690 = vmatprep.subr.mxu0 0.0
    %691 = vmatpush1.xpose.msra.mxu0 0.0
    %692 = vmatprep.subr.mxu0 0.0
    %693 = vmatpush1.xpose.msra.mxu0 0.0
    %694 = vmatprep.subr.mxu0 0.0
    %695 = vmatpush1.xpose.msra.mxu0 0.0
    %696 = vmatprep.subr.mxu0 0.0
    %697 = vmatpush1.xpose.msra.mxu0 0.0
    %698 = vmatprep.subr.mxu0 0.0
    %699 = vmatpush1.xpose.msra.mxu0 0.0
    %700 = vmatprep.subr.mxu0 0.0
    %701 = vmatpush1.xpose.msra.mxu0 0.0
    %702 = vmatprep.subr.mxu0 0.0
    %703 = vmatpush1.xpose.msra.mxu0 0.0
    %704 = vmatprep.subr.mxu0 0.0
    %705 = vmatpush1.xpose.msra.mxu0 0.0
    %706 = vmatprep.subr.mxu0 0.0
    %707 = vmatpush1.xpose.msra.mxu0 0.0
    %708 = vmatprep.subr.mxu0 0.0
    %709 = vmatpush1.xpose.msra.mxu0 0.0
    %710 = vmatprep.subr.mxu0 0.0
    %711 = vmatpush1.xpose.msra.mxu0 0.0
    %712 = vmatprep.subr.mxu0 0.0
    %713 = vmatpush1.xpose.msra.mxu0 %v680
    %714 = vmatprep.subr.mxu0 0.0
    %715 = vmatpush2.xpose.msra.mxu0 0.0
    %716 = vmatprep.subr.mxu0 0.0
    %717 = vmatpush2.xpose.msra.mxu0 0.0
    %718 = vmatprep.subr.mxu0 0.0
    %719 = vmatpush2.xpose.msra.mxu0 0.0
    %720 = vmatprep.subr.mxu0 0.0
    %721 = vmatpush2.xpose.msra.mxu0 0.0
    %722 = vmatprep.subr.mxu0 0.0
    %723 = vmatpush2.xpose.msra.mxu0 0.0
    %724 = vmatprep.subr.mxu0 0.0
    %725 = vmatpush2.xpose.msra.mxu0 0.0
    %726 = vmatprep.subr.mxu0 0.0
    %727 = vmatpush2.xpose.msra.mxu0 0.0
    %728 = vmatprep.subr.mxu0 0.0
    %729 = vmatpush2.xpose.msra.mxu0 0.0
    %730 = vmatprep.subr.mxu0 0.0
    %731 = vmatpush2.xpose.msra.mxu0 0.0
    %732 = vmatprep.subr.mxu0 0.0
    %733 = vmatpush2.xpose.msra.mxu0 0.0
    %734 = vmatprep.subr.mxu0 0.0
    %735 = vmatpush2.xpose.msra.mxu0 0.0
    %736 = vmatprep.subr.mxu0 0.0
    %737 = vmatpush2.xpose.msra.mxu0 0.0
    %738 = vmatprep.subr.mxu0 0.0
    %739 = vmatpush2.xpose.msra.mxu0 0.0
    %740 = vmatprep.subr.mxu0 0.0
    %741 = vmatpush2.xpose.msra.mxu0 0.0
    %742 = vmatprep.subr.mxu0 0.0
    %743 = vmatpush2.xpose.msra.mxu0 0.0
    %744 = vmatprep.subr.mxu0 0.0
    %745 = vmatpush2.xpose.msra.mxu0 0.0
    %746 = vmatprep.mubr.f32.mxu0 0.0
    %747 = vmatmul.mubr.f32.gmra.mxu0 %v678
    %v748 = vpop.f32.mrf.mxu0
    %v749 = vadd.f32 0.0, %v748
    %v750 = vpop.f32.mrf.mxu0
    %751 = vdwg.mxu0
    %752 = vrot.lane.b32.xlu0 %v292, 96
    %v753 = vpop.permute.xlu0 %752
    %v754 = vsel %vm297, %v292, 0
    %v756 = vsel %vm297, %v753, 0
    %758 = vmatprep.subr.mxu0 0.0
    %759 = vmatpush1.xpose.msra.mxu0 0.0
    %760 = vmatprep.subr.mxu0 0.0
    %761 = vmatpush1.xpose.msra.mxu0 0.0
    %762 = vmatprep.subr.mxu0 0.0
    %763 = vmatpush1.xpose.msra.mxu0 0.0
    %764 = vmatprep.subr.mxu0 0.0
    %765 = vmatpush1.xpose.msra.mxu0 0.0
    %766 = vmatprep.subr.mxu0 0.0
    %767 = vmatpush1.xpose.msra.mxu0 0.0
    %768 = vmatprep.subr.mxu0 0.0
    %769 = vmatpush1.xpose.msra.mxu0 0.0
    %770 = vmatprep.subr.mxu0 0.0
    %771 = vmatpush1.xpose.msra.mxu0 0.0
    %772 = vmatprep.subr.mxu0 0.0
    %773 = vmatpush1.xpose.msra.mxu0 0.0
    %774 = vmatprep.subr.mxu0 0.0
    %775 = vmatpush1.xpose.msra.mxu0 0.0
    %776 = vmatprep.subr.mxu0 0.0
    %777 = vmatpush1.xpose.msra.mxu0 0.0
    %778 = vmatprep.subr.mxu0 0.0
    %779 = vmatpush1.xpose.msra.mxu0 0.0
    %780 = vmatprep.subr.mxu0 0.0
    %781 = vmatpush1.xpose.msra.mxu0 0.0
    %782 = vmatprep.subr.mxu0 0.0
    %783 = vmatpush1.xpose.msra.mxu0 0.0
    %784 = vmatprep.subr.mxu0 0.0
    %785 = vmatpush1.xpose.msra.mxu0 0.0
    %786 = vmatprep.subr.mxu0 0.0
    %787 = vmatpush1.xpose.msra.mxu0 0.0
    %788 = vmatprep.subr.mxu0 0.0
    %789 = vmatpush1.xpose.msra.mxu0 %v756
    %790 = vmatprep.subr.mxu0 0.0
    %791 = vmatpush2.xpose.msra.mxu0 0.0
    %792 = vmatprep.subr.mxu0 0.0
    %793 = vmatpush2.xpose.msra.mxu0 0.0
    %794 = vmatprep.subr.mxu0 0.0
    %795 = vmatpush2.xpose.msra.mxu0 0.0
    %796 = vmatprep.subr.mxu0 0.0
    %797 = vmatpush2.xpose.msra.mxu0 0.0
    %798 = vmatprep.subr.mxu0 0.0
    %799 = vmatpush2.xpose.msra.mxu0 0.0
    %800 = vmatprep.subr.mxu0 0.0
    %801 = vmatpush2.xpose.msra.mxu0 0.0
    %802 = vmatprep.subr.mxu0 0.0
    %803 = vmatpush2.xpose.msra.mxu0 0.0
    %804 = vmatprep.subr.mxu0 0.0
    %805 = vmatpush2.xpose.msra.mxu0 0.0
    %806 = vmatprep.subr.mxu0 0.0
    %807 = vmatpush2.xpose.msra.mxu0 0.0
    %808 = vmatprep.subr.mxu0 0.0
    %809 = vmatpush2.xpose.msra.mxu0 0.0
    %810 = vmatprep.subr.mxu0 0.0
    %811 = vmatpush2.xpose.msra.mxu0 0.0
    %812 = vmatprep.subr.mxu0 0.0
    %813 = vmatpush2.xpose.msra.mxu0 0.0
    %814 = vmatprep.subr.mxu0 0.0
    %815 = vmatpush2.xpose.msra.mxu0 0.0
    %816 = vmatprep.subr.mxu0 0.0
    %817 = vmatpush2.xpose.msra.mxu0 0.0
    %818 = vmatprep.subr.mxu0 0.0
    %819 = vmatpush2.xpose.msra.mxu0 0.0
    %820 = vmatprep.subr.mxu0 0.0
    %821 = vmatpush2.xpose.msra.mxu0 0.0
    %822 = vmatprep.mubr.f32.mxu0 0.0
    %823 = vmatmul.mubr.f32.gmra.mxu0 %v754
    %v824 = vpop.f32.mrf.mxu0
    %v825 = vadd.f32 0.0, %v824
    %v826 = vpop.f32.mrf.mxu0
    %827 = vdwg.mxu0
    %828 = vrot.lane.b32.xlu0 %v294, 96
    %v829 = vpop.permute.xlu0 %828
    %v830 = vsel %vm297, %v294, 0
    %v832 = vsel %vm297, %v829, 0
    %834 = vmatprep.subr.mxu0 0.0
    %835 = vmatpush1.xpose.msra.mxu0 0.0
    %836 = vmatprep.subr.mxu0 0.0
    %837 = vmatpush1.xpose.msra.mxu0 0.0
    %838 = vmatprep.subr.mxu0 0.0
    %839 = vmatpush1.xpose.msra.mxu0 0.0
    %840 = vmatprep.subr.mxu0 0.0
    %841 = vmatpush1.xpose.msra.mxu0 0.0
    %842 = vmatprep.subr.mxu0 0.0
    %843 = vmatpush1.xpose.msra.mxu0 0.0
    %844 = vmatprep.subr.mxu0 0.0
    %845 = vmatpush1.xpose.msra.mxu0 0.0
    %846 = vmatprep.subr.mxu0 0.0
    %847 = vmatpush1.xpose.msra.mxu0 0.0
    %848 = vmatprep.subr.mxu0 0.0
    %849 = vmatpush1.xpose.msra.mxu0 0.0
    %850 = vmatprep.subr.mxu0 0.0
    %851 = vmatpush1.xpose.msra.mxu0 0.0
    %852 = vmatprep.subr.mxu0 0.0
    %853 = vmatpush1.xpose.msra.mxu0 0.0
    %854 = vmatprep.subr.mxu0 0.0
    %855 = vmatpush1.xpose.msra.mxu0 0.0
    %856 = vmatprep.subr.mxu0 0.0
    %857 = vmatpush1.xpose.msra.mxu0 0.0
    %858 = vmatprep.subr.mxu0 0.0
    %859 = vmatpush1.xpose.msra.mxu0 0.0
    %860 = vmatprep.subr.mxu0 0.0
    %861 = vmatpush1.xpose.msra.mxu0 0.0
    %862 = vmatprep.subr.mxu0 0.0
    %863 = vmatpush1.xpose.msra.mxu0 0.0
    %864 = vmatprep.subr.mxu0 0.0
    %865 = vmatpush1.xpose.msra.mxu0 %v832
    %866 = vmatprep.subr.mxu0 0.0
    %867 = vmatpush2.xpose.msra.mxu0 0.0
    %868 = vmatprep.subr.mxu0 0.0
    %869 = vmatpush2.xpose.msra.mxu0 0.0
    %870 = vmatprep.subr.mxu0 0.0
    %871 = vmatpush2.xpose.msra.mxu0 0.0
    %872 = vmatprep.subr.mxu0 0.0
    %873 = vmatpush2.xpose.msra.mxu0 0.0
    %874 = vmatprep.subr.mxu0 0.0
    %875 = vmatpush2.xpose.msra.mxu0 0.0
    %876 = vmatprep.subr.mxu0 0.0
    %877 = vmatpush2.xpose.msra.mxu0 0.0
    %878 = vmatprep.subr.mxu0 0.0
    %879 = vmatpush2.xpose.msra.mxu0 0.0
    %880 = vmatprep.subr.mxu0 0.0
    %881 = vmatpush2.xpose.msra.mxu0 0.0
    %882 = vmatprep.subr.mxu0 0.0
    %883 = vmatpush2.xpose.msra.mxu0 0.0
    %884 = vmatprep.subr.mxu0 0.0
    %885 = vmatpush2.xpose.msra.mxu0 0.0
    %886 = vmatprep.subr.mxu0 0.0
    %887 = vmatpush2.xpose.msra.mxu0 0.0
    %888 = vmatprep.subr.mxu0 0.0
    %889 = vmatpush2.xpose.msra.mxu0 0.0
    %890 = vmatprep.subr.mxu0 0.0
    %891 = vmatpush2.xpose.msra.mxu0 0.0
    %892 = vmatprep.subr.mxu0 0.0
    %893 = vmatpush2.xpose.msra.mxu0 0.0
    %894 = vmatprep.subr.mxu0 0.0
    %895 = vmatpush2.xpose.msra.mxu0 0.0
    %896 = vmatprep.subr.mxu0 0.0
    %897 = vmatpush2.xpose.msra.mxu0 0.0
    %898 = vmatprep.mubr.f32.mxu0 0.0
    %899 = vmatmul.mubr.f32.gmra.mxu0 %v830
    %v900 = vpop.f32.mrf.mxu0
    %v901 = vadd.f32 0.0, %v900
    %v902 = vpop.f32.mrf.mxu0
    %903 = vdwg.mxu0
    %v904 = vcvt.s32.f32 %v90
    %v905 = vsel %vm297, %v369, -inf
    %906 = vmax.xlane.f32.xlu0 %v905
    %v907 = vpop.xlane.xlu0 %906
    %v908 = vsel %vm297, %v445, -inf
    %909 = vmax.xlane.f32.xlu0 %v908
    %v910 = vpop.xlane.xlu0 %909
    %v911 = vsel %vm297, %v521, -inf
    %912 = vmax.xlane.f32.xlu0 %v911
    %v913 = vpop.xlane.xlu0 %912
    %v914 = vsel %vm297, %v597, -inf
    %915 = vmax.xlane.f32.xlu0 %v914
    %v916 = vpop.xlane.xlu0 %915
    %v917 = vsel %vm297, %v673, -inf
    %918 = vmax.xlane.f32.xlu0 %v917
    %v919 = vpop.xlane.xlu0 %918
    %v920 = vsel %vm297, %v749, -inf
    %921 = vmax.xlane.f32.xlu0 %v920
    %v922 = vpop.xlane.xlu0 %921
    %v923 = vsel %vm297, %v825, -inf
    %924 = vmax.xlane.f32.xlu0 %v923
    %v925 = vpop.xlane.xlu0 %924
    %v926 = vsel %vm297, %v901, -inf
    %927 = vmax.xlane.f32.xlu0 %v926
    %v928 = vpop.xlane.xlu0 %927
    %vm929 = vcmp.eq.f32.partialorder %v369, %v907
    %vm930 = vcmp.eq.f32.partialorder %v445, %v910
    %vm931 = vcmp.eq.f32.partialorder %v521, %v913
    %vm932 = vcmp.eq.f32.partialorder %v597, %v916
    %vm933 = vcmp.eq.f32.partialorder %v673, %v919
    %vm934 = vcmp.eq.f32.partialorder %v749, %v922
    %vm935 = vcmp.eq.f32.partialorder %v825, %v925
    %vm936 = vcmp.eq.f32.partialorder %v901, %v928
    %v937 = vsel %vm929, %v904, 8.0
    %v938 = vsel %vm930, %v904, 8.0
    %v939 = vsel %vm931, %v904, 8.0
    %v940 = vsel %vm932, %v904, 8.0
    %v941 = vsel %vm933, %v904, 8.0
    %v942 = vsel %vm934, %v904, 8.0
    %v943 = vsel %vm935, %v904, 8.0
    %v944 = vsel %vm936, %v904, 8.0
    %v945 = vsel %vm297, %v937, inf
    %946 = vmin.xlane.f32.xlu0 %v945
    %v947 = vpop.xlane.xlu0 %946
    %v948 = vsel %vm297, %v938, inf
    %949 = vmin.xlane.f32.xlu0 %v948
    %v950 = vpop.xlane.xlu0 %949
    %v951 = vsel %vm297, %v939, inf
    %952 = vmin.xlane.f32.xlu0 %v951
    %v953 = vpop.xlane.xlu0 %952
    %v954 = vsel %vm297, %v940, inf
    %955 = vmin.xlane.f32.xlu0 %v954
    %v956 = vpop.xlane.xlu0 %955
    %v957 = vsel %vm297, %v941, inf
    %958 = vmin.xlane.f32.xlu0 %v957
    %v959 = vpop.xlane.xlu0 %958
    %v960 = vsel %vm297, %v942, inf
    %961 = vmin.xlane.f32.xlu0 %v960
    %v962 = vpop.xlane.xlu0 %961
    %v963 = vsel %vm297, %v943, inf
    %964 = vmin.xlane.f32.xlu0 %v963
    %v965 = vpop.xlane.xlu0 %964
    %v966 = vsel %vm297, %v944, inf
    %967 = vmin.xlane.f32.xlu0 %v966
    %v968 = vpop.xlane.xlu0 %967
    %vm969 = vcmp.eq.f32.partialorder %v904, %v947
    %vm970 = vcmp.eq.f32.partialorder %v904, %v950
    %vm971 = vcmp.eq.f32.partialorder %v904, %v953
    %vm972 = vcmp.eq.f32.partialorder %v904, %v956
    %vm973 = vcmp.eq.f32.partialorder %v904, %v959
    %vm974 = vcmp.eq.f32.partialorder %v904, %v962
    %vm975 = vcmp.eq.f32.partialorder %v904, %v965
    %vm976 = vcmp.eq.f32.partialorder %v904, %v968
    %v977 = vsel %vm969, -1e+30, %v369
    %v978 = vsel %vm970, -1e+30, %v445
    %v979 = vsel %vm971, -1e+30, %v521
    %v980 = vsel %vm972, -1e+30, %v597
    %v981 = vsel %vm973, -1e+30, %v673
    %v982 = vsel %vm974, -1e+30, %v749
    %v983 = vsel %vm975, -1e+30, %v825
    %v984 = vsel %vm976, -1e+30, %v901
    %v985 = vsel %vm297, %v977, -inf
    %986 = vmax.xlane.f32.xlu0 %v985
    %v987 = vpop.xlane.xlu0 %986
    %v988 = vsel %vm297, %v978, -inf
    %989 = vmax.xlane.f32.xlu0 %v988
    %v990 = vpop.xlane.xlu0 %989
    %v991 = vsel %vm297, %v979, -inf
    %992 = vmax.xlane.f32.xlu0 %v991
    %v993 = vpop.xlane.xlu0 %992
    %v994 = vsel %vm297, %v980, -inf
    %995 = vmax.xlane.f32.xlu0 %v994
    %v996 = vpop.xlane.xlu0 %995
    %v997 = vsel %vm297, %v981, -inf
    %998 = vmax.xlane.f32.xlu0 %v997
    %v999 = vpop.xlane.xlu0 %998
    %v1000 = vsel %vm297, %v982, -inf
    %1001 = vmax.xlane.f32.xlu0 %v1000
    %v1002 = vpop.xlane.xlu0 %1001
    %v1003 = vsel %vm297, %v983, -inf
    %1004 = vmax.xlane.f32.xlu0 %v1003
    %v1005 = vpop.xlane.xlu0 %1004
    %v1006 = vsel %vm297, %v984, -inf
    %1007 = vmax.xlane.f32.xlu0 %v1006
    %v1008 = vpop.xlane.xlu0 %1007
    %vm1009 = vcmp.eq.f32.partialorder %v977, %v987
    %vm1010 = vcmp.eq.f32.partialorder %v978, %v990
    %vm1011 = vcmp.eq.f32.partialorder %v979, %v993
    %vm1012 = vcmp.eq.f32.partialorder %v980, %v996
    %vm1013 = vcmp.eq.f32.partialorder %v981, %v999
    %vm1014 = vcmp.eq.f32.partialorder %v982, %v1002
    %vm1015 = vcmp.eq.f32.partialorder %v983, %v1005
    %vm1016 = vcmp.eq.f32.partialorder %v984, %v1008
    %v1017 = vsel %vm1009, %v904, 8.0
    %v1018 = vsel %vm1010, %v904, 8.0
    %v1019 = vsel %vm1011, %v904, 8.0
    %v1020 = vsel %vm1012, %v904, 8.0
    %v1021 = vsel %vm1013, %v904, 8.0
    %v1022 = vsel %vm1014, %v904, 8.0
    %v1023 = vsel %vm1015, %v904, 8.0
    %v1024 = vsel %vm1016, %v904, 8.0
    %v1025 = vsel %vm297, %v1017, inf
    %1026 = vmin.xlane.f32.xlu0 %v1025
    %v1027 = vpop.xlane.xlu0 %1026
    %v1028 = vsel %vm297, %v1018, inf
    %1029 = vmin.xlane.f32.xlu0 %v1028
    %v1030 = vpop.xlane.xlu0 %1029
    %v1031 = vsel %vm297, %v1019, inf
    %1032 = vmin.xlane.f32.xlu0 %v1031
    %v1033 = vpop.xlane.xlu0 %1032
    %v1034 = vsel %vm297, %v1020, inf
    %1035 = vmin.xlane.f32.xlu0 %v1034
    %v1036 = vpop.xlane.xlu0 %1035
    %v1037 = vsel %vm297, %v1021, inf
    %1038 = vmin.xlane.f32.xlu0 %v1037
    %v1039 = vpop.xlane.xlu0 %1038
    %v1040 = vsel %vm297, %v1022, inf
    %1041 = vmin.xlane.f32.xlu0 %v1040
    %v1042 = vpop.xlane.xlu0 %1041
    %v1043 = vsel %vm297, %v1023, inf
    %1044 = vmin.xlane.f32.xlu0 %v1043
    %v1045 = vpop.xlane.xlu0 %1044
    %v1046 = vsel %vm297, %v1024, inf
    %1047 = vmin.xlane.f32.xlu0 %v1046
    %v1048 = vpop.xlane.xlu0 %1047
    %vm1049 = vcmp.eq.f32.partialorder %v904, %v1027
    %vm1050 = vcmp.eq.f32.partialorder %v904, %v1030
    %vm1051 = vcmp.eq.f32.partialorder %v904, %v1033
    %vm1052 = vcmp.eq.f32.partialorder %v904, %v1036
    %vm1053 = vcmp.eq.f32.partialorder %v904, %v1039
    %vm1054 = vcmp.eq.f32.partialorder %v904, %v1042
    %vm1055 = vcmp.eq.f32.partialorder %v904, %v1045
    %vm1056 = vcmp.eq.f32.partialorder %v904, %v1048
    %vm1057 = vmor %vm969, %vm1049
    %vm1058 = vmor %vm970, %vm1050
    %vm1059 = vmor %vm971, %vm1051
    %vm1060 = vmor %vm972, %vm1052
    %vm1061 = vmor %vm973, %vm1053
    %vm1062 = vmor %vm974, %vm1054
    %vm1063 = vmor %vm975, %vm1055
    %vm1064 = vmor %vm976, %vm1056
    %v1065 = vsel %vm1049, -1e+30, %v977
    %v1066 = vsel %vm1050, -1e+30, %v978
    %v1067 = vsel %vm1051, -1e+30, %v979
    %v1068 = vsel %vm1052, -1e+30, %v980
    %v1069 = vsel %vm1053, -1e+30, %v981
    %v1070 = vsel %vm1054, -1e+30, %v982
    %v1071 = vsel %vm1055, -1e+30, %v983
    %v1072 = vsel %vm1056, -1e+30, %v984
    %v1073 = vsel %vm297, %v1065, -inf
    %1074 = vmax.xlane.f32.xlu0 %v1073
    %v1075 = vpop.xlane.xlu0 %1074
    %v1076 = vsel %vm297, %v1066, -inf
    %1077 = vmax.xlane.f32.xlu0 %v1076
    %v1078 = vpop.xlane.xlu0 %1077
    %v1079 = vsel %vm297, %v1067, -inf
    %1080 = vmax.xlane.f32.xlu0 %v1079
    %v1081 = vpop.xlane.xlu0 %1080
    %v1082 = vsel %vm297, %v1068, -inf
    %1083 = vmax.xlane.f32.xlu0 %v1082
    %v1084 = vpop.xlane.xlu0 %1083
    %v1085 = vsel %vm297, %v1069, -inf
    %1086 = vmax.xlane.f32.xlu0 %v1085
    %v1087 = vpop.xlane.xlu0 %1086
    %v1088 = vsel %vm297, %v1070, -inf
    %1089 = vmax.xlane.f32.xlu0 %v1088
    %v1090 = vpop.xlane.xlu0 %1089
    %v1091 = vsel %vm297, %v1071, -inf
    %1092 = vmax.xlane.f32.xlu0 %v1091
    %v1093 = vpop.xlane.xlu0 %1092
    %v1094 = vsel %vm297, %v1072, -inf
    %1095 = vmax.xlane.f32.xlu0 %v1094
    %v1096 = vpop.xlane.xlu0 %1095
    %vm1097 = vcmp.eq.f32.partialorder %v1065, %v1075
    %vm1098 = vcmp.eq.f32.partialorder %v1066, %v1078
    %vm1099 = vcmp.eq.f32.partialorder %v1067, %v1081
    %vm1100 = vcmp.eq.f32.partialorder %v1068, %v1084
    %vm1101 = vcmp.eq.f32.partialorder %v1069, %v1087
    %vm1102 = vcmp.eq.f32.partialorder %v1070, %v1090
    %vm1103 = vcmp.eq.f32.partialorder %v1071, %v1093
    %vm1104 = vcmp.eq.f32.partialorder %v1072, %v1096
    %v1105 = vsel %vm1097, %v904, 8.0
    %v1106 = vsel %vm1098, %v904, 8.0
    %v1107 = vsel %vm1099, %v904, 8.0
    %v1108 = vsel %vm1100, %v904, 8.0
    %v1109 = vsel %vm1101, %v904, 8.0
    %v1110 = vsel %vm1102, %v904, 8.0
    %v1111 = vsel %vm1103, %v904, 8.0
    %v1112 = vsel %vm1104, %v904, 8.0
    %v1113 = vsel %vm297, %v1105, inf
    %1114 = vmin.xlane.f32.xlu0 %v1113
    %v1115 = vpop.xlane.xlu0 %1114
    %v1116 = vsel %vm297, %v1106, inf
    %1117 = vmin.xlane.f32.xlu0 %v1116
    %v1118 = vpop.xlane.xlu0 %1117
    %v1119 = vsel %vm297, %v1107, inf
    %1120 = vmin.xlane.f32.xlu0 %v1119
    %v1121 = vpop.xlane.xlu0 %1120
    %v1122 = vsel %vm297, %v1108, inf
    %1123 = vmin.xlane.f32.xlu0 %v1122
    %v1124 = vpop.xlane.xlu0 %1123
    %v1125 = vsel %vm297, %v1109, inf
    %1126 = vmin.xlane.f32.xlu0 %v1125
    %v1127 = vpop.xlane.xlu0 %1126
    %v1128 = vsel %vm297, %v1110, inf
    %1129 = vmin.xlane.f32.xlu0 %v1128
    %v1130 = vpop.xlane.xlu0 %1129
    %v1131 = vsel %vm297, %v1111, inf
    %1132 = vmin.xlane.f32.xlu0 %v1131
    %v1133 = vpop.xlane.xlu0 %1132
    %v1134 = vsel %vm297, %v1112, inf
    %1135 = vmin.xlane.f32.xlu0 %v1134
    %v1136 = vpop.xlane.xlu0 %1135
    %vm1137 = vcmp.eq.f32.partialorder %v904, %v1115
    %vm1138 = vcmp.eq.f32.partialorder %v904, %v1118
    %vm1139 = vcmp.eq.f32.partialorder %v904, %v1121
    %vm1140 = vcmp.eq.f32.partialorder %v904, %v1124
    %vm1141 = vcmp.eq.f32.partialorder %v904, %v1127
    %vm1142 = vcmp.eq.f32.partialorder %v904, %v1130
    %vm1143 = vcmp.eq.f32.partialorder %v904, %v1133
    %vm1144 = vcmp.eq.f32.partialorder %v904, %v1136
    %vm1145 = vmor %vm1057, %vm1137
    %vm1146 = vmor %vm1058, %vm1138
    %vm1147 = vmor %vm1059, %vm1139
    %vm1148 = vmor %vm1060, %vm1140
    %vm1149 = vmor %vm1061, %vm1141
    %vm1150 = vmor %vm1062, %vm1142
    %vm1151 = vmor %vm1063, %vm1143
    %vm1152 = vmor %vm1064, %vm1144
    %v1153 = vsel %vm1137, -1e+30, %v1065
    %v1154 = vsel %vm1138, -1e+30, %v1066
    %v1155 = vsel %vm1139, -1e+30, %v1067
    %v1156 = vsel %vm1140, -1e+30, %v1068
    %v1157 = vsel %vm1141, -1e+30, %v1069
    %v1158 = vsel %vm1142, -1e+30, %v1070
    %v1159 = vsel %vm1143, -1e+30, %v1071
    %v1160 = vsel %vm1144, -1e+30, %v1072
    %v1161 = vsel %vm297, %v1153, -inf
    %1162 = vmax.xlane.f32.xlu0 %v1161
    %v1163 = vpop.xlane.xlu0 %1162
    %v1164 = vsel %vm297, %v1154, -inf
    %1165 = vmax.xlane.f32.xlu0 %v1164
    %v1166 = vpop.xlane.xlu0 %1165
    %v1167 = vsel %vm297, %v1155, -inf
    %1168 = vmax.xlane.f32.xlu0 %v1167
    %v1169 = vpop.xlane.xlu0 %1168
    %v1170 = vsel %vm297, %v1156, -inf
    %1171 = vmax.xlane.f32.xlu0 %v1170
    %v1172 = vpop.xlane.xlu0 %1171
    %v1173 = vsel %vm297, %v1157, -inf
    %1174 = vmax.xlane.f32.xlu0 %v1173
    %v1175 = vpop.xlane.xlu0 %1174
    %v1176 = vsel %vm297, %v1158, -inf
    %1177 = vmax.xlane.f32.xlu0 %v1176
    %v1178 = vpop.xlane.xlu0 %1177
    %v1179 = vsel %vm297, %v1159, -inf
    %1180 = vmax.xlane.f32.xlu0 %v1179
    %v1181 = vpop.xlane.xlu0 %1180
    %v1182 = vsel %vm297, %v1160, -inf
    %1183 = vmax.xlane.f32.xlu0 %v1182
    %v1184 = vpop.xlane.xlu0 %1183
    %vm1185 = vcmp.eq.f32.partialorder %v1153, %v1163
    %vm1186 = vcmp.eq.f32.partialorder %v1154, %v1166
    %vm1187 = vcmp.eq.f32.partialorder %v1155, %v1169
    %vm1188 = vcmp.eq.f32.partialorder %v1156, %v1172
    %vm1189 = vcmp.eq.f32.partialorder %v1157, %v1175
    %vm1190 = vcmp.eq.f32.partialorder %v1158, %v1178
    %vm1191 = vcmp.eq.f32.partialorder %v1159, %v1181
    %vm1192 = vcmp.eq.f32.partialorder %v1160, %v1184
    %v1193 = vsel %vm1185, %v904, 8.0
    %v1194 = vsel %vm1186, %v904, 8.0
    %v1195 = vsel %vm1187, %v904, 8.0
    %v1196 = vsel %vm1188, %v904, 8.0
    %v1197 = vsel %vm1189, %v904, 8.0
    %v1198 = vsel %vm1190, %v904, 8.0
    %v1199 = vsel %vm1191, %v904, 8.0
    %v1200 = vsel %vm1192, %v904, 8.0
    %v1201 = vsel %vm297, %v1193, inf
    %1202 = vmin.xlane.f32.xlu0 %v1201
    %v1203 = vpop.xlane.xlu0 %1202
    %v1204 = vsel %vm297, %v1194, inf
    %1205 = vmin.xlane.f32.xlu0 %v1204
    %v1206 = vpop.xlane.xlu0 %1205
    %v1207 = vsel %vm297, %v1195, inf
    %1208 = vmin.xlane.f32.xlu0 %v1207
    %v1209 = vpop.xlane.xlu0 %1208
    %v1210 = vsel %vm297, %v1196, inf
    %1211 = vmin.xlane.f32.xlu0 %v1210
    %v1212 = vpop.xlane.xlu0 %1211
    %v1213 = vsel %vm297, %v1197, inf
    %1214 = vmin.xlane.f32.xlu0 %v1213
    %v1215 = vpop.xlane.xlu0 %1214
    %v1216 = vsel %vm297, %v1198, inf
    %1217 = vmin.xlane.f32.xlu0 %v1216
    %v1218 = vpop.xlane.xlu0 %1217
    %v1219 = vsel %vm297, %v1199, inf
    %1220 = vmin.xlane.f32.xlu0 %v1219
    %v1221 = vpop.xlane.xlu0 %1220
    %v1222 = vsel %vm297, %v1200, inf
    %1223 = vmin.xlane.f32.xlu0 %v1222
    %v1224 = vpop.xlane.xlu0 %1223
    %vm1225 = vcmp.eq.f32.partialorder %v904, %v1203
    %vm1226 = vcmp.eq.f32.partialorder %v904, %v1206
    %vm1227 = vcmp.eq.f32.partialorder %v904, %v1209
    %vm1228 = vcmp.eq.f32.partialorder %v904, %v1212
    %vm1229 = vcmp.eq.f32.partialorder %v904, %v1215
    %vm1230 = vcmp.eq.f32.partialorder %v904, %v1218
    %vm1231 = vcmp.eq.f32.partialorder %v904, %v1221
    %vm1232 = vcmp.eq.f32.partialorder %v904, %v1224
    %vm1233 = vmor %vm1145, %vm1225
    %vm1234 = vmor %vm1146, %vm1226
    %vm1235 = vmor %vm1147, %vm1227
    %vm1236 = vmor %vm1148, %vm1228
    %vm1237 = vmor %vm1149, %vm1229
    %vm1238 = vmor %vm1150, %vm1230
    %vm1239 = vmor %vm1151, %vm1231
    %vm1240 = vmor %vm1152, %vm1232
    %v1241 = vsub.f32 %v369, %v907
    %v1242 = vsub.f32 %v445, %v910
    %v1243 = vsub.f32 %v521, %v913
    %v1244 = vsub.f32 %v597, %v916
    %v1245 = vsub.f32 %v673, %v919
    %v1246 = vsub.f32 %v749, %v922
    %v1247 = vsub.f32 %v825, %v925
    %v1248 = vsub.f32 %v901, %v928
    %v1249 = vmul.f32 %v1241, 1.442695
    %v1250 = vpow.pop %v1249
    %v1251 = vmul.f32 %v1242, 1.442695
    %v1252 = vpow.pop %v1251
    %v1253 = vmul.f32 %v1243, 1.442695
    %v1254 = vpow.pop %v1253
    %v1255 = vmul.f32 %v1244, 1.442695
    %v1256 = vpow.pop %v1255
    %v1257 = vmul.f32 %v1245, 1.442695
    %v1258 = vpow.pop %v1257
    %v1259 = vmul.f32 %v1246, 1.442695
    %v1260 = vpow.pop %v1259
    %v1261 = vmul.f32 %v1247, 1.442695
    %v1262 = vpow.pop %v1261
    %v1263 = vmul.f32 %v1248, 1.442695
    %v1264 = vpow.pop %v1263
    %v1265 = vsel %vm1233, %v1250, 0.0
    %v1266 = vsel %vm1234, %v1252, 0.0
    %v1267 = vsel %vm1235, %v1254, 0.0
    %v1268 = vsel %vm1236, %v1256, 0.0
    %v1269 = vsel %vm1237, %v1258, 0.0
    %v1270 = vsel %vm1238, %v1260, 0.0
    %v1271 = vsel %vm1239, %v1262, 0.0
    %v1272 = vsel %vm1240, %v1264, 0.0
    %v1273 = vsel %vm297, %v1265, 0.0
    %1274 = vadd.xlane.f32.xlu0 %v1273
    %v1275 = vpop.xlane.xlu0 %1274
    %v1276 = vsel %vm297, %v1266, 0.0
    %1277 = vadd.xlane.f32.xlu0 %v1276
    %v1278 = vpop.xlane.xlu0 %1277
    %v1279 = vsel %vm297, %v1267, 0.0
    %1280 = vadd.xlane.f32.xlu0 %v1279
    %v1281 = vpop.xlane.xlu0 %1280
    %v1282 = vsel %vm297, %v1268, 0.0
    %1283 = vadd.xlane.f32.xlu0 %v1282
    %v1284 = vpop.xlane.xlu0 %1283
    %v1285 = vsel %vm297, %v1269, 0.0
    %1286 = vadd.xlane.f32.xlu0 %v1285
    %v1287 = vpop.xlane.xlu0 %1286
    %v1288 = vsel %vm297, %v1270, 0.0
    %1289 = vadd.xlane.f32.xlu0 %v1288
    %v1290 = vpop.xlane.xlu0 %1289
    %v1291 = vsel %vm297, %v1271, 0.0
    %1292 = vadd.xlane.f32.xlu0 %v1291
    %v1293 = vpop.xlane.xlu0 %1292
    %v1294 = vsel %vm297, %v1272, 0.0
    %1295 = vadd.xlane.f32.xlu0 %v1294
    %v1296 = vpop.xlane.xlu0 %1295
    %v1297 = vrcp.pop %v1275
    %v1298 = vmul.f32 %v1265, %v1297
    %v1299 = vrcp.pop %v1278
    %v1300 = vmul.f32 %v1266, %v1299
    %v1301 = vrcp.pop %v1281
    %v1302 = vmul.f32 %v1267, %v1301
    %v1303 = vrcp.pop %v1284
    %v1304 = vmul.f32 %v1268, %v1303
    %v1305 = vrcp.pop %v1287
    %v1306 = vmul.f32 %v1269, %v1305
    %v1307 = vrcp.pop %v1290
    %v1308 = vmul.f32 %v1270, %v1307
    %v1309 = vrcp.pop %v1293
    %v1310 = vmul.f32 %v1271, %v1309
    %v1311 = vrcp.pop %v1296
    %v1312 = vmul.f32 %v1272, %v1311
    %1313 = vrot.lane.b32.xlu0 %v273, 64
    %v1314 = vpop.permute.xlu0 %1313
    %v1317 = vsel %vm297, %v1298, 0
    %1319 = vmatprep.subr.mxu0 0.0
    %1320 = vmatpush1.msra.mxu0 0.0
    %1321 = vmatprep.subr.mxu0 0.0
    %1322 = vmatpush1.msra.mxu0 0.0
    %1323 = vmatprep.subr.mxu0 0.0
    %1324 = vmatpush1.msra.mxu0 0.0
    %1325 = vmatprep.subr.mxu0 0.0
    %1326 = vmatpush1.msra.mxu0 0.0
    %1327 = vmatprep.subr.mxu0 0.0
    %1328 = vmatpush1.msra.mxu0 0.0
    %1329 = vmatprep.subr.mxu0 0.0
    %1330 = vmatpush1.msra.mxu0 0.0
    %1331 = vmatprep.subr.mxu0 0.0
    %1332 = vmatpush1.msra.mxu0 0.0
    %1333 = vmatprep.subr.mxu0 0.0
    %1334 = vmatpush1.msra.mxu0 0.0
    %1335 = vmatprep.subr.mxu0 0.0
    %1336 = vmatpush1.msra.mxu0 0.0
    %1337 = vmatprep.subr.mxu0 0.0
    %1338 = vmatpush1.msra.mxu0 0.0
    %1339 = vmatprep.subr.mxu0 0.0
    %1340 = vmatpush1.msra.mxu0 0.0
    %1341 = vmatprep.subr.mxu0 0.0
    %1342 = vmatpush1.msra.mxu0 0.0
    %1343 = vmatprep.subr.mxu0 0.0
    %1344 = vmatpush1.msra.mxu0 0.0
    %1345 = vmatprep.subr.mxu0 0.0
    %1346 = vmatpush1.msra.mxu0 0.0
    %1347 = vmatprep.subr.mxu0 0.0
    %1348 = vmatpush1.msra.mxu0 0.0
    %1349 = vmatprep.subr.mxu0 0.0
    %1350 = vmatpush1.msra.mxu0 %v1314
    %1351 = vmatprep.subr.mxu0 0.0
    %1352 = vmatpush2.msra.mxu0 0.0
    %1353 = vmatprep.subr.mxu0 0.0
    %1354 = vmatpush2.msra.mxu0 0.0
    %1355 = vmatprep.subr.mxu0 0.0
    %1356 = vmatpush2.msra.mxu0 0.0
    %1357 = vmatprep.subr.mxu0 0.0
    %1358 = vmatpush2.msra.mxu0 0.0
    %1359 = vmatprep.subr.mxu0 0.0
    %1360 = vmatpush2.msra.mxu0 0.0
    %1361 = vmatprep.subr.mxu0 0.0
    %1362 = vmatpush2.msra.mxu0 0.0
    %1363 = vmatprep.subr.mxu0 0.0
    %1364 = vmatpush2.msra.mxu0 0.0
    %1365 = vmatprep.subr.mxu0 0.0
    %1366 = vmatpush2.msra.mxu0 0.0
    %1367 = vmatprep.subr.mxu0 0.0
    %1368 = vmatpush2.msra.mxu0 0.0
    %1369 = vmatprep.subr.mxu0 0.0
    %1370 = vmatpush2.msra.mxu0 0.0
    %1371 = vmatprep.subr.mxu0 0.0
    %1372 = vmatpush2.msra.mxu0 0.0
    %1373 = vmatprep.subr.mxu0 0.0
    %1374 = vmatpush2.msra.mxu0 0.0
    %1375 = vmatprep.subr.mxu0 0.0
    %1376 = vmatpush2.msra.mxu0 0.0
    %1377 = vmatprep.subr.mxu0 0.0
    %1378 = vmatpush2.msra.mxu0 0.0
    %1379 = vmatprep.subr.mxu0 0.0
    %1380 = vmatpush2.msra.mxu0 0.0
    %1381 = vmatprep.subr.mxu0 0.0
    %1382 = vmatpush2.msra.mxu0 0.0
    %1383 = vmatprep.mubr.f32.mxu0 0.0
    %1384 = vmatmul.mubr.f32.gmra.mxu0 %v1317
    %v1385 = vpop.f32.mrf.mxu0
    %v1386 = vadd.f32 0.0, %v1385
    %v1387 = vpop.f32.mrf.mxu0
    %1388 = vdwg.mxu0
    %1389 = vrot.lane.b32.xlu0 %v278, 64
    %v1390 = vpop.permute.xlu0 %1389
    %v1393 = vsel %vm297, %v1300, 0
    %1395 = vmatprep.subr.mxu0 0.0
    %1396 = vmatpush1.msra.mxu0 0.0
    %1397 = vmatprep.subr.mxu0 0.0
    %1398 = vmatpush1.msra.mxu0 0.0
    %1399 = vmatprep.subr.mxu0 0.0
    %1400 = vmatpush1.msra.mxu0 0.0
    %1401 = vmatprep.subr.mxu0 0.0
    %1402 = vmatpush1.msra.mxu0 0.0
    %1403 = vmatprep.subr.mxu0 0.0
    %1404 = vmatpush1.msra.mxu0 0.0
    %1405 = vmatprep.subr.mxu0 0.0
    %1406 = vmatpush1.msra.mxu0 0.0
    %1407 = vmatprep.subr.mxu0 0.0
    %1408 = vmatpush1.msra.mxu0 0.0
    %1409 = vmatprep.subr.mxu0 0.0
    %1410 = vmatpush1.msra.mxu0 0.0
    %1411 = vmatprep.subr.mxu0 0.0
    %1412 = vmatpush1.msra.mxu0 0.0
    %1413 = vmatprep.subr.mxu0 0.0
    %1414 = vmatpush1.msra.mxu0 0.0
    %1415 = vmatprep.subr.mxu0 0.0
    %1416 = vmatpush1.msra.mxu0 0.0
    %1417 = vmatprep.subr.mxu0 0.0
    %1418 = vmatpush1.msra.mxu0 0.0
    %1419 = vmatprep.subr.mxu0 0.0
    %1420 = vmatpush1.msra.mxu0 0.0
    %1421 = vmatprep.subr.mxu0 0.0
    %1422 = vmatpush1.msra.mxu0 0.0
    %1423 = vmatprep.subr.mxu0 0.0
    %1424 = vmatpush1.msra.mxu0 0.0
    %1425 = vmatprep.subr.mxu0 0.0
    %1426 = vmatpush1.msra.mxu0 %v1390
    %1427 = vmatprep.subr.mxu0 0.0
    %1428 = vmatpush2.msra.mxu0 0.0
    %1429 = vmatprep.subr.mxu0 0.0
    %1430 = vmatpush2.msra.mxu0 0.0
    %1431 = vmatprep.subr.mxu0 0.0
    %1432 = vmatpush2.msra.mxu0 0.0
    %1433 = vmatprep.subr.mxu0 0.0
    %1434 = vmatpush2.msra.mxu0 0.0
    %1435 = vmatprep.subr.mxu0 0.0
    %1436 = vmatpush2.msra.mxu0 0.0
    %1437 = vmatprep.subr.mxu0 0.0
    %1438 = vmatpush2.msra.mxu0 0.0
    %1439 = vmatprep.subr.mxu0 0.0
    %1440 = vmatpush2.msra.mxu0 0.0
    %1441 = vmatprep.subr.mxu0 0.0
    %1442 = vmatpush2.msra.mxu0 0.0
    %1443 = vmatprep.subr.mxu0 0.0
    %1444 = vmatpush2.msra.mxu0 0.0
    %1445 = vmatprep.subr.mxu0 0.0
    %1446 = vmatpush2.msra.mxu0 0.0
    %1447 = vmatprep.subr.mxu0 0.0
    %1448 = vmatpush2.msra.mxu0 0.0
    %1449 = vmatprep.subr.mxu0 0.0
    %1450 = vmatpush2.msra.mxu0 0.0
    %1451 = vmatprep.subr.mxu0 0.0
    %1452 = vmatpush2.msra.mxu0 0.0
    %1453 = vmatprep.subr.mxu0 0.0
    %1454 = vmatpush2.msra.mxu0 0.0
    %1455 = vmatprep.subr.mxu0 0.0
    %1456 = vmatpush2.msra.mxu0 0.0
    %1457 = vmatprep.subr.mxu0 0.0
    %1458 = vmatpush2.msra.mxu0 0.0
    %1459 = vmatprep.mubr.f32.mxu0 0.0
    %1460 = vmatmul.mubr.f32.gmra.mxu0 %v1393
    %v1461 = vpop.f32.mrf.mxu0
    %v1462 = vadd.f32 0.0, %v1461
    %v1463 = vpop.f32.mrf.mxu0
    %1464 = vdwg.mxu0
    %1465 = vrot.lane.b32.xlu0 %v284, 64
    %v1466 = vpop.permute.xlu0 %1465
    %v1469 = vsel %vm297, %v1302, 0
    %1471 = vmatprep.subr.mxu0 0.0
    %1472 = vmatpush1.msra.mxu0 0.0
    %1473 = vmatprep.subr.mxu0 0.0
    %1474 = vmatpush1.msra.mxu0 0.0
    %1475 = vmatprep.subr.mxu0 0.0
    %1476 = vmatpush1.msra.mxu0 0.0
    %1477 = vmatprep.subr.mxu0 0.0
    %1478 = vmatpush1.msra.mxu0 0.0
    %1479 = vmatprep.subr.mxu0 0.0
    %1480 = vmatpush1.msra.mxu0 0.0
    %1481 = vmatprep.subr.mxu0 0.0
    %1482 = vmatpush1.msra.mxu0 0.0
    %1483 = vmatprep.subr.mxu0 0.0
    %1484 = vmatpush1.msra.mxu0 0.0
    %1485 = vmatprep.subr.mxu0 0.0
    %1486 = vmatpush1.msra.mxu0 0.0
    %1487 = vmatprep.subr.mxu0 0.0
    %1488 = vmatpush1.msra.mxu0 0.0
    %1489 = vmatprep.subr.mxu0 0.0
    %1490 = vmatpush1.msra.mxu0 0.0
    %1491 = vmatprep.subr.mxu0 0.0
    %1492 = vmatpush1.msra.mxu0 0.0
    %1493 = vmatprep.subr.mxu0 0.0
    %1494 = vmatpush1.msra.mxu0 0.0
    %1495 = vmatprep.subr.mxu0 0.0
    %1496 = vmatpush1.msra.mxu0 0.0
    %1497 = vmatprep.subr.mxu0 0.0
    %1498 = vmatpush1.msra.mxu0 0.0
    %1499 = vmatprep.subr.mxu0 0.0
    %1500 = vmatpush1.msra.mxu0 0.0
    %1501 = vmatprep.subr.mxu0 0.0
    %1502 = vmatpush1.msra.mxu0 %v1466
    %1503 = vmatprep.subr.mxu0 0.0
    %1504 = vmatpush2.msra.mxu0 0.0
    %1505 = vmatprep.subr.mxu0 0.0
    %1506 = vmatpush2.msra.mxu0 0.0
    %1507 = vmatprep.subr.mxu0 0.0
    %1508 = vmatpush2.msra.mxu0 0.0
    %1509 = vmatprep.subr.mxu0 0.0
    %1510 = vmatpush2.msra.mxu0 0.0
    %1511 = vmatprep.subr.mxu0 0.0
    %1512 = vmatpush2.msra.mxu0 0.0
    %1513 = vmatprep.subr.mxu0 0.0
    %1514 = vmatpush2.msra.mxu0 0.0
    %1515 = vmatprep.subr.mxu0 0.0
    %1516 = vmatpush2.msra.mxu0 0.0
    %1517 = vmatprep.subr.mxu0 0.0
    %1518 = vmatpush2.msra.mxu0 0.0
    %1519 = vmatprep.subr.mxu0 0.0
    %1520 = vmatpush2.msra.mxu0 0.0
    %1521 = vmatprep.subr.mxu0 0.0
    %1522 = vmatpush2.msra.mxu0 0.0
    %1523 = vmatprep.subr.mxu0 0.0
    %1524 = vmatpush2.msra.mxu0 0.0
    %1525 = vmatprep.subr.mxu0 0.0
    %1526 = vmatpush2.msra.mxu0 0.0
    %1527 = vmatprep.subr.mxu0 0.0
    %1528 = vmatpush2.msra.mxu0 0.0
    %1529 = vmatprep.subr.mxu0 0.0
    %1530 = vmatpush2.msra.mxu0 0.0
    %1531 = vmatprep.subr.mxu0 0.0
    %1532 = vmatpush2.msra.mxu0 0.0
    %1533 = vmatprep.subr.mxu0 0.0
    %1534 = vmatpush2.msra.mxu0 0.0
    %1535 = vmatprep.mubr.f32.mxu0 0.0
    %1536 = vmatmul.mubr.f32.gmra.mxu0 %v1469
    %v1537 = vpop.f32.mrf.mxu0
    %v1538 = vadd.f32 0.0, %v1537
    %v1539 = vpop.f32.mrf.mxu0
    %1540 = vdwg.mxu0
    %1541 = vrot.lane.b32.xlu0 %v286, 64
    %v1542 = vpop.permute.xlu0 %1541
    %v1545 = vsel %vm297, %v1304, 0
    %1547 = vmatprep.subr.mxu0 0.0
    %1548 = vmatpush1.msra.mxu0 0.0
    %1549 = vmatprep.subr.mxu0 0.0
    %1550 = vmatpush1.msra.mxu0 0.0
    %1551 = vmatprep.subr.mxu0 0.0
    %1552 = vmatpush1.msra.mxu0 0.0
    %1553 = vmatprep.subr.mxu0 0.0
    %1554 = vmatpush1.msra.mxu0 0.0
    %1555 = vmatprep.subr.mxu0 0.0
    %1556 = vmatpush1.msra.mxu0 0.0
    %1557 = vmatprep.subr.mxu0 0.0
    %1558 = vmatpush1.msra.mxu0 0.0
    %1559 = vmatprep.subr.mxu0 0.0
    %1560 = vmatpush1.msra.mxu0 0.0
    %1561 = vmatprep.subr.mxu0 0.0
    %1562 = vmatpush1.msra.mxu0 0.0
    %1563 = vmatprep.subr.mxu0 0.0
    %1564 = vmatpush1.msra.mxu0 0.0
    %1565 = vmatprep.subr.mxu0 0.0
    %1566 = vmatpush1.msra.mxu0 0.0
    %1567 = vmatprep.subr.mxu0 0.0
    %1568 = vmatpush1.msra.mxu0 0.0
    %1569 = vmatprep.subr.mxu0 0.0
    %1570 = vmatpush1.msra.mxu0 0.0
    %1571 = vmatprep.subr.mxu0 0.0
    %1572 = vmatpush1.msra.mxu0 0.0
    %1573 = vmatprep.subr.mxu0 0.0
    %1574 = vmatpush1.msra.mxu0 0.0
    %1575 = vmatprep.subr.mxu0 0.0
    %1576 = vmatpush1.msra.mxu0 0.0
    %1577 = vmatprep.subr.mxu0 0.0
    %1578 = vmatpush1.msra.mxu0 %v1542
    %1579 = vmatprep.subr.mxu0 0.0
    %1580 = vmatpush2.msra.mxu0 0.0
    %1581 = vmatprep.subr.mxu0 0.0
    %1582 = vmatpush2.msra.mxu0 0.0
    %1583 = vmatprep.subr.mxu0 0.0
    %1584 = vmatpush2.msra.mxu0 0.0
    %1585 = vmatprep.subr.mxu0 0.0
    %1586 = vmatpush2.msra.mxu0 0.0
    %1587 = vmatprep.subr.mxu0 0.0
    %1588 = vmatpush2.msra.mxu0 0.0
    %1589 = vmatprep.subr.mxu0 0.0
    %1590 = vmatpush2.msra.mxu0 0.0
    %1591 = vmatprep.subr.mxu0 0.0
    %1592 = vmatpush2.msra.mxu0 0.0
    %1593 = vmatprep.subr.mxu0 0.0
    %1594 = vmatpush2.msra.mxu0 0.0
    %1595 = vmatprep.subr.mxu0 0.0
    %1596 = vmatpush2.msra.mxu0 0.0
    %1597 = vmatprep.subr.mxu0 0.0
    %1598 = vmatpush2.msra.mxu0 0.0
    %1599 = vmatprep.subr.mxu0 0.0
    %1600 = vmatpush2.msra.mxu0 0.0
    %1601 = vmatprep.subr.mxu0 0.0
    %1602 = vmatpush2.msra.mxu0 0.0
    %1603 = vmatprep.subr.mxu0 0.0
    %1604 = vmatpush2.msra.mxu0 0.0
    %1605 = vmatprep.subr.mxu0 0.0
    %1606 = vmatpush2.msra.mxu0 0.0
    %1607 = vmatprep.subr.mxu0 0.0
    %1608 = vmatpush2.msra.mxu0 0.0
    %1609 = vmatprep.subr.mxu0 0.0
    %1610 = vmatpush2.msra.mxu0 0.0
    %1611 = vmatprep.mubr.f32.mxu0 0.0
    %1612 = vmatmul.mubr.f32.gmra.mxu0 %v1545
    %v1613 = vpop.f32.mrf.mxu0
    %v1614 = vadd.f32 0.0, %v1613
    %v1615 = vpop.f32.mrf.mxu0
    %1616 = vdwg.mxu0
    %1617 = vrot.lane.b32.xlu0 %v288, 64
    %v1618 = vpop.permute.xlu0 %1617
    %v1621 = vsel %vm297, %v1306, 0
    %1623 = vmatprep.subr.mxu0 0.0
    %1624 = vmatpush1.msra.mxu0 0.0
    %1625 = vmatprep.subr.mxu0 0.0
    %1626 = vmatpush1.msra.mxu0 0.0
    %1627 = vmatprep.subr.mxu0 0.0
    %1628 = vmatpush1.msra.mxu0 0.0
    %1629 = vmatprep.subr.mxu0 0.0
    %1630 = vmatpush1.msra.mxu0 0.0
    %1631 = vmatprep.subr.mxu0 0.0
    %1632 = vmatpush1.msra.mxu0 0.0
    %1633 = vmatprep.subr.mxu0 0.0
    %1634 = vmatpush1.msra.mxu0 0.0
    %1635 = vmatprep.subr.mxu0 0.0
    %1636 = vmatpush1.msra.mxu0 0.0
    %1637 = vmatprep.subr.mxu0 0.0
    %1638 = vmatpush1.msra.mxu0 0.0
    %1639 = vmatprep.subr.mxu0 0.0
    %1640 = vmatpush1.msra.mxu0 0.0
    %1641 = vmatprep.subr.mxu0 0.0
    %1642 = vmatpush1.msra.mxu0 0.0
    %1643 = vmatprep.subr.mxu0 0.0
    %1644 = vmatpush1.msra.mxu0 0.0
    %1645 = vmatprep.subr.mxu0 0.0
    %1646 = vmatpush1.msra.mxu0 0.0
    %1647 = vmatprep.subr.mxu0 0.0
    %1648 = vmatpush1.msra.mxu0 0.0
    %1649 = vmatprep.subr.mxu0 0.0
    %1650 = vmatpush1.msra.mxu0 0.0
    %1651 = vmatprep.subr.mxu0 0.0
    %1652 = vmatpush1.msra.mxu0 0.0
    %1653 = vmatprep.subr.mxu0 0.0
    %1654 = vmatpush1.msra.mxu0 %v1618
    %1655 = vmatprep.subr.mxu0 0.0
    %1656 = vmatpush2.msra.mxu0 0.0
    %1657 = vmatprep.subr.mxu0 0.0
    %1658 = vmatpush2.msra.mxu0 0.0
    %1659 = vmatprep.subr.mxu0 0.0
    %1660 = vmatpush2.msra.mxu0 0.0
    %1661 = vmatprep.subr.mxu0 0.0
    %1662 = vmatpush2.msra.mxu0 0.0
    %1663 = vmatprep.subr.mxu0 0.0
    %1664 = vmatpush2.msra.mxu0 0.0
    %1665 = vmatprep.subr.mxu0 0.0
    %1666 = vmatpush2.msra.mxu0 0.0
    %1667 = vmatprep.subr.mxu0 0.0
    %1668 = vmatpush2.msra.mxu0 0.0
    %1669 = vmatprep.subr.mxu0 0.0
    %1670 = vmatpush2.msra.mxu0 0.0
    %1671 = vmatprep.subr.mxu0 0.0
    %1672 = vmatpush2.msra.mxu0 0.0
    %1673 = vmatprep.subr.mxu0 0.0
    %1674 = vmatpush2.msra.mxu0 0.0
    %1675 = vmatprep.subr.mxu0 0.0
    %1676 = vmatpush2.msra.mxu0 0.0
    %1677 = vmatprep.subr.mxu0 0.0
    %1678 = vmatpush2.msra.mxu0 0.0
    %1679 = vmatprep.subr.mxu0 0.0
    %1680 = vmatpush2.msra.mxu0 0.0
    %1681 = vmatprep.subr.mxu0 0.0
    %1682 = vmatpush2.msra.mxu0 0.0
    %1683 = vmatprep.subr.mxu0 0.0
    %1684 = vmatpush2.msra.mxu0 0.0
    %1685 = vmatprep.subr.mxu0 0.0
    %1686 = vmatpush2.msra.mxu0 0.0
    %1687 = vmatprep.mubr.f32.mxu0 0.0
    %1688 = vmatmul.mubr.f32.gmra.mxu0 %v1621
    %v1689 = vpop.f32.mrf.mxu0
    %v1690 = vadd.f32 0.0, %v1689
    %v1691 = vpop.f32.mrf.mxu0
    %1692 = vdwg.mxu0
    %1693 = vrot.lane.b32.xlu0 %v290, 64
    %v1694 = vpop.permute.xlu0 %1693
    %v1697 = vsel %vm297, %v1308, 0
    %1699 = vmatprep.subr.mxu0 0.0
    %1700 = vmatpush1.msra.mxu0 0.0
    %1701 = vmatprep.subr.mxu0 0.0
    %1702 = vmatpush1.msra.mxu0 0.0
    %1703 = vmatprep.subr.mxu0 0.0
    %1704 = vmatpush1.msra.mxu0 0.0
    %1705 = vmatprep.subr.mxu0 0.0
    %1706 = vmatpush1.msra.mxu0 0.0
    %1707 = vmatprep.subr.mxu0 0.0
    %1708 = vmatpush1.msra.mxu0 0.0
    %1709 = vmatprep.subr.mxu0 0.0
    %1710 = vmatpush1.msra.mxu0 0.0
    %1711 = vmatprep.subr.mxu0 0.0
    %1712 = vmatpush1.msra.mxu0 0.0
    %1713 = vmatprep.subr.mxu0 0.0
    %1714 = vmatpush1.msra.mxu0 0.0
    %1715 = vmatprep.subr.mxu0 0.0
    %1716 = vmatpush1.msra.mxu0 0.0
    %1717 = vmatprep.subr.mxu0 0.0
    %1718 = vmatpush1.msra.mxu0 0.0
    %1719 = vmatprep.subr.mxu0 0.0
    %1720 = vmatpush1.msra.mxu0 0.0
    %1721 = vmatprep.subr.mxu0 0.0
    %1722 = vmatpush1.msra.mxu0 0.0
    %1723 = vmatprep.subr.mxu0 0.0
    %1724 = vmatpush1.msra.mxu0 0.0
    %1725 = vmatprep.subr.mxu0 0.0
    %1726 = vmatpush1.msra.mxu0 0.0
    %1727 = vmatprep.subr.mxu0 0.0
    %1728 = vmatpush1.msra.mxu0 0.0
    %1729 = vmatprep.subr.mxu0 0.0
    %1730 = vmatpush1.msra.mxu0 %v1694
    %1731 = vmatprep.subr.mxu0 0.0
    %1732 = vmatpush2.msra.mxu0 0.0
    %1733 = vmatprep.subr.mxu0 0.0
    %1734 = vmatpush2.msra.mxu0 0.0
    %1735 = vmatprep.subr.mxu0 0.0
    %1736 = vmatpush2.msra.mxu0 0.0
    %1737 = vmatprep.subr.mxu0 0.0
    %1738 = vmatpush2.msra.mxu0 0.0
    %1739 = vmatprep.subr.mxu0 0.0
    %1740 = vmatpush2.msra.mxu0 0.0
    %1741 = vmatprep.subr.mxu0 0.0
    %1742 = vmatpush2.msra.mxu0 0.0
    %1743 = vmatprep.subr.mxu0 0.0
    %1744 = vmatpush2.msra.mxu0 0.0
    %1745 = vmatprep.subr.mxu0 0.0
    %1746 = vmatpush2.msra.mxu0 0.0
    %1747 = vmatprep.subr.mxu0 0.0
    %1748 = vmatpush2.msra.mxu0 0.0
    %1749 = vmatprep.subr.mxu0 0.0
    %1750 = vmatpush2.msra.mxu0 0.0
    %1751 = vmatprep.subr.mxu0 0.0
    %1752 = vmatpush2.msra.mxu0 0.0
    %1753 = vmatprep.subr.mxu0 0.0
    %1754 = vmatpush2.msra.mxu0 0.0
    %1755 = vmatprep.subr.mxu0 0.0
    %1756 = vmatpush2.msra.mxu0 0.0
    %1757 = vmatprep.subr.mxu0 0.0
    %1758 = vmatpush2.msra.mxu0 0.0
    %1759 = vmatprep.subr.mxu0 0.0
    %1760 = vmatpush2.msra.mxu0 0.0
    %1761 = vmatprep.subr.mxu0 0.0
    %1762 = vmatpush2.msra.mxu0 0.0
    %1763 = vmatprep.mubr.f32.mxu0 0.0
    %1764 = vmatmul.mubr.f32.gmra.mxu0 %v1697
    %v1765 = vpop.f32.mrf.mxu0
    %v1766 = vadd.f32 0.0, %v1765
    %v1767 = vpop.f32.mrf.mxu0
    %1768 = vdwg.mxu0
    %1769 = vrot.lane.b32.xlu0 %v292, 64
    %v1770 = vpop.permute.xlu0 %1769
    %v1773 = vsel %vm297, %v1310, 0
    %1775 = vmatprep.subr.mxu0 0.0
    %1776 = vmatpush1.msra.mxu0 0.0
    %1777 = vmatprep.subr.mxu0 0.0
    %1778 = vmatpush1.msra.mxu0 0.0
    %1779 = vmatprep.subr.mxu0 0.0
    %1780 = vmatpush1.msra.mxu0 0.0
    %1781 = vmatprep.subr.mxu0 0.0
    %1782 = vmatpush1.msra.mxu0 0.0
    %1783 = vmatprep.subr.mxu0 0.0
    %1784 = vmatpush1.msra.mxu0 0.0
    %1785 = vmatprep.subr.mxu0 0.0
    %1786 = vmatpush1.msra.mxu0 0.0
    %1787 = vmatprep.subr.mxu0 0.0
    %1788 = vmatpush1.msra.mxu0 0.0
    %1789 = vmatprep.subr.mxu0 0.0
    %1790 = vmatpush1.msra.mxu0 0.0
    %1791 = vmatprep.subr.mxu0 0.0
    %1792 = vmatpush1.msra.mxu0 0.0
    %1793 = vmatprep.subr.mxu0 0.0
    %1794 = vmatpush1.msra.mxu0 0.0
    %1795 = vmatprep.subr.mxu0 0.0
    %1796 = vmatpush1.msra.mxu0 0.0
    %1797 = vmatprep.subr.mxu0 0.0
    %1798 = vmatpush1.msra.mxu0 0.0
    %1799 = vmatprep.subr.mxu0 0.0
    %1800 = vmatpush1.msra.mxu0 0.0
    %1801 = vmatprep.subr.mxu0 0.0
    %1802 = vmatpush1.msra.mxu0 0.0
    %1803 = vmatprep.subr.mxu0 0.0
    %1804 = vmatpush1.msra.mxu0 0.0
    %1805 = vmatprep.subr.mxu0 0.0
    %1806 = vmatpush1.msra.mxu0 %v1770
    %1807 = vmatprep.subr.mxu0 0.0
    %1808 = vmatpush2.msra.mxu0 0.0
    %1809 = vmatprep.subr.mxu0 0.0
    %1810 = vmatpush2.msra.mxu0 0.0
    %1811 = vmatprep.subr.mxu0 0.0
    %1812 = vmatpush2.msra.mxu0 0.0
    %1813 = vmatprep.subr.mxu0 0.0
    %1814 = vmatpush2.msra.mxu0 0.0
    %1815 = vmatprep.subr.mxu0 0.0
    %1816 = vmatpush2.msra.mxu0 0.0
    %1817 = vmatprep.subr.mxu0 0.0
    %1818 = vmatpush2.msra.mxu0 0.0
    %1819 = vmatprep.subr.mxu0 0.0
    %1820 = vmatpush2.msra.mxu0 0.0
    %1821 = vmatprep.subr.mxu0 0.0
    %1822 = vmatpush2.msra.mxu0 0.0
    %1823 = vmatprep.subr.mxu0 0.0
    %1824 = vmatpush2.msra.mxu0 0.0
    %1825 = vmatprep.subr.mxu0 0.0
    %1826 = vmatpush2.msra.mxu0 0.0
    %1827 = vmatprep.subr.mxu0 0.0
    %1828 = vmatpush2.msra.mxu0 0.0
    %1829 = vmatprep.subr.mxu0 0.0
    %1830 = vmatpush2.msra.mxu0 0.0
    %1831 = vmatprep.subr.mxu0 0.0
    %1832 = vmatpush2.msra.mxu0 0.0
    %1833 = vmatprep.subr.mxu0 0.0
    %1834 = vmatpush2.msra.mxu0 0.0
    %1835 = vmatprep.subr.mxu0 0.0
    %1836 = vmatpush2.msra.mxu0 0.0
    %1837 = vmatprep.subr.mxu0 0.0
    %1838 = vmatpush2.msra.mxu0 0.0
    %1839 = vmatprep.mubr.f32.mxu0 0.0
    %1840 = vmatmul.mubr.f32.gmra.mxu0 %v1773
    %v1841 = vpop.f32.mrf.mxu0
    %v1842 = vadd.f32 0.0, %v1841
    %v1843 = vpop.f32.mrf.mxu0
    %1844 = vdwg.mxu0
    %1845 = vrot.lane.b32.xlu0 %v294, 64
    %v1846 = vpop.permute.xlu0 %1845
    %v1849 = vsel %vm297, %v1312, 0
    %1851 = vmatprep.subr.mxu0 0.0
    %1852 = vmatpush1.msra.mxu0 0.0
    %1853 = vmatprep.subr.mxu0 0.0
    %1854 = vmatpush1.msra.mxu0 0.0
    %1855 = vmatprep.subr.mxu0 0.0
    %1856 = vmatpush1.msra.mxu0 0.0
    %1857 = vmatprep.subr.mxu0 0.0
    %1858 = vmatpush1.msra.mxu0 0.0
    %1859 = vmatprep.subr.mxu0 0.0
    %1860 = vmatpush1.msra.mxu0 0.0
    %1861 = vmatprep.subr.mxu0 0.0
    %1862 = vmatpush1.msra.mxu0 0.0
    %1863 = vmatprep.subr.mxu0 0.0
    %1864 = vmatpush1.msra.mxu0 0.0
    %1865 = vmatprep.subr.mxu0 0.0
    %1866 = vmatpush1.msra.mxu0 0.0
    %1867 = vmatprep.subr.mxu0 0.0
    %1868 = vmatpush1.msra.mxu0 0.0
    %1869 = vmatprep.subr.mxu0 0.0
    %1870 = vmatpush1.msra.mxu0 0.0
    %1871 = vmatprep.subr.mxu0 0.0
    %1872 = vmatpush1.msra.mxu0 0.0
    %1873 = vmatprep.subr.mxu0 0.0
    %1874 = vmatpush1.msra.mxu0 0.0
    %1875 = vmatprep.subr.mxu0 0.0
    %1876 = vmatpush1.msra.mxu0 0.0
    %1877 = vmatprep.subr.mxu0 0.0
    %1878 = vmatpush1.msra.mxu0 0.0
    %1879 = vmatprep.subr.mxu0 0.0
    %1880 = vmatpush1.msra.mxu0 0.0
    %1881 = vmatprep.subr.mxu0 0.0
    %1882 = vmatpush1.msra.mxu0 %v1846
    %1883 = vmatprep.subr.mxu0 0.0
    %1884 = vmatpush2.msra.mxu0 0.0
    %1885 = vmatprep.subr.mxu0 0.0
    %1886 = vmatpush2.msra.mxu0 0.0
    %1887 = vmatprep.subr.mxu0 0.0
    %1888 = vmatpush2.msra.mxu0 0.0
    %1889 = vmatprep.subr.mxu0 0.0
    %1890 = vmatpush2.msra.mxu0 0.0
    %1891 = vmatprep.subr.mxu0 0.0
    %1892 = vmatpush2.msra.mxu0 0.0
    %1893 = vmatprep.subr.mxu0 0.0
    %1894 = vmatpush2.msra.mxu0 0.0
    %1895 = vmatprep.subr.mxu0 0.0
    %1896 = vmatpush2.msra.mxu0 0.0
    %1897 = vmatprep.subr.mxu0 0.0
    %1898 = vmatpush2.msra.mxu0 0.0
    %1899 = vmatprep.subr.mxu0 0.0
    %1900 = vmatpush2.msra.mxu0 0.0
    %1901 = vmatprep.subr.mxu0 0.0
    %1902 = vmatpush2.msra.mxu0 0.0
    %1903 = vmatprep.subr.mxu0 0.0
    %1904 = vmatpush2.msra.mxu0 0.0
    %1905 = vmatprep.subr.mxu0 0.0
    %1906 = vmatpush2.msra.mxu0 0.0
    %1907 = vmatprep.subr.mxu0 0.0
    %1908 = vmatpush2.msra.mxu0 0.0
    %1909 = vmatprep.subr.mxu0 0.0
    %1910 = vmatpush2.msra.mxu0 0.0
    %1911 = vmatprep.subr.mxu0 0.0
    %1912 = vmatpush2.msra.mxu0 0.0
    %1913 = vmatprep.subr.mxu0 0.0
    %1914 = vmatpush2.msra.mxu0 0.0
    %1915 = vmatprep.mubr.f32.mxu0 0.0
    %1916 = vmatmul.mubr.f32.gmra.mxu0 %v1849
    %v1917 = vpop.f32.mrf.mxu0
    %v1918 = vadd.f32 0.0, %v1917
    %v1919 = vpop.f32.mrf.mxu0
    %1920 = vdwg.mxu0
    %v1922 = vrot.slane %v1386, 1
    %1923 = vrot.lane.b32.xlu0 %v1922, 8
    %v1924 = vpop.permute.xlu0 %1923
    %v1926 = vrot.slane %v1386, 2
    %1927 = vrot.lane.b32.xlu0 %v1926, 16
    %v1928 = vpop.permute.xlu0 %1927
    %v1930 = vrot.slane %v1386, 3
    %1931 = vrot.lane.b32.xlu0 %v1930, 24
    %v1932 = vpop.permute.xlu0 %1931
    %v1934 = vsel %vm297, %v1386, %v1924
    %vm1935 = vcmask 130048
    %v1936 = vsel %vm1935, %v1934, %v1928
    %vm1937 = vcmask 195584
    %v1938 = vsel %vm1937, %v1936, %v1932
    %v1940 = vrot.slane %v1538, 1
    %1941 = vrot.lane.b32.xlu0 %v1940, 8
    %v1942 = vpop.permute.xlu0 %1941
    %v1944 = vrot.slane %v1538, 2
    %1945 = vrot.lane.b32.xlu0 %v1944, 16
    %v1946 = vpop.permute.xlu0 %1945
    %v1948 = vrot.slane %v1538, 3
    %1949 = vrot.lane.b32.xlu0 %v1948, 24
    %v1950 = vpop.permute.xlu0 %1949
    %v1952 = vsel %vm297, %v1538, %v1942
    %v1953 = vsel %vm1935, %v1952, %v1946
    %v1954 = vsel %vm1937, %v1953, %v1950
    %v1956 = vrot.slane %v1690, 1
    %1957 = vrot.lane.b32.xlu0 %v1956, 8
    %v1958 = vpop.permute.xlu0 %1957
    %v1960 = vrot.slane %v1690, 2
    %1961 = vrot.lane.b32.xlu0 %v1960, 16
    %v1962 = vpop.permute.xlu0 %1961
    %v1964 = vrot.slane %v1690, 3
    %1965 = vrot.lane.b32.xlu0 %v1964, 24
    %v1966 = vpop.permute.xlu0 %1965
    %v1968 = vsel %vm297, %v1690, %v1958
    %v1969 = vsel %vm1935, %v1968, %v1962
    %v1970 = vsel %vm1937, %v1969, %v1966
    %v1972 = vrot.slane %v1842, 1
    %1973 = vrot.lane.b32.xlu0 %v1972, 8
    %v1974 = vpop.permute.xlu0 %1973
    %v1976 = vrot.slane %v1842, 2
    %1977 = vrot.lane.b32.xlu0 %v1976, 16
    %v1978 = vpop.permute.xlu0 %1977
    %v1980 = vrot.slane %v1842, 3
    %1981 = vrot.lane.b32.xlu0 %v1980, 24
    %v1982 = vpop.permute.xlu0 %1981
    %v1984 = vsel %vm297, %v1842, %v1974
    %v1985 = vsel %vm1935, %v1984, %v1978
    %v1986 = vsel %vm1937, %v1985, %v1982
    %v1988 = vrot.slane %v1462, 1
    %1989 = vrot.lane.b32.xlu0 %v1988, 8
    %v1990 = vpop.permute.xlu0 %1989
    %v1992 = vrot.slane %v1462, 2
    %1993 = vrot.lane.b32.xlu0 %v1992, 16
    %v1994 = vpop.permute.xlu0 %1993
    %v1996 = vrot.slane %v1462, 3
    %1997 = vrot.lane.b32.xlu0 %v1996, 24
    %v1998 = vpop.permute.xlu0 %1997
    %v2000 = vsel %vm297, %v1462, %v1990
    %v2001 = vsel %vm1935, %v2000, %v1994
    %v2002 = vsel %vm1937, %v2001, %v1998
    %v2004 = vrot.slane %v1614, 1
    %2005 = vrot.lane.b32.xlu0 %v2004, 8
    %v2006 = vpop.permute.xlu0 %2005
    %v2008 = vrot.slane %v1614, 2
    %2009 = vrot.lane.b32.xlu0 %v2008, 16
    %v2010 = vpop.permute.xlu0 %2009
    %v2012 = vrot.slane %v1614, 3
    %2013 = vrot.lane.b32.xlu0 %v2012, 24
    %v2014 = vpop.permute.xlu0 %2013
    %v2016 = vsel %vm297, %v1614, %v2006
    %v2017 = vsel %vm1935, %v2016, %v2010
    %v2018 = vsel %vm1937, %v2017, %v2014
    %v2020 = vrot.slane %v1766, 1
    %2021 = vrot.lane.b32.xlu0 %v2020, 8
    %v2022 = vpop.permute.xlu0 %2021
    %v2024 = vrot.slane %v1766, 2
    %2025 = vrot.lane.b32.xlu0 %v2024, 16
    %v2026 = vpop.permute.xlu0 %2025
    %v2028 = vrot.slane %v1766, 3
    %2029 = vrot.lane.b32.xlu0 %v2028, 24
    %v2030 = vpop.permute.xlu0 %2029
    %v2032 = vsel %vm297, %v1766, %v2022
    %v2033 = vsel %vm1935, %v2032, %v2026
    %v2034 = vsel %vm1937, %v2033, %v2030
    %v2036 = vrot.slane %v1918, 1
    %2037 = vrot.lane.b32.xlu0 %v2036, 8
    %v2038 = vpop.permute.xlu0 %2037
    %v2040 = vrot.slane %v1918, 2
    %2041 = vrot.lane.b32.xlu0 %v2040, 16
    %v2042 = vpop.permute.xlu0 %2041
    %v2044 = vrot.slane %v1918, 3
    %2045 = vrot.lane.b32.xlu0 %v2044, 24
    %v2046 = vpop.permute.xlu0 %2045
    %v2048 = vsel %vm297, %v1918, %v2038
    %v2049 = vsel %vm1935, %v2048, %v2042
    %v2050 = vsel %vm1937, %v2049, %v2046
    %v2052 = vrot.slane %v1938, 3
    %v2055 = vrot.slane %v1954, 6
    %v2057 = vrot.slane %v1954, 1
    %v2060 = vrot.slane %v1970, 4
    %v2062 = vrot.slane %v1970, 7
    %v2065 = vrot.slane %v1986, 2
    %v2067 = vrot.slane %v1986, 5
    %v2070 = vrot.slane %v2002, 3
    %v2073 = vrot.slane %v2018, 6
    %v2075 = vrot.slane %v2018, 1
    %v2078 = vrot.slane %v2034, 4
    %v2080 = vrot.slane %v2034, 7
    %v2083 = vrot.slane %v2050, 2
    %v2085 = vrot.slane %v2050, 5
    %vm2087 = vcmask 1040384
    %v2088 = vsel %vm2087, %v1938, %v2052
    %vm2089 = vcmask 1041408
    %v2090 = vsel %vm2089, %v2088, %v2055
    %vm2091 = vcmask 1042432
    %v2092 = vsel %vm2091, %v2090, %v2057
    %vm2093 = vcmask 1043456
    %v2094 = vsel %vm2093, %v2092, %v2060
    %vm2095 = vcmask 1044480
    %v2096 = vsel %vm2095, %v2094, %v2062
    %vm2097 = vcmask 1045504
    %v2098 = vsel %vm2097, %v2096, %v2065
    %vm2099 = vcmask 1046528
    %v2100 = vsel %vm2099, %v2098, %v2067
    %v2101 = vsel %vm2087, %v2002, %v2070
    %v2102 = vsel %vm2089, %v2101, %v2073
    %v2103 = vsel %vm2091, %v2102, %v2075
    %v2104 = vsel %vm2093, %v2103, %v2078
    %v2105 = vsel %vm2095, %v2104, %v2080
    %v2106 = vsel %vm2097, %v2105, %v2083
    %v2107 = vsel %vm2099, %v2106, %v2085
    %v2108 = vld [vmem:[%s4] sm:$0xff]
    %v2109 = vld [vmem:[%s4 + $0x8] sm:$0xff]
    %v2110 = vld [vmem:[%s4 + $0x10] sm:$0xff]
    %v2111 = vld [vmem:[%s4 + $0x18] sm:$0xff]
    %v2112 = vld [vmem:[%s5] sm:$0x1]
    %v2114 = vlaneseq
    %v2115 = vshrl.u32 %v2114, 7
    %v2116 = vsub.s32 0, %v2115
    %v2117 = vrot.slane %v2112, %v2116
    %v2120 = vsel %vm199, %v2100, 0
    %v2123 = vsel %vm199, %v2107, 0
    %2125 = vmatprep.subr.mxu0 0.0
    %2126 = vmatpush1.msra.mxu0 0.0
    %2127 = vmatprep.subr.mxu0 0.0
    %2128 = vmatpush1.msra.mxu0 0.0
    %2129 = vmatprep.subr.mxu0 0.0
    %2130 = vmatpush1.msra.mxu0 0.0
    %2131 = vmatprep.subr.mxu0 0.0
    %2132 = vmatpush1.msra.mxu0 0.0
    %2133 = vmatprep.subr.mxu0 0.0
    %2134 = vmatpush1.msra.mxu0 0.0
    %2135 = vmatprep.subr.mxu0 0.0
    %2136 = vmatpush1.msra.mxu0 0.0
    %2137 = vmatprep.subr.mxu0 0.0
    %2138 = vmatpush1.msra.mxu0 0.0
    %2139 = vmatprep.subr.mxu0 0.0
    %2140 = vmatpush1.msra.mxu0 0.0
    %2141 = vmatprep.subr.mxu0 0.0
    %2142 = vmatpush1.msra.mxu0 0.0
    %2143 = vmatprep.subr.mxu0 0.0
    %2144 = vmatpush1.msra.mxu0 0.0
    %2145 = vmatprep.subr.mxu0 0.0
    %2146 = vmatpush1.msra.mxu0 0.0
    %2147 = vmatprep.subr.mxu0 0.0
    %2148 = vmatpush1.msra.mxu0 0.0
    %2149 = vmatprep.subr.mxu0 0.0
    %2150 = vmatpush1.msra.mxu0 %v2111
    %2151 = vmatprep.subr.mxu0 0.0
    %2152 = vmatpush1.msra.mxu0 %v2110
    %2153 = vmatprep.subr.mxu0 0.0
    %2154 = vmatpush1.msra.mxu0 %v2109
    %2155 = vmatprep.subr.mxu0 0.0
    %2156 = vmatpush1.msra.mxu0 %v2108
    %2157 = vmatprep.subr.mxu0 0.0
    %2158 = vmatpush2.msra.mxu0 0.0
    %2159 = vmatprep.subr.mxu0 0.0
    %2160 = vmatpush2.msra.mxu0 0.0
    %2161 = vmatprep.subr.mxu0 0.0
    %2162 = vmatpush2.msra.mxu0 0.0
    %2163 = vmatprep.subr.mxu0 0.0
    %2164 = vmatpush2.msra.mxu0 0.0
    %2165 = vmatprep.subr.mxu0 0.0
    %2166 = vmatpush2.msra.mxu0 0.0
    %2167 = vmatprep.subr.mxu0 0.0
    %2168 = vmatpush2.msra.mxu0 0.0
    %2169 = vmatprep.subr.mxu0 0.0
    %2170 = vmatpush2.msra.mxu0 0.0
    %2171 = vmatprep.subr.mxu0 0.0
    %2172 = vmatpush2.msra.mxu0 0.0
    %2173 = vmatprep.subr.mxu0 0.0
    %2174 = vmatpush2.msra.mxu0 0.0
    %2175 = vmatprep.subr.mxu0 0.0
    %2176 = vmatpush2.msra.mxu0 0.0
    %2177 = vmatprep.subr.mxu0 0.0
    %2178 = vmatpush2.msra.mxu0 0.0
    %2179 = vmatprep.subr.mxu0 0.0
    %2180 = vmatpush2.msra.mxu0 0.0
    %2181 = vmatprep.subr.mxu0 0.0
    %2182 = vmatpush2.msra.mxu0 0.0
    %2183 = vmatprep.subr.mxu0 0.0
    %2184 = vmatpush2.msra.mxu0 0.0
    %2185 = vmatprep.subr.mxu0 0.0
    %2186 = vmatpush2.msra.mxu0 0.0
    %2187 = vmatprep.subr.mxu0 0.0
    %2188 = vmatpush2.msra.mxu0 0.0
    %2189 = vmatprep.mubr.f32.mxu0 0.0
    %2190 = vmatmul.mubr.f32.gmra.mxu0 %v2120
    %v2191 = vpop.f32.mrf.mxu0
    %v2192 = vadd.f32 %v2117, %v2191
    %v2193 = vpop.f32.mrf.mxu0
    %2194 = vmatprep.mubr.f32.mxu0 0.0
    %2195 = vmatmul.mubr.f32.gmra.mxu0 %v2123
    %v2196 = vpop.f32.mrf.mxu0
    %v2197 = vadd.f32 %v2117, %v2196
    %v2198 = vpop.f32.mrf.mxu0
    %2199 = vdwg.mxu0
    %v2200 = vadd.f32 %v2192, %v187
    %v2201 = vadd.f32 %v2197, %v192
    %v2202 = vld [vmem:[%s6] sm:$0x1]
    %v2203 = vld [vmem:[%s7] sm:$0x1]
    %v2204 = vsel %vm199, %v2200, 0.0
    %2205 = vadd.xlane.f32.xlu0 %v2204
    %v2206 = vpop.xlane.xlu0 %2205
    %v2207 = vsel %vm199, %v2201, 0.0
    %2208 = vadd.xlane.f32.xlu0 %v2207
    %v2209 = vpop.xlane.xlu0 %2208
    %v2210 = vrcp.pop 32.0
    %v2211 = vmul.f32 %v2206, %v2210
    %v2212 = vmul.f32 %v2209, %v2210
    %v2213 = vsub.f32 %v2200, %v2211
    %v2214 = vsub.f32 %v2201, %v2212
    %v2215 = vmul.f32 %v2213, %v2213
    %v2216 = vmul.f32 %v2214, %v2214
    %v2217 = vsel %vm199, %v2215, 0.0
    %2218 = vadd.xlane.f32.xlu0 %v2217
    %v2219 = vpop.xlane.xlu0 %2218
    %v2220 = vsel %vm199, %v2216, 0.0
    %2221 = vadd.xlane.f32.xlu0 %v2220
    %v2222 = vpop.xlane.xlu0 %2221
    %v2223 = vmul.f32 %v2219, %v2210
    %v2224 = vmul.f32 %v2222, %v2210
    %v2225 = vadd.f32 %v2223, 1e-05
    %v2226 = vadd.f32 %v2224, 1e-05
    %v2227 = vrsqrt.pop %v2225
    %v2228 = vrsqrt.pop %v2226
    %v2229 = vmul.f32 %v2213, %v2227
    %v2230 = vmul.f32 %v2214, %v2228
    %v2232 = vlaneseq
    %v2233 = vshrl.u32 %v2232, 7
    %v2234 = vsub.s32 0, %v2233
    %v2235 = vrot.slane %v2202, %v2234
    %v2237 = vmul.f32 %v2229, %v2235
    %v2238 = vmul.f32 %v2230, %v2235
    %v2240 = vlaneseq
    %v2241 = vshrl.u32 %v2240, 7
    %v2242 = vsub.s32 0, %v2241
    %v2243 = vrot.slane %v2203, %v2242
    %v2245 = vadd.f32 %v2237, %v2243
    %v2246 = vadd.f32 %v2238, %v2243
    %v2247 = vld [vmem:[%s8] sm:$0xff]
    %v2248 = vld [vmem:[%s8 + $0x8] sm:$0xff]
    %v2249 = vld [vmem:[%s8 + $0x10] sm:$0xff]
    %v2250 = vld [vmem:[%s8 + $0x18] sm:$0xff]
    %v2251 = vld [vmem:[%s9] sm:$0x1]
    %v2253 = vlaneseq
    %v2254 = vshrl.u32 %v2253, 7
    %v2255 = vsub.s32 0, %v2254
    %v2256 = vrot.slane %v2251, %v2255
    %v2259 = vsel %vm199, %v2245, 0
    %v2262 = vsel %vm199, %v2246, 0
    %2264 = vmatprep.subr.mxu0 0.0
    %2265 = vmatpush1.msra.mxu0 0.0
    %2266 = vmatprep.subr.mxu0 0.0
    %2267 = vmatpush1.msra.mxu0 0.0
    %2268 = vmatprep.subr.mxu0 0.0
    %2269 = vmatpush1.msra.mxu0 0.0
    %2270 = vmatprep.subr.mxu0 0.0
    %2271 = vmatpush1.msra.mxu0 0.0
    %2272 = vmatprep.subr.mxu0 0.0
    %2273 = vmatpush1.msra.mxu0 0.0
    %2274 = vmatprep.subr.mxu0 0.0
    %2275 = vmatpush1.msra.mxu0 0.0
    %2276 = vmatprep.subr.mxu0 0.0
    %2277 = vmatpush1.msra.mxu0 0.0
    %2278 = vmatprep.subr.mxu0 0.0
    %2279 = vmatpush1.msra.mxu0 0.0
    %2280 = vmatprep.subr.mxu0 0.0
    %2281 = vmatpush1.msra.mxu0 0.0
    %2282 = vmatprep.subr.mxu0 0.0
    %2283 = vmatpush1.msra.mxu0 0.0
    %2284 = vmatprep.subr.mxu0 0.0
    %2285 = vmatpush1.msra.mxu0 0.0
    %2286 = vmatprep.subr.mxu0 0.0
    %2287 = vmatpush1.msra.mxu0 0.0
    %2288 = vmatprep.subr.mxu0 0.0
    %2289 = vmatpush1.msra.mxu0 %v2250
    %2290 = vmatprep.subr.mxu0 0.0
    %2291 = vmatpush1.msra.mxu0 %v2249
    %2292 = vmatprep.subr.mxu0 0.0
    %2293 = vmatpush1.msra.mxu0 %v2248
    %2294 = vmatprep.subr.mxu0 0.0
    %2295 = vmatpush1.msra.mxu0 %v2247
    %2296 = vmatprep.subr.mxu0 0.0
    %2297 = vmatpush2.msra.mxu0 0.0
    %2298 = vmatprep.subr.mxu0 0.0
    %2299 = vmatpush2.msra.mxu0 0.0
    %2300 = vmatprep.subr.mxu0 0.0
    %2301 = vmatpush2.msra.mxu0 0.0
    %2302 = vmatprep.subr.mxu0 0.0
    %2303 = vmatpush2.msra.mxu0 0.0
    %2304 = vmatprep.subr.mxu0 0.0
    %2305 = vmatpush2.msra.mxu0 0.0
    %2306 = vmatprep.subr.mxu0 0.0
    %2307 = vmatpush2.msra.mxu0 0.0
    %2308 = vmatprep.subr.mxu0 0.0
    %2309 = vmatpush2.msra.mxu0 0.0
    %2310 = vmatprep.subr.mxu0 0.0
    %2311 = vmatpush2.msra.mxu0 0.0
    %2312 = vmatprep.subr.mxu0 0.0
    %2313 = vmatpush2.msra.mxu0 0.0
    %2314 = vmatprep.subr.mxu0 0.0
    %2315 = vmatpush2.msra.mxu0 0.0
    %2316 = vmatprep.subr.mxu0 0.0
    %2317 = vmatpush2.msra.mxu0 0.0
    %2318 = vmatprep.subr.mxu0 0.0
    %2319 = vmatpush2.msra.mxu0 0.0
    %2320 = vmatprep.subr.mxu0 0.0
    %2321 = vmatpush2.msra.mxu0 0.0
    %2322 = vmatprep.subr.mxu0 0.0
    %2323 = vmatpush2.msra.mxu0 0.0
    %2324 = vmatprep.subr.mxu0 0.0
    %2325 = vmatpush2.msra.mxu0 0.0
    %2326 = vmatprep.subr.mxu0 0.0
    %2327 = vmatpush2.msra.mxu0 0.0
    %2328 = vmatprep.mubr.f32.mxu0 0.0
    %2329 = vmatmul.mubr.f32.gmra.mxu0 %v2259
    %v2330 = vpop.f32.mrf.mxu0
    %v2331 = vadd.f32 %v2256, %v2330
    %v2332 = vpop.f32.mrf.mxu0
    %2333 = vmatprep.mubr.f32.mxu0 0.0
    %2334 = vmatmul.mubr.f32.gmra.mxu0 %v2262
    %v2335 = vpop.f32.mrf.mxu0
    %v2336 = vadd.f32 %v2256, %v2335
    %v2337 = vpop.f32.mrf.mxu0
    %2338 = vdwg.mxu0
    %v2339 = vmax.f32 %v2331, 0.0
    %v2340 = vmax.f32 %v2336, 0.0
    %v2341 = vld [vmem:[%s10] sm:$0xff]
    %v2342 = vld [vmem:[%s10 + $0x8] sm:$0xff]
    %v2343 = vld [vmem:[%s10 + $0x10] sm:$0xff]
    %v2344 = vld [vmem:[%s10 + $0x18] sm:$0xff]
    %v2345 = vld [vmem:[%s10 + $0x20] sm:$0xff]
    %v2346 = vld [vmem:[%s10 + $0x28] sm:$0xff]
    %v2347 = vld [vmem:[%s10 + $0x30] sm:$0xff]
    %v2348 = vld [vmem:[%s10 + $0x38] sm:$0xff]
    %v2349 = vld [vmem:[%s10 + $0x40] sm:$0xff]
    %v2350 = vld [vmem:[%s10 + $0x48] sm:$0xff]
    %v2351 = vld [vmem:[%s10 + $0x50] sm:$0xff]
    %v2352 = vld [vmem:[%s10 + $0x58] sm:$0xff]
    %v2353 = vld [vmem:[%s10 + $0x60] sm:$0xff]
    %v2354 = vld [vmem:[%s10 + $0x68] sm:$0xff]
    %v2355 = vld [vmem:[%s10 + $0x70] sm:$0xff]
    %v2356 = vld [vmem:[%s10 + $0x78] sm:$0xff]
    %v2357 = vld [vmem:[%s11] sm:$0x1]
    %v2359 = vlaneseq
    %v2360 = vshrl.u32 %v2359, 7
    %v2361 = vsub.s32 0, %v2360
    %v2362 = vrot.slane %v2357, %v2361
    %2364 = vmatprep.subr.mxu0 0.0
    %2365 = vmatpush1.msra.mxu0 %v2356
    %2366 = vmatprep.subr.mxu0 0.0
    %2367 = vmatpush1.msra.mxu0 %v2355
    %2368 = vmatprep.subr.mxu0 0.0
    %2369 = vmatpush1.msra.mxu0 %v2354
    %2370 = vmatprep.subr.mxu0 0.0
    %2371 = vmatpush1.msra.mxu0 %v2353
    %2372 = vmatprep.subr.mxu0 0.0
    %2373 = vmatpush1.msra.mxu0 %v2352
    %2374 = vmatprep.subr.mxu0 0.0
    %2375 = vmatpush1.msra.mxu0 %v2351
    %2376 = vmatprep.subr.mxu0 0.0
    %2377 = vmatpush1.msra.mxu0 %v2350
    %2378 = vmatprep.subr.mxu0 0.0
    %2379 = vmatpush1.msra.mxu0 %v2349
    %2380 = vmatprep.subr.mxu0 0.0
    %2381 = vmatpush1.msra.mxu0 %v2348
    %2382 = vmatprep.subr.mxu0 0.0
    %2383 = vmatpush1.msra.mxu0 %v2347
    %2384 = vmatprep.subr.mxu0 0.0
    %2385 = vmatpush1.msra.mxu0 %v2346
    %2386 = vmatprep.subr.mxu0 0.0
    %2387 = vmatpush1.msra.mxu0 %v2345
    %2388 = vmatprep.subr.mxu0 0.0
    %2389 = vmatpush1.msra.mxu0 %v2344
    %2390 = vmatprep.subr.mxu0 0.0
    %2391 = vmatpush1.msra.mxu0 %v2343
    %2392 = vmatprep.subr.mxu0 0.0
    %2393 = vmatpush1.msra.mxu0 %v2342
    %2394 = vmatprep.subr.mxu0 0.0
    %2395 = vmatpush1.msra.mxu0 %v2341
    %2396 = vmatprep.subr.mxu0 0.0
    %2397 = vmatpush2.msra.mxu0 0.0
    %2398 = vmatprep.subr.mxu0 0.0
    %2399 = vmatpush2.msra.mxu0 0.0
    %2400 = vmatprep.subr.mxu0 0.0
    %2401 = vmatpush2.msra.mxu0 0.0
    %2402 = vmatprep.subr.mxu0 0.0
    %2403 = vmatpush2.msra.mxu0 0.0
    %2404 = vmatprep.subr.mxu0 0.0
    %2405 = vmatpush2.msra.mxu0 0.0
    %2406 = vmatprep.subr.mxu0 0.0
    %2407 = vmatpush2.msra.mxu0 0.0
    %2408 = vmatprep.subr.mxu0 0.0
    %2409 = vmatpush2.msra.mxu0 0.0
    %2410 = vmatprep.subr.mxu0 0.0
    %2411 = vmatpush2.msra.mxu0 0.0
    %2412 = vmatprep.subr.mxu0 0.0
    %2413 = vmatpush2.msra.mxu0 0.0
    %2414 = vmatprep.subr.mxu0 0.0
    %2415 = vmatpush2.msra.mxu0 0.0
    %2416 = vmatprep.subr.mxu0 0.0
    %2417 = vmatpush2.msra.mxu0 0.0
    %2418 = vmatprep.subr.mxu0 0.0
    %2419 = vmatpush2.msra.mxu0 0.0
    %2420 = vmatprep.subr.mxu0 0.0
    %2421 = vmatpush2.msra.mxu0 0.0
    %2422 = vmatprep.subr.mxu0 0.0
    %2423 = vmatpush2.msra.mxu0 0.0
    %2424 = vmatprep.subr.mxu0 0.0
    %2425 = vmatpush2.msra.mxu0 0.0
    %2426 = vmatprep.subr.mxu0 0.0
    %2427 = vmatpush2.msra.mxu0 0.0
    %2428 = vmatprep.mubr.f32.mxu0 0.0
    %2429 = vmatmul.mubr.f32.gmra.mxu0 %v2339
    %v2430 = vpop.f32.mrf.mxu0
    %v2431 = vadd.f32 %v2362, %v2430
    %v2432 = vpop.f32.mrf.mxu0
    %2433 = vmatprep.mubr.f32.mxu0 0.0
    %2434 = vmatmul.mubr.f32.gmra.mxu0 %v2340
    %v2435 = vpop.f32.mrf.mxu0
    %v2436 = vadd.f32 %v2362, %v2435
    %v2437 = vpop.f32.mrf.mxu0
    %2438 = vdwg.mxu0
    %v2439 = vadd.f32 %v2431, %v2245
    %v2440 = vadd.f32 %v2436, %v2246
    %v2441 = vld [vmem:[%s12] sm:$0x1]
    %v2442 = vld [vmem:[%s13] sm:$0x1]
    %v2443 = vsel %vm199, %v2439, 0.0
    %2444 = vadd.xlane.f32.xlu0 %v2443
    %v2445 = vpop.xlane.xlu0 %2444
    %v2446 = vsel %vm199, %v2440, 0.0
    %2447 = vadd.xlane.f32.xlu0 %v2446
    %v2448 = vpop.xlane.xlu0 %2447
    %v2449 = vmul.f32 %v2445, %v2210
    %v2450 = vmul.f32 %v2448, %v2210
    %v2451 = vsub.f32 %v2439, %v2449
    %v2452 = vsub.f32 %v2440, %v2450
    %v2453 = vmul.f32 %v2451, %v2451
    %v2454 = vmul.f32 %v2452, %v2452
    %v2455 = vsel %vm199, %v2453, 0.0
    %2456 = vadd.xlane.f32.xlu0 %v2455
    %v2457 = vpop.xlane.xlu0 %2456
    %v2458 = vsel %vm199, %v2454, 0.0
    %2459 = vadd.xlane.f32.xlu0 %v2458
    %v2460 = vpop.xlane.xlu0 %2459
    %v2461 = vmul.f32 %v2457, %v2210
    %v2462 = vmul.f32 %v2460, %v2210
    %v2463 = vadd.f32 %v2461, 1e-05
    %v2464 = vadd.f32 %v2462, 1e-05
    %v2465 = vrsqrt.pop %v2463
    %v2466 = vrsqrt.pop %v2464
    %v2467 = vmul.f32 %v2451, %v2465
    %v2468 = vmul.f32 %v2452, %v2466
    %v2470 = vlaneseq
    %v2471 = vshrl.u32 %v2470, 7
    %v2472 = vsub.s32 0, %v2471
    %v2473 = vrot.slane %v2441, %v2472
    %v2475 = vmul.f32 %v2467, %v2473
    %v2476 = vmul.f32 %v2468, %v2473
    %v2478 = vlaneseq
    %v2479 = vshrl.u32 %v2478, 7
    %v2480 = vsub.s32 0, %v2479
    %v2481 = vrot.slane %v2442, %v2480
    %v2483 = vadd.f32 %v2475, %v2481
    %v2484 = vadd.f32 %v2476, %v2481
    %v2485 = vld [vmem:[%s14] sm:$0xff]
    %v2486 = vld [vmem:[%s14 + $0x8] sm:$0xff]
    %v2487 = vld [vmem:[%s14 + $0x10] sm:$0xff]
    %v2488 = vld [vmem:[%s14 + $0x18] sm:$0xff]
    %v2490 = vsel %vm199, %v2483, 0
    %v2493 = vsel %vm199, %v2484, 0
    %2495 = vmatprep.subr.mxu0 0.0
    %2496 = vmatpush1.msra.mxu0 0.0
    %2497 = vmatprep.subr.mxu0 0.0
    %2498 = vmatpush1.msra.mxu0 0.0
    %2499 = vmatprep.subr.mxu0 0.0
    %2500 = vmatpush1.msra.mxu0 0.0
    %2501 = vmatprep.subr.mxu0 0.0
    %2502 = vmatpush1.msra.mxu0 0.0
    %2503 = vmatprep.subr.mxu0 0.0
    %2504 = vmatpush1.msra.mxu0 0.0
    %2505 = vmatprep.subr.mxu0 0.0
    %2506 = vmatpush1.msra.mxu0 0.0
    %2507 = vmatprep.subr.mxu0 0.0
    %2508 = vmatpush1.msra.mxu0 0.0
    %2509 = vmatprep.subr.mxu0 0.0
    %2510 = vmatpush1.msra.mxu0 0.0
    %2511 = vmatprep.subr.mxu0 0.0
    %2512 = vmatpush1.msra.mxu0 0.0
    %2513 = vmatprep.subr.mxu0 0.0
    %2514 = vmatpush1.msra.mxu0 0.0
    %2515 = vmatprep.subr.mxu0 0.0
    %2516 = vmatpush1.msra.mxu0 0.0
    %2517 = vmatprep.subr.mxu0 0.0
    %2518 = vmatpush1.msra.mxu0 0.0
    %2519 = vmatprep.subr.mxu0 0.0
    %2520 = vmatpush1.msra.mxu0 %v2488
    %2521 = vmatprep.subr.mxu0 0.0
    %2522 = vmatpush1.msra.mxu0 %v2487
    %2523 = vmatprep.subr.mxu0 0.0
    %2524 = vmatpush1.msra.mxu0 %v2486
    %2525 = vmatprep.subr.mxu0 0.0
    %2526 = vmatpush1.msra.mxu0 %v2485
    %2527 = vmatprep.subr.mxu0 0.0
    %2528 = vmatpush2.msra.mxu0 0.0
    %2529 = vmatprep.subr.mxu0 0.0
    %2530 = vmatpush2.msra.mxu0 0.0
    %2531 = vmatprep.subr.mxu0 0.0
    %2532 = vmatpush2.msra.mxu0 0.0
    %2533 = vmatprep.subr.mxu0 0.0
    %2534 = vmatpush2.msra.mxu0 0.0
    %2535 = vmatprep.subr.mxu0 0.0
    %2536 = vmatpush2.msra.mxu0 0.0
    %2537 = vmatprep.subr.mxu0 0.0
    %2538 = vmatpush2.msra.mxu0 0.0
    %2539 = vmatprep.subr.mxu0 0.0
    %2540 = vmatpush2.msra.mxu0 0.0
    %2541 = vmatprep.subr.mxu0 0.0
    %2542 = vmatpush2.msra.mxu0 0.0
    %2543 = vmatprep.subr.mxu0 0.0
    %2544 = vmatpush2.msra.mxu0 0.0
    %2545 = vmatprep.subr.mxu0 0.0
    %2546 = vmatpush2.msra.mxu0 0.0
    %2547 = vmatprep.subr.mxu0 0.0
    %2548 = vmatpush2.msra.mxu0 0.0
    %2549 = vmatprep.subr.mxu0 0.0
    %2550 = vmatpush2.msra.mxu0 0.0
    %2551 = vmatprep.subr.mxu0 0.0
    %2552 = vmatpush2.msra.mxu0 0.0
    %2553 = vmatprep.subr.mxu0 0.0
    %2554 = vmatpush2.msra.mxu0 0.0
    %2555 = vmatprep.subr.mxu0 0.0
    %2556 = vmatpush2.msra.mxu0 0.0
    %2557 = vmatprep.subr.mxu0 0.0
    %2558 = vmatpush2.msra.mxu0 0.0
    %2559 = vmatprep.mubr.f32.mxu0 0.0
    %2560 = vmatmul.mubr.f32.gmra.mxu0 %v2490
    %v2561 = vpop.f32.mrf.mxu0
    %v2562 = vadd.f32 0.0, %v2561
    %v2563 = vpop.f32.mrf.mxu0
    %2564 = vmatprep.mubr.f32.mxu0 0.0
    %2565 = vmatmul.mubr.f32.gmra.mxu0 %v2493
    %v2566 = vpop.f32.mrf.mxu0
    %v2567 = vadd.f32 0.0, %v2566
    %v2568 = vpop.f32.mrf.mxu0
    %2569 = vdwg.mxu0
    %2572 = vrot.lane.b32.xlu0 %v2562, 120
    %v2573 = vpop.permute.xlu0 %2572
    %2574 = vrot.lane.b32.xlu0 %v2567, 120
    %v2575 = vpop.permute.xlu0 %2574
    %2576 = vrot.lane.b32.xlu0 %v2562, 112
    %v2577 = vpop.permute.xlu0 %2576
    %2578 = vrot.lane.b32.xlu0 %v2567, 112
    %v2579 = vpop.permute.xlu0 %2578
    %2580 = vrot.lane.b32.xlu0 %v2562, 104
    %v2581 = vpop.permute.xlu0 %2580
    %2582 = vrot.lane.b32.xlu0 %v2567, 104
    %v2583 = vpop.permute.xlu0 %2582
    %2584 = vrot.lane.b32.xlu0 %v2562, 96
    %v2585 = vpop.permute.xlu0 %2584
    %v2586 = vsel %vm297, %v2562, 0
    %v2588 = vsel %vm297, %v2585, 0
    %2590 = vmatprep.subr.mxu0 0.0
    %2591 = vmatpush1.xpose.msra.mxu0 0.0
    %2592 = vmatprep.subr.mxu0 0.0
    %2593 = vmatpush1.xpose.msra.mxu0 0.0
    %2594 = vmatprep.subr.mxu0 0.0
    %2595 = vmatpush1.xpose.msra.mxu0 0.0
    %2596 = vmatprep.subr.mxu0 0.0
    %2597 = vmatpush1.xpose.msra.mxu0 0.0
    %2598 = vmatprep.subr.mxu0 0.0
    %2599 = vmatpush1.xpose.msra.mxu0 0.0
    %2600 = vmatprep.subr.mxu0 0.0
    %2601 = vmatpush1.xpose.msra.mxu0 0.0
    %2602 = vmatprep.subr.mxu0 0.0
    %2603 = vmatpush1.xpose.msra.mxu0 0.0
    %2604 = vmatprep.subr.mxu0 0.0
    %2605 = vmatpush1.xpose.msra.mxu0 0.0
    %2606 = vmatprep.subr.mxu0 0.0
    %2607 = vmatpush1.xpose.msra.mxu0 0.0
    %2608 = vmatprep.subr.mxu0 0.0
    %2609 = vmatpush1.xpose.msra.mxu0 0.0
    %2610 = vmatprep.subr.mxu0 0.0
    %2611 = vmatpush1.xpose.msra.mxu0 0.0
    %2612 = vmatprep.subr.mxu0 0.0
    %2613 = vmatpush1.xpose.msra.mxu0 0.0
    %2614 = vmatprep.subr.mxu0 0.0
    %2615 = vmatpush1.xpose.msra.mxu0 0.0
    %2616 = vmatprep.subr.mxu0 0.0
    %2617 = vmatpush1.xpose.msra.mxu0 0.0
    %2618 = vmatprep.subr.mxu0 0.0
    %2619 = vmatpush1.xpose.msra.mxu0 0.0
    %2620 = vmatprep.subr.mxu0 0.0
    %2621 = vmatpush1.xpose.msra.mxu0 %v2588
    %2622 = vmatprep.subr.mxu0 0.0
    %2623 = vmatpush2.xpose.msra.mxu0 0.0
    %2624 = vmatprep.subr.mxu0 0.0
    %2625 = vmatpush2.xpose.msra.mxu0 0.0
    %2626 = vmatprep.subr.mxu0 0.0
    %2627 = vmatpush2.xpose.msra.mxu0 0.0
    %2628 = vmatprep.subr.mxu0 0.0
    %2629 = vmatpush2.xpose.msra.mxu0 0.0
    %2630 = vmatprep.subr.mxu0 0.0
    %2631 = vmatpush2.xpose.msra.mxu0 0.0
    %2632 = vmatprep.subr.mxu0 0.0
    %2633 = vmatpush2.xpose.msra.mxu0 0.0
    %2634 = vmatprep.subr.mxu0 0.0
    %2635 = vmatpush2.xpose.msra.mxu0 0.0
    %2636 = vmatprep.subr.mxu0 0.0
    %2637 = vmatpush2.xpose.msra.mxu0 0.0
    %2638 = vmatprep.subr.mxu0 0.0
    %2639 = vmatpush2.xpose.msra.mxu0 0.0
    %2640 = vmatprep.subr.mxu0 0.0
    %2641 = vmatpush2.xpose.msra.mxu0 0.0
    %2642 = vmatprep.subr.mxu0 0.0
    %2643 = vmatpush2.xpose.msra.mxu0 0.0
    %2644 = vmatprep.subr.mxu0 0.0
    %2645 = vmatpush2.xpose.msra.mxu0 0.0
    %2646 = vmatprep.subr.mxu0 0.0
    %2647 = vmatpush2.xpose.msra.mxu0 0.0
    %2648 = vmatprep.subr.mxu0 0.0
    %2649 = vmatpush2.xpose.msra.mxu0 0.0
    %2650 = vmatprep.subr.mxu0 0.0
    %2651 = vmatpush2.xpose.msra.mxu0 0.0
    %2652 = vmatprep.subr.mxu0 0.0
    %2653 = vmatpush2.xpose.msra.mxu0 0.0
    %2654 = vmatprep.mubr.f32.mxu0 0.0
    %2655 = vmatmul.mubr.f32.gmra.mxu0 %v2586
    %v2656 = vpop.f32.mrf.mxu0
    %v2657 = vadd.f32 0.0, %v2656
    %v2658 = vpop.f32.mrf.mxu0
    %2659 = vdwg.mxu0
    %2660 = vrot.lane.b32.xlu0 %v2567, 96
    %v2661 = vpop.permute.xlu0 %2660
    %v2662 = vsel %vm297, %v2567, 0
    %v2664 = vsel %vm297, %v2661, 0
    %2666 = vmatprep.subr.mxu0 0.0
    %2667 = vmatpush1.xpose.msra.mxu0 0.0
    %2668 = vmatprep.subr.mxu0 0.0
    %2669 = vmatpush1.xpose.msra.mxu0 0.0
    %2670 = vmatprep.subr.mxu0 0.0
    %2671 = vmatpush1.xpose.msra.mxu0 0.0
    %2672 = vmatprep.subr.mxu0 0.0
    %2673 = vmatpush1.xpose.msra.mxu0 0.0
    %2674 = vmatprep.subr.mxu0 0.0
    %2675 = vmatpush1.xpose.msra.mxu0 0.0
    %2676 = vmatprep.subr.mxu0 0.0
    %2677 = vmatpush1.xpose.msra.mxu0 0.0
    %2678 = vmatprep.subr.mxu0 0.0
    %2679 = vmatpush1.xpose.msra.mxu0 0.0
    %2680 = vmatprep.subr.mxu0 0.0
    %2681 = vmatpush1.xpose.msra.mxu0 0.0
    %2682 = vmatprep.subr.mxu0 0.0
    %2683 = vmatpush1.xpose.msra.mxu0 0.0
    %2684 = vmatprep.subr.mxu0 0.0
    %2685 = vmatpush1.xpose.msra.mxu0 0.0
    %2686 = vmatprep.subr.mxu0 0.0
    %2687 = vmatpush1.xpose.msra.mxu0 0.0
    %2688 = vmatprep.subr.mxu0 0.0
    %2689 = vmatpush1.xpose.msra.mxu0 0.0
    %2690 = vmatprep.subr.mxu0 0.0
    %2691 = vmatpush1.xpose.msra.mxu0 0.0
    %2692 = vmatprep.subr.mxu0 0.0
    %2693 = vmatpush1.xpose.msra.mxu0 0.0
    %2694 = vmatprep.subr.mxu0 0.0
    %2695 = vmatpush1.xpose.msra.mxu0 0.0
    %2696 = vmatprep.subr.mxu0 0.0
    %2697 = vmatpush1.xpose.msra.mxu0 %v2664
    %2698 = vmatprep.subr.mxu0 0.0
    %2699 = vmatpush2.xpose.msra.mxu0 0.0
    %2700 = vmatprep.subr.mxu0 0.0
    %2701 = vmatpush2.xpose.msra.mxu0 0.0
    %2702 = vmatprep.subr.mxu0 0.0
    %2703 = vmatpush2.xpose.msra.mxu0 0.0
    %2704 = vmatprep.subr.mxu0 0.0
    %2705 = vmatpush2.xpose.msra.mxu0 0.0
    %2706 = vmatprep.subr.mxu0 0.0
    %2707 = vmatpush2.xpose.msra.mxu0 0.0
    %2708 = vmatprep.subr.mxu0 0.0
    %2709 = vmatpush2.xpose.msra.mxu0 0.0
    %2710 = vmatprep.subr.mxu0 0.0
    %2711 = vmatpush2.xpose.msra.mxu0 0.0
    %2712 = vmatprep.subr.mxu0 0.0
    %2713 = vmatpush2.xpose.msra.mxu0 0.0
    %2714 = vmatprep.subr.mxu0 0.0
    %2715 = vmatpush2.xpose.msra.mxu0 0.0
    %2716 = vmatprep.subr.mxu0 0.0
    %2717 = vmatpush2.xpose.msra.mxu0 0.0
    %2718 = vmatprep.subr.mxu0 0.0
    %2719 = vmatpush2.xpose.msra.mxu0 0.0
    %2720 = vmatprep.subr.mxu0 0.0
    %2721 = vmatpush2.xpose.msra.mxu0 0.0
    %2722 = vmatprep.subr.mxu0 0.0
    %2723 = vmatpush2.xpose.msra.mxu0 0.0
    %2724 = vmatprep.subr.mxu0 0.0
    %2725 = vmatpush2.xpose.msra.mxu0 0.0
    %2726 = vmatprep.subr.mxu0 0.0
    %2727 = vmatpush2.xpose.msra.mxu0 0.0
    %2728 = vmatprep.subr.mxu0 0.0
    %2729 = vmatpush2.xpose.msra.mxu0 0.0
    %2730 = vmatprep.mubr.f32.mxu0 0.0
    %2731 = vmatmul.mubr.f32.gmra.mxu0 %v2662
    %v2732 = vpop.f32.mrf.mxu0
    %v2733 = vadd.f32 0.0, %v2732
    %v2734 = vpop.f32.mrf.mxu0
    %2735 = vdwg.mxu0
    %2736 = vrot.lane.b32.xlu0 %v2573, 96
    %v2737 = vpop.permute.xlu0 %2736
    %v2738 = vsel %vm297, %v2573, 0
    %v2740 = vsel %vm297, %v2737, 0
    %2742 = vmatprep.subr.mxu0 0.0
    %2743 = vmatpush1.xpose.msra.mxu0 0.0
    %2744 = vmatprep.subr.mxu0 0.0
    %2745 = vmatpush1.xpose.msra.mxu0 0.0
    %2746 = vmatprep.subr.mxu0 0.0
    %2747 = vmatpush1.xpose.msra.mxu0 0.0
    %2748 = vmatprep.subr.mxu0 0.0
    %2749 = vmatpush1.xpose.msra.mxu0 0.0
    %2750 = vmatprep.subr.mxu0 0.0
    %2751 = vmatpush1.xpose.msra.mxu0 0.0
    %2752 = vmatprep.subr.mxu0 0.0
    %2753 = vmatpush1.xpose.msra.mxu0 0.0
    %2754 = vmatprep.subr.mxu0 0.0
    %2755 = vmatpush1.xpose.msra.mxu0 0.0
    %2756 = vmatprep.subr.mxu0 0.0
    %2757 = vmatpush1.xpose.msra.mxu0 0.0
    %2758 = vmatprep.subr.mxu0 0.0
    %2759 = vmatpush1.xpose.msra.mxu0 0.0
    %2760 = vmatprep.subr.mxu0 0.0
    %2761 = vmatpush1.xpose.msra.mxu0 0.0
    %2762 = vmatprep.subr.mxu0 0.0
    %2763 = vmatpush1.xpose.msra.mxu0 0.0
    %2764 = vmatprep.subr.mxu0 0.0
    %2765 = vmatpush1.xpose.msra.mxu0 0.0
    %2766 = vmatprep.subr.mxu0 0.0
    %2767 = vmatpush1.xpose.msra.mxu0 0.0
    %2768 = vmatprep.subr.mxu0 0.0
    %2769 = vmatpush1.xpose.msra.mxu0 0.0
    %2770 = vmatprep.subr.mxu0 0.0
    %2771 = vmatpush1.xpose.msra.mxu0 0.0
    %2772 = vmatprep.subr.mxu0 0.0
    %2773 = vmatpush1.xpose.msra.mxu0 %v2740
    %2774 = vmatprep.subr.mxu0 0.0
    %2775 = vmatpush2.xpose.msra.mxu0 0.0
    %2776 = vmatprep.subr.mxu0 0.0
    %2777 = vmatpush2.xpose.msra.mxu0 0.0
    %2778 = vmatprep.subr.mxu0 0.0
    %2779 = vmatpush2.xpose.msra.mxu0 0.0
    %2780 = vmatprep.subr.mxu0 0.0
    %2781 = vmatpush2.xpose.msra.mxu0 0.0
    %2782 = vmatprep.subr.mxu0 0.0
    %2783 = vmatpush2.xpose.msra.mxu0 0.0
    %2784 = vmatprep.subr.mxu0 0.0
    %2785 = vmatpush2.xpose.msra.mxu0 0.0
    %2786 = vmatprep.subr.mxu0 0.0
    %2787 = vmatpush2.xpose.msra.mxu0 0.0
    %2788 = vmatprep.subr.mxu0 0.0
    %2789 = vmatpush2.xpose.msra.mxu0 0.0
    %2790 = vmatprep.subr.mxu0 0.0
    %2791 = vmatpush2.xpose.msra.mxu0 0.0
    %2792 = vmatprep.subr.mxu0 0.0
    %2793 = vmatpush2.xpose.msra.mxu0 0.0
    %2794 = vmatprep.subr.mxu0 0.0
    %2795 = vmatpush2.xpose.msra.mxu0 0.0
    %2796 = vmatprep.subr.mxu0 0.0
    %2797 = vmatpush2.xpose.msra.mxu0 0.0
    %2798 = vmatprep.subr.mxu0 0.0
    %2799 = vmatpush2.xpose.msra.mxu0 0.0
    %2800 = vmatprep.subr.mxu0 0.0
    %2801 = vmatpush2.xpose.msra.mxu0 0.0
    %2802 = vmatprep.subr.mxu0 0.0
    %2803 = vmatpush2.xpose.msra.mxu0 0.0
    %2804 = vmatprep.subr.mxu0 0.0
    %2805 = vmatpush2.xpose.msra.mxu0 0.0
    %2806 = vmatprep.mubr.f32.mxu0 0.0
    %2807 = vmatmul.mubr.f32.gmra.mxu0 %v2738
    %v2808 = vpop.f32.mrf.mxu0
    %v2809 = vadd.f32 0.0, %v2808
    %v2810 = vpop.f32.mrf.mxu0
    %2811 = vdwg.mxu0
    %2812 = vrot.lane.b32.xlu0 %v2575, 96
    %v2813 = vpop.permute.xlu0 %2812
    %v2814 = vsel %vm297, %v2575, 0
    %v2816 = vsel %vm297, %v2813, 0
    %2818 = vmatprep.subr.mxu0 0.0
    %2819 = vmatpush1.xpose.msra.mxu0 0.0
    %2820 = vmatprep.subr.mxu0 0.0
    %2821 = vmatpush1.xpose.msra.mxu0 0.0
    %2822 = vmatprep.subr.mxu0 0.0
    %2823 = vmatpush1.xpose.msra.mxu0 0.0
    %2824 = vmatprep.subr.mxu0 0.0
    %2825 = vmatpush1.xpose.msra.mxu0 0.0
    %2826 = vmatprep.subr.mxu0 0.0
    %2827 = vmatpush1.xpose.msra.mxu0 0.0
    %2828 = vmatprep.subr.mxu0 0.0
    %2829 = vmatpush1.xpose.msra.mxu0 0.0
    %2830 = vmatprep.subr.mxu0 0.0
    %2831 = vmatpush1.xpose.msra.mxu0 0.0
    %2832 = vmatprep.subr.mxu0 0.0
    %2833 = vmatpush1.xpose.msra.mxu0 0.0
    %2834 = vmatprep.subr.mxu0 0.0
    %2835 = vmatpush1.xpose.msra.mxu0 0.0
    %2836 = vmatprep.subr.mxu0 0.0
    %2837 = vmatpush1.xpose.msra.mxu0 0.0
    %2838 = vmatprep.subr.mxu0 0.0
    %2839 = vmatpush1.xpose.msra.mxu0 0.0
    %2840 = vmatprep.subr.mxu0 0.0
    %2841 = vmatpush1.xpose.msra.mxu0 0.0
    %2842 = vmatprep.subr.mxu0 0.0
    %2843 = vmatpush1.xpose.msra.mxu0 0.0
    %2844 = vmatprep.subr.mxu0 0.0
    %2845 = vmatpush1.xpose.msra.mxu0 0.0
    %2846 = vmatprep.subr.mxu0 0.0
    %2847 = vmatpush1.xpose.msra.mxu0 0.0
    %2848 = vmatprep.subr.mxu0 0.0
    %2849 = vmatpush1.xpose.msra.mxu0 %v2816
    %2850 = vmatprep.subr.mxu0 0.0
    %2851 = vmatpush2.xpose.msra.mxu0 0.0
    %2852 = vmatprep.subr.mxu0 0.0
    %2853 = vmatpush2.xpose.msra.mxu0 0.0
    %2854 = vmatprep.subr.mxu0 0.0
    %2855 = vmatpush2.xpose.msra.mxu0 0.0
    %2856 = vmatprep.subr.mxu0 0.0
    %2857 = vmatpush2.xpose.msra.mxu0 0.0
    %2858 = vmatprep.subr.mxu0 0.0
    %2859 = vmatpush2.xpose.msra.mxu0 0.0
    %2860 = vmatprep.subr.mxu0 0.0
    %2861 = vmatpush2.xpose.msra.mxu0 0.0
    %2862 = vmatprep.subr.mxu0 0.0
    %2863 = vmatpush2.xpose.msra.mxu0 0.0
    %2864 = vmatprep.subr.mxu0 0.0
    %2865 = vmatpush2.xpose.msra.mxu0 0.0
    %2866 = vmatprep.subr.mxu0 0.0
    %2867 = vmatpush2.xpose.msra.mxu0 0.0
    %2868 = vmatprep.subr.mxu0 0.0
    %2869 = vmatpush2.xpose.msra.mxu0 0.0
    %2870 = vmatprep.subr.mxu0 0.0
    %2871 = vmatpush2.xpose.msra.mxu0 0.0
    %2872 = vmatprep.subr.mxu0 0.0
    %2873 = vmatpush2.xpose.msra.mxu0 0.0
    %2874 = vmatprep.subr.mxu0 0.0
    %2875 = vmatpush2.xpose.msra.mxu0 0.0
    %2876 = vmatprep.subr.mxu0 0.0
    %2877 = vmatpush2.xpose.msra.mxu0 0.0
    %2878 = vmatprep.subr.mxu0 0.0
    %2879 = vmatpush2.xpose.msra.mxu0 0.0
    %2880 = vmatprep.subr.mxu0 0.0
    %2881 = vmatpush2.xpose.msra.mxu0 0.0
    %2882 = vmatprep.mubr.f32.mxu0 0.0
    %2883 = vmatmul.mubr.f32.gmra.mxu0 %v2814
    %v2884 = vpop.f32.mrf.mxu0
    %v2885 = vadd.f32 0.0, %v2884
    %v2886 = vpop.f32.mrf.mxu0
    %2887 = vdwg.mxu0
    %2888 = vrot.lane.b32.xlu0 %v2577, 96
    %v2889 = vpop.permute.xlu0 %2888
    %v2890 = vsel %vm297, %v2577, 0
    %v2892 = vsel %vm297, %v2889, 0
    %2894 = vmatprep.subr.mxu0 0.0
    %2895 = vmatpush1.xpose.msra.mxu0 0.0
    %2896 = vmatprep.subr.mxu0 0.0
    %2897 = vmatpush1.xpose.msra.mxu0 0.0
    %2898 = vmatprep.subr.mxu0 0.0
    %2899 = vmatpush1.xpose.msra.mxu0 0.0
    %2900 = vmatprep.subr.mxu0 0.0
    %2901 = vmatpush1.xpose.msra.mxu0 0.0
    %2902 = vmatprep.subr.mxu0 0.0
    %2903 = vmatpush1.xpose.msra.mxu0 0.0
    %2904 = vmatprep.subr.mxu0 0.0
    %2905 = vmatpush1.xpose.msra.mxu0 0.0
    %2906 = vmatprep.subr.mxu0 0.0
    %2907 = vmatpush1.xpose.msra.mxu0 0.0
    %2908 = vmatprep.subr.mxu0 0.0
    %2909 = vmatpush1.xpose.msra.mxu0 0.0
    %2910 = vmatprep.subr.mxu0 0.0
    %2911 = vmatpush1.xpose.msra.mxu0 0.0
    %2912 = vmatprep.subr.mxu0 0.0
    %2913 = vmatpush1.xpose.msra.mxu0 0.0
    %2914 = vmatprep.subr.mxu0 0.0
    %2915 = vmatpush1.xpose.msra.mxu0 0.0
    %2916 = vmatprep.subr.mxu0 0.0
    %2917 = vmatpush1.xpose.msra.mxu0 0.0
    %2918 = vmatprep.subr.mxu0 0.0
    %2919 = vmatpush1.xpose.msra.mxu0 0.0
    %2920 = vmatprep.subr.mxu0 0.0
    %2921 = vmatpush1.xpose.msra.mxu0 0.0
    %2922 = vmatprep.subr.mxu0 0.0
    %2923 = vmatpush1.xpose.msra.mxu0 0.0
    %2924 = vmatprep.subr.mxu0 0.0
    %2925 = vmatpush1.xpose.msra.mxu0 %v2892
    %2926 = vmatprep.subr.mxu0 0.0
    %2927 = vmatpush2.xpose.msra.mxu0 0.0
    %2928 = vmatprep.subr.mxu0 0.0
    %2929 = vmatpush2.xpose.msra.mxu0 0.0
    %2930 = vmatprep.subr.mxu0 0.0
    %2931 = vmatpush2.xpose.msra.mxu0 0.0
    %2932 = vmatprep.subr.mxu0 0.0
    %2933 = vmatpush2.xpose.msra.mxu0 0.0
    %2934 = vmatprep.subr.mxu0 0.0
    %2935 = vmatpush2.xpose.msra.mxu0 0.0
    %2936 = vmatprep.subr.mxu0 0.0
    %2937 = vmatpush2.xpose.msra.mxu0 0.0
    %2938 = vmatprep.subr.mxu0 0.0
    %2939 = vmatpush2.xpose.msra.mxu0 0.0
    %2940 = vmatprep.subr.mxu0 0.0
    %2941 = vmatpush2.xpose.msra.mxu0 0.0
    %2942 = vmatprep.subr.mxu0 0.0
    %2943 = vmatpush2.xpose.msra.mxu0 0.0
    %2944 = vmatprep.subr.mxu0 0.0
    %2945 = vmatpush2.xpose.msra.mxu0 0.0
    %2946 = vmatprep.subr.mxu0 0.0
    %2947 = vmatpush2.xpose.msra.mxu0 0.0
    %2948 = vmatprep.subr.mxu0 0.0
    %2949 = vmatpush2.xpose.msra.mxu0 0.0
    %2950 = vmatprep.subr.mxu0 0.0
    %2951 = vmatpush2.xpose.msra.mxu0 0.0
    %2952 = vmatprep.subr.mxu0 0.0
    %2953 = vmatpush2.xpose.msra.mxu0 0.0
    %2954 = vmatprep.subr.mxu0 0.0
    %2955 = vmatpush2.xpose.msra.mxu0 0.0
    %2956 = vmatprep.subr.mxu0 0.0
    %2957 = vmatpush2.xpose.msra.mxu0 0.0
    %2958 = vmatprep.mubr.f32.mxu0 0.0
    %2959 = vmatmul.mubr.f32.gmra.mxu0 %v2890
    %v2960 = vpop.f32.mrf.mxu0
    %v2961 = vadd.f32 0.0, %v2960
    %v2962 = vpop.f32.mrf.mxu0
    %2963 = vdwg.mxu0
    %2964 = vrot.lane.b32.xlu0 %v2579, 96
    %v2965 = vpop.permute.xlu0 %2964
    %v2966 = vsel %vm297, %v2579, 0
    %v2968 = vsel %vm297, %v2965, 0
    %2970 = vmatprep.subr.mxu0 0.0
    %2971 = vmatpush1.xpose.msra.mxu0 0.0
    %2972 = vmatprep.subr.mxu0 0.0
    %2973 = vmatpush1.xpose.msra.mxu0 0.0
    %2974 = vmatprep.subr.mxu0 0.0
    %2975 = vmatpush1.xpose.msra.mxu0 0.0
    %2976 = vmatprep.subr.mxu0 0.0
    %2977 = vmatpush1.xpose.msra.mxu0 0.0
    %2978 = vmatprep.subr.mxu0 0.0
    %2979 = vmatpush1.xpose.msra.mxu0 0.0
    %2980 = vmatprep.subr.mxu0 0.0
    %2981 = vmatpush1.xpose.msra.mxu0 0.0
    %2982 = vmatprep.subr.mxu0 0.0
    %2983 = vmatpush1.xpose.msra.mxu0 0.0
    %2984 = vmatprep.subr.mxu0 0.0
    %2985 = vmatpush1.xpose.msra.mxu0 0.0
    %2986 = vmatprep.subr.mxu0 0.0
    %2987 = vmatpush1.xpose.msra.mxu0 0.0
    %2988 = vmatprep.subr.mxu0 0.0
    %2989 = vmatpush1.xpose.msra.mxu0 0.0
    %2990 = vmatprep.subr.mxu0 0.0
    %2991 = vmatpush1.xpose.msra.mxu0 0.0
    %2992 = vmatprep.subr.mxu0 0.0
    %2993 = vmatpush1.xpose.msra.mxu0 0.0
    %2994 = vmatprep.subr.mxu0 0.0
    %2995 = vmatpush1.xpose.msra.mxu0 0.0
    %2996 = vmatprep.subr.mxu0 0.0
    %2997 = vmatpush1.xpose.msra.mxu0 0.0
    %2998 = vmatprep.subr.mxu0 0.0
    %2999 = vmatpush1.xpose.msra.mxu0 0.0
    %3000 = vmatprep.subr.mxu0 0.0
    %3001 = vmatpush1.xpose.msra.mxu0 %v2968
    %3002 = vmatprep.subr.mxu0 0.0
    %3003 = vmatpush2.xpose.msra.mxu0 0.0
    %3004 = vmatprep.subr.mxu0 0.0
    %3005 = vmatpush2.xpose.msra.mxu0 0.0
    %3006 = vmatprep.subr.mxu0 0.0
    %3007 = vmatpush2.xpose.msra.mxu0 0.0
    %3008 = vmatprep.subr.mxu0 0.0
    %3009 = vmatpush2.xpose.msra.mxu0 0.0
    %3010 = vmatprep.subr.mxu0 0.0
    %3011 = vmatpush2.xpose.msra.mxu0 0.0
    %3012 = vmatprep.subr.mxu0 0.0
    %3013 = vmatpush2.xpose.msra.mxu0 0.0
    %3014 = vmatprep.subr.mxu0 0.0
    %3015 = vmatpush2.xpose.msra.mxu0 0.0
    %3016 = vmatprep.subr.mxu0 0.0
    %3017 = vmatpush2.xpose.msra.mxu0 0.0
    %3018 = vmatprep.subr.mxu0 0.0
    %3019 = vmatpush2.xpose.msra.mxu0 0.0
    %3020 = vmatprep.subr.mxu0 0.0
    %3021 = vmatpush2.xpose.msra.mxu0 0.0
    %3022 = vmatprep.subr.mxu0 0.0
    %3023 = vmatpush2.xpose.msra.mxu0 0.0
    %3024 = vmatprep.subr.mxu0 0.0
    %3025 = vmatpush2.xpose.msra.mxu0 0.0
    %3026 = vmatprep.subr.mxu0 0.0
    %3027 = vmatpush2.xpose.msra.mxu0 0.0
    %3028 = vmatprep.subr.mxu0 0.0
    %3029 = vmatpush2.xpose.msra.mxu0 0.0
    %3030 = vmatprep.subr.mxu0 0.0
    %3031 = vmatpush2.xpose.msra.mxu0 0.0
    %3032 = vmatprep.subr.mxu0 0.0
    %3033 = vmatpush2.xpose.msra.mxu0 0.0
    %3034 = vmatprep.mubr.f32.mxu0 0.0
    %3035 = vmatmul.mubr.f32.gmra.mxu0 %v2966
    %v3036 = vpop.f32.mrf.mxu0
    %v3037 = vadd.f32 0.0, %v3036
    %v3038 = vpop.f32.mrf.mxu0
    %3039 = vdwg.mxu0
    %3040 = vrot.lane.b32.xlu0 %v2581, 96
    %v3041 = vpop.permute.xlu0 %3040
    %v3042 = vsel %vm297, %v2581, 0
    %v3044 = vsel %vm297, %v3041, 0
    %3046 = vmatprep.subr.mxu0 0.0
    %3047 = vmatpush1.xpose.msra.mxu0 0.0
    %3048 = vmatprep.subr.mxu0 0.0
    %3049 = vmatpush1.xpose.msra.mxu0 0.0
    %3050 = vmatprep.subr.mxu0 0.0
    %3051 = vmatpush1.xpose.msra.mxu0 0.0
    %3052 = vmatprep.subr.mxu0 0.0
    %3053 = vmatpush1.xpose.msra.mxu0 0.0
    %3054 = vmatprep.subr.mxu0 0.0
    %3055 = vmatpush1.xpose.msra.mxu0 0.0
    %3056 = vmatprep.subr.mxu0 0.0
    %3057 = vmatpush1.xpose.msra.mxu0 0.0
    %3058 = vmatprep.subr.mxu0 0.0
    %3059 = vmatpush1.xpose.msra.mxu0 0.0
    %3060 = vmatprep.subr.mxu0 0.0
    %3061 = vmatpush1.xpose.msra.mxu0 0.0
    %3062 = vmatprep.subr.mxu0 0.0
    %3063 = vmatpush1.xpose.msra.mxu0 0.0
    %3064 = vmatprep.subr.mxu0 0.0
    %3065 = vmatpush1.xpose.msra.mxu0 0.0
    %3066 = vmatprep.subr.mxu0 0.0
    %3067 = vmatpush1.xpose.msra.mxu0 0.0
    %3068 = vmatprep.subr.mxu0 0.0
    %3069 = vmatpush1.xpose.msra.mxu0 0.0
    %3070 = vmatprep.subr.mxu0 0.0
    %3071 = vmatpush1.xpose.msra.mxu0 0.0
    %3072 = vmatprep.subr.mxu0 0.0
    %3073 = vmatpush1.xpose.msra.mxu0 0.0
    %3074 = vmatprep.subr.mxu0 0.0
    %3075 = vmatpush1.xpose.msra.mxu0 0.0
    %3076 = vmatprep.subr.mxu0 0.0
    %3077 = vmatpush1.xpose.msra.mxu0 %v3044
    %3078 = vmatprep.subr.mxu0 0.0
    %3079 = vmatpush2.xpose.msra.mxu0 0.0
    %3080 = vmatprep.subr.mxu0 0.0
    %3081 = vmatpush2.xpose.msra.mxu0 0.0
    %3082 = vmatprep.subr.mxu0 0.0
    %3083 = vmatpush2.xpose.msra.mxu0 0.0
    %3084 = vmatprep.subr.mxu0 0.0
    %3085 = vmatpush2.xpose.msra.mxu0 0.0
    %3086 = vmatprep.subr.mxu0 0.0
    %3087 = vmatpush2.xpose.msra.mxu0 0.0
    %3088 = vmatprep.subr.mxu0 0.0
    %3089 = vmatpush2.xpose.msra.mxu0 0.0
    %3090 = vmatprep.subr.mxu0 0.0
    %3091 = vmatpush2.xpose.msra.mxu0 0.0
    %3092 = vmatprep.subr.mxu0 0.0
    %3093 = vmatpush2.xpose.msra.mxu0 0.0
    %3094 = vmatprep.subr.mxu0 0.0
    %3095 = vmatpush2.xpose.msra.mxu0 0.0
    %3096 = vmatprep.subr.mxu0 0.0
    %3097 = vmatpush2.xpose.msra.mxu0 0.0
    %3098 = vmatprep.subr.mxu0 0.0
    %3099 = vmatpush2.xpose.msra.mxu0 0.0
    %3100 = vmatprep.subr.mxu0 0.0
    %3101 = vmatpush2.xpose.msra.mxu0 0.0
    %3102 = vmatprep.subr.mxu0 0.0
    %3103 = vmatpush2.xpose.msra.mxu0 0.0
    %3104 = vmatprep.subr.mxu0 0.0
    %3105 = vmatpush2.xpose.msra.mxu0 0.0
    %3106 = vmatprep.subr.mxu0 0.0
    %3107 = vmatpush2.xpose.msra.mxu0 0.0
    %3108 = vmatprep.subr.mxu0 0.0
    %3109 = vmatpush2.xpose.msra.mxu0 0.0
    %3110 = vmatprep.mubr.f32.mxu0 0.0
    %3111 = vmatmul.mubr.f32.gmra.mxu0 %v3042
    %v3112 = vpop.f32.mrf.mxu0
    %v3113 = vadd.f32 0.0, %v3112
    %v3114 = vpop.f32.mrf.mxu0
    %3115 = vdwg.mxu0
    %3116 = vrot.lane.b32.xlu0 %v2583, 96
    %v3117 = vpop.permute.xlu0 %3116
    %v3118 = vsel %vm297, %v2583, 0
    %v3120 = vsel %vm297, %v3117, 0
    %3122 = vmatprep.subr.mxu0 0.0
    %3123 = vmatpush1.xpose.msra.mxu0 0.0
    %3124 = vmatprep.subr.mxu0 0.0
    %3125 = vmatpush1.xpose.msra.mxu0 0.0
    %3126 = vmatprep.subr.mxu0 0.0
    %3127 = vmatpush1.xpose.msra.mxu0 0.0
    %3128 = vmatprep.subr.mxu0 0.0
    %3129 = vmatpush1.xpose.msra.mxu0 0.0
    %3130 = vmatprep.subr.mxu0 0.0
    %3131 = vmatpush1.xpose.msra.mxu0 0.0
    %3132 = vmatprep.subr.mxu0 0.0
    %3133 = vmatpush1.xpose.msra.mxu0 0.0
    %3134 = vmatprep.subr.mxu0 0.0
    %3135 = vmatpush1.xpose.msra.mxu0 0.0
    %3136 = vmatprep.subr.mxu0 0.0
    %3137 = vmatpush1.xpose.msra.mxu0 0.0
    %3138 = vmatprep.subr.mxu0 0.0
    %3139 = vmatpush1.xpose.msra.mxu0 0.0
    %3140 = vmatprep.subr.mxu0 0.0
    %3141 = vmatpush1.xpose.msra.mxu0 0.0
    %3142 = vmatprep.subr.mxu0 0.0
    %3143 = vmatpush1.xpose.msra.mxu0 0.0
    %3144 = vmatprep.subr.mxu0 0.0
    %3145 = vmatpush1.xpose.msra.mxu0 0.0
    %3146 = vmatprep.subr.mxu0 0.0
    %3147 = vmatpush1.xpose.msra.mxu0 0.0
    %3148 = vmatprep.subr.mxu0 0.0
    %3149 = vmatpush1.xpose.msra.mxu0 0.0
    %3150 = vmatprep.subr.mxu0 0.0
    %3151 = vmatpush1.xpose.msra.mxu0 0.0
    %3152 = vmatprep.subr.mxu0 0.0
    %3153 = vmatpush1.xpose.msra.mxu0 %v3120
    %3154 = vmatprep.subr.mxu0 0.0
    %3155 = vmatpush2.xpose.msra.mxu0 0.0
    %3156 = vmatprep.subr.mxu0 0.0
    %3157 = vmatpush2.xpose.msra.mxu0 0.0
    %3158 = vmatprep.subr.mxu0 0.0
    %3159 = vmatpush2.xpose.msra.mxu0 0.0
    %3160 = vmatprep.subr.mxu0 0.0
    %3161 = vmatpush2.xpose.msra.mxu0 0.0
    %3162 = vmatprep.subr.mxu0 0.0
    %3163 = vmatpush2.xpose.msra.mxu0 0.0
    %3164 = vmatprep.subr.mxu0 0.0
    %3165 = vmatpush2.xpose.msra.mxu0 0.0
    %3166 = vmatprep.subr.mxu0 0.0
    %3167 = vmatpush2.xpose.msra.mxu0 0.0
    %3168 = vmatprep.subr.mxu0 0.0
    %3169 = vmatpush2.xpose.msra.mxu0 0.0
    %3170 = vmatprep.subr.mxu0 0.0
    %3171 = vmatpush2.xpose.msra.mxu0 0.0
    %3172 = vmatprep.subr.mxu0 0.0
    %3173 = vmatpush2.xpose.msra.mxu0 0.0
    %3174 = vmatprep.subr.mxu0 0.0
    %3175 = vmatpush2.xpose.msra.mxu0 0.0
    %3176 = vmatprep.subr.mxu0 0.0
    %3177 = vmatpush2.xpose.msra.mxu0 0.0
    %3178 = vmatprep.subr.mxu0 0.0
    %3179 = vmatpush2.xpose.msra.mxu0 0.0
    %3180 = vmatprep.subr.mxu0 0.0
    %3181 = vmatpush2.xpose.msra.mxu0 0.0
    %3182 = vmatprep.subr.mxu0 0.0
    %3183 = vmatpush2.xpose.msra.mxu0 0.0
    %3184 = vmatprep.subr.mxu0 0.0
    %3185 = vmatpush2.xpose.msra.mxu0 0.0
    %3186 = vmatprep.mubr.f32.mxu0 0.0
    %3187 = vmatmul.mubr.f32.gmra.mxu0 %v3118
    %v3188 = vpop.f32.mrf.mxu0
    %v3189 = vadd.f32 0.0, %v3188
    %v3190 = vpop.f32.mrf.mxu0
    %3191 = vdwg.mxu0
    %v3192 = vsel %vm297, %v2657, -inf
    %3193 = vmax.xlane.f32.xlu0 %v3192
    %v3194 = vpop.xlane.xlu0 %3193
    %v3195 = vsel %vm297, %v2733, -inf
    %3196 = vmax.xlane.f32.xlu0 %v3195
    %v3197 = vpop.xlane.xlu0 %3196
    %v3198 = vsel %vm297, %v2809, -inf
    %3199 = vmax.xlane.f32.xlu0 %v3198
    %v3200 = vpop.xlane.xlu0 %3199
    %v3201 = vsel %vm297, %v2885, -inf
    %3202 = vmax.xlane.f32.xlu0 %v3201
    %v3203 = vpop.xlane.xlu0 %3202
    %v3204 = vsel %vm297, %v2961, -inf
    %3205 = vmax.xlane.f32.xlu0 %v3204
    %v3206 = vpop.xlane.xlu0 %3205
    %v3207 = vsel %vm297, %v3037, -inf
    %3208 = vmax.xlane.f32.xlu0 %v3207
    %v3209 = vpop.xlane.xlu0 %3208
    %v3210 = vsel %vm297, %v3113, -inf
    %3211 = vmax.xlane.f32.xlu0 %v3210
    %v3212 = vpop.xlane.xlu0 %3211
    %v3213 = vsel %vm297, %v3189, -inf
    %3214 = vmax.xlane.f32.xlu0 %v3213
    %v3215 = vpop.xlane.xlu0 %3214
    %vm3216 = vcmp.eq.f32.partialorder %v2657, %v3194
    %vm3217 = vcmp.eq.f32.partialorder %v2733, %v3197
    %vm3218 = vcmp.eq.f32.partialorder %v2809, %v3200
    %vm3219 = vcmp.eq.f32.partialorder %v2885, %v3203
    %vm3220 = vcmp.eq.f32.partialorder %v2961, %v3206
    %vm3221 = vcmp.eq.f32.partialorder %v3037, %v3209
    %vm3222 = vcmp.eq.f32.partialorder %v3113, %v3212
    %vm3223 = vcmp.eq.f32.partialorder %v3189, %v3215
    %v3224 = vsel %vm3216, %v904, 8.0
    %v3225 = vsel %vm3217, %v904, 8.0
    %v3226 = vsel %vm3218, %v904, 8.0
    %v3227 = vsel %vm3219, %v904, 8.0
    %v3228 = vsel %vm3220, %v904, 8.0
    %v3229 = vsel %vm3221, %v904, 8.0
    %v3230 = vsel %vm3222, %v904, 8.0
    %v3231 = vsel %vm3223, %v904, 8.0
    %v3232 = vsel %vm297, %v3224, inf
    %3233 = vmin.xlane.f32.xlu0 %v3232
    %v3234 = vpop.xlane.xlu0 %3233
    %v3235 = vsel %vm297, %v3225, inf
    %3236 = vmin.xlane.f32.xlu0 %v3235
    %v3237 = vpop.xlane.xlu0 %3236
    %v3238 = vsel %vm297, %v3226, inf
    %3239 = vmin.xlane.f32.xlu0 %v3238
    %v3240 = vpop.xlane.xlu0 %3239
    %v3241 = vsel %vm297, %v3227, inf
    %3242 = vmin.xlane.f32.xlu0 %v3241
    %v3243 = vpop.xlane.xlu0 %3242
    %v3244 = vsel %vm297, %v3228, inf
    %3245 = vmin.xlane.f32.xlu0 %v3244
    %v3246 = vpop.xlane.xlu0 %3245
    %v3247 = vsel %vm297, %v3229, inf
    %3248 = vmin.xlane.f32.xlu0 %v3247
    %v3249 = vpop.xlane.xlu0 %3248
    %v3250 = vsel %vm297, %v3230, inf
    %3251 = vmin.xlane.f32.xlu0 %v3250
    %v3252 = vpop.xlane.xlu0 %3251
    %v3253 = vsel %vm297, %v3231, inf
    %3254 = vmin.xlane.f32.xlu0 %v3253
    %v3255 = vpop.xlane.xlu0 %3254
    %vm3256 = vcmp.eq.f32.partialorder %v904, %v3234
    %vm3257 = vcmp.eq.f32.partialorder %v904, %v3237
    %vm3258 = vcmp.eq.f32.partialorder %v904, %v3240
    %vm3259 = vcmp.eq.f32.partialorder %v904, %v3243
    %vm3260 = vcmp.eq.f32.partialorder %v904, %v3246
    %vm3261 = vcmp.eq.f32.partialorder %v904, %v3249
    %vm3262 = vcmp.eq.f32.partialorder %v904, %v3252
    %vm3263 = vcmp.eq.f32.partialorder %v904, %v3255
    %v3264 = vsel %vm3256, -1e+30, %v2657
    %v3265 = vsel %vm3257, -1e+30, %v2733
    %v3266 = vsel %vm3258, -1e+30, %v2809
    %v3267 = vsel %vm3259, -1e+30, %v2885
    %v3268 = vsel %vm3260, -1e+30, %v2961
    %v3269 = vsel %vm3261, -1e+30, %v3037
    %v3270 = vsel %vm3262, -1e+30, %v3113
    %v3271 = vsel %vm3263, -1e+30, %v3189
    %v3272 = vsel %vm297, %v3264, -inf
    %3273 = vmax.xlane.f32.xlu0 %v3272
    %v3274 = vpop.xlane.xlu0 %3273
    %v3275 = vsel %vm297, %v3265, -inf
    %3276 = vmax.xlane.f32.xlu0 %v3275
    %v3277 = vpop.xlane.xlu0 %3276
    %v3278 = vsel %vm297, %v3266, -inf
    %3279 = vmax.xlane.f32.xlu0 %v3278
    %v3280 = vpop.xlane.xlu0 %3279
    %v3281 = vsel %vm297, %v3267, -inf
    %3282 = vmax.xlane.f32.xlu0 %v3281
    %v3283 = vpop.xlane.xlu0 %3282
    %v3284 = vsel %vm297, %v3268, -inf
    %3285 = vmax.xlane.f32.xlu0 %v3284
    %v3286 = vpop.xlane.xlu0 %3285
    %v3287 = vsel %vm297, %v3269, -inf
    %3288 = vmax.xlane.f32.xlu0 %v3287
    %v3289 = vpop.xlane.xlu0 %3288
    %v3290 = vsel %vm297, %v3270, -inf
    %3291 = vmax.xlane.f32.xlu0 %v3290
    %v3292 = vpop.xlane.xlu0 %3291
    %v3293 = vsel %vm297, %v3271, -inf
    %3294 = vmax.xlane.f32.xlu0 %v3293
    %v3295 = vpop.xlane.xlu0 %3294
    %vm3296 = vcmp.eq.f32.partialorder %v3264, %v3274
    %vm3297 = vcmp.eq.f32.partialorder %v3265, %v3277
    %vm3298 = vcmp.eq.f32.partialorder %v3266, %v3280
    %vm3299 = vcmp.eq.f32.partialorder %v3267, %v3283
    %vm3300 = vcmp.eq.f32.partialorder %v3268, %v3286
    %vm3301 = vcmp.eq.f32.partialorder %v3269, %v3289
    %vm3302 = vcmp.eq.f32.partialorder %v3270, %v3292
    %vm3303 = vcmp.eq.f32.partialorder %v3271, %v3295
    %v3304 = vsel %vm3296, %v904, 8.0
    %v3305 = vsel %vm3297, %v904, 8.0
    %v3306 = vsel %vm3298, %v904, 8.0
    %v3307 = vsel %vm3299, %v904, 8.0
    %v3308 = vsel %vm3300, %v904, 8.0
    %v3309 = vsel %vm3301, %v904, 8.0
    %v3310 = vsel %vm3302, %v904, 8.0
    %v3311 = vsel %vm3303, %v904, 8.0
    %v3312 = vsel %vm297, %v3304, inf
    %3313 = vmin.xlane.f32.xlu0 %v3312
    %v3314 = vpop.xlane.xlu0 %3313
    %v3315 = vsel %vm297, %v3305, inf
    %3316 = vmin.xlane.f32.xlu0 %v3315
    %v3317 = vpop.xlane.xlu0 %3316
    %v3318 = vsel %vm297, %v3306, inf
    %3319 = vmin.xlane.f32.xlu0 %v3318
    %v3320 = vpop.xlane.xlu0 %3319
    %v3321 = vsel %vm297, %v3307, inf
    %3322 = vmin.xlane.f32.xlu0 %v3321
    %v3323 = vpop.xlane.xlu0 %3322
    %v3324 = vsel %vm297, %v3308, inf
    %3325 = vmin.xlane.f32.xlu0 %v3324
    %v3326 = vpop.xlane.xlu0 %3325
    %v3327 = vsel %vm297, %v3309, inf
    %3328 = vmin.xlane.f32.xlu0 %v3327
    %v3329 = vpop.xlane.xlu0 %3328
    %v3330 = vsel %vm297, %v3310, inf
    %3331 = vmin.xlane.f32.xlu0 %v3330
    %v3332 = vpop.xlane.xlu0 %3331
    %v3333 = vsel %vm297, %v3311, inf
    %3334 = vmin.xlane.f32.xlu0 %v3333
    %v3335 = vpop.xlane.xlu0 %3334
    %vm3336 = vcmp.eq.f32.partialorder %v904, %v3314
    %vm3337 = vcmp.eq.f32.partialorder %v904, %v3317
    %vm3338 = vcmp.eq.f32.partialorder %v904, %v3320
    %vm3339 = vcmp.eq.f32.partialorder %v904, %v3323
    %vm3340 = vcmp.eq.f32.partialorder %v904, %v3326
    %vm3341 = vcmp.eq.f32.partialorder %v904, %v3329
    %vm3342 = vcmp.eq.f32.partialorder %v904, %v3332
    %vm3343 = vcmp.eq.f32.partialorder %v904, %v3335
    %vm3344 = vmor %vm3256, %vm3336
    %vm3345 = vmor %vm3257, %vm3337
    %vm3346 = vmor %vm3258, %vm3338
    %vm3347 = vmor %vm3259, %vm3339
    %vm3348 = vmor %vm3260, %vm3340
    %vm3349 = vmor %vm3261, %vm3341
    %vm3350 = vmor %vm3262, %vm3342
    %vm3351 = vmor %vm3263, %vm3343
    %v3352 = vsel %vm3336, -1e+30, %v3264
    %v3353 = vsel %vm3337, -1e+30, %v3265
    %v3354 = vsel %vm3338, -1e+30, %v3266
    %v3355 = vsel %vm3339, -1e+30, %v3267
    %v3356 = vsel %vm3340, -1e+30, %v3268
    %v3357 = vsel %vm3341, -1e+30, %v3269
    %v3358 = vsel %vm3342, -1e+30, %v3270
    %v3359 = vsel %vm3343, -1e+30, %v3271
    %v3360 = vsel %vm297, %v3352, -inf
    %3361 = vmax.xlane.f32.xlu0 %v3360
    %v3362 = vpop.xlane.xlu0 %3361
    %v3363 = vsel %vm297, %v3353, -inf
    %3364 = vmax.xlane.f32.xlu0 %v3363
    %v3365 = vpop.xlane.xlu0 %3364
    %v3366 = vsel %vm297, %v3354, -inf
    %3367 = vmax.xlane.f32.xlu0 %v3366
    %v3368 = vpop.xlane.xlu0 %3367
    %v3369 = vsel %vm297, %v3355, -inf
    %3370 = vmax.xlane.f32.xlu0 %v3369
    %v3371 = vpop.xlane.xlu0 %3370
    %v3372 = vsel %vm297, %v3356, -inf
    %3373 = vmax.xlane.f32.xlu0 %v3372
    %v3374 = vpop.xlane.xlu0 %3373
    %v3375 = vsel %vm297, %v3357, -inf
    %3376 = vmax.xlane.f32.xlu0 %v3375
    %v3377 = vpop.xlane.xlu0 %3376
    %v3378 = vsel %vm297, %v3358, -inf
    %3379 = vmax.xlane.f32.xlu0 %v3378
    %v3380 = vpop.xlane.xlu0 %3379
    %v3381 = vsel %vm297, %v3359, -inf
    %3382 = vmax.xlane.f32.xlu0 %v3381
    %v3383 = vpop.xlane.xlu0 %3382
    %vm3384 = vcmp.eq.f32.partialorder %v3352, %v3362
    %vm3385 = vcmp.eq.f32.partialorder %v3353, %v3365
    %vm3386 = vcmp.eq.f32.partialorder %v3354, %v3368
    %vm3387 = vcmp.eq.f32.partialorder %v3355, %v3371
    %vm3388 = vcmp.eq.f32.partialorder %v3356, %v3374
    %vm3389 = vcmp.eq.f32.partialorder %v3357, %v3377
    %vm3390 = vcmp.eq.f32.partialorder %v3358, %v3380
    %vm3391 = vcmp.eq.f32.partialorder %v3359, %v3383
    %v3392 = vsel %vm3384, %v904, 8.0
    %v3393 = vsel %vm3385, %v904, 8.0
    %v3394 = vsel %vm3386, %v904, 8.0
    %v3395 = vsel %vm3387, %v904, 8.0
    %v3396 = vsel %vm3388, %v904, 8.0
    %v3397 = vsel %vm3389, %v904, 8.0
    %v3398 = vsel %vm3390, %v904, 8.0
    %v3399 = vsel %vm3391, %v904, 8.0
    %v3400 = vsel %vm297, %v3392, inf
    %3401 = vmin.xlane.f32.xlu0 %v3400
    %v3402 = vpop.xlane.xlu0 %3401
    %v3403 = vsel %vm297, %v3393, inf
    %3404 = vmin.xlane.f32.xlu0 %v3403
    %v3405 = vpop.xlane.xlu0 %3404
    %v3406 = vsel %vm297, %v3394, inf
    %3407 = vmin.xlane.f32.xlu0 %v3406
    %v3408 = vpop.xlane.xlu0 %3407
    %v3409 = vsel %vm297, %v3395, inf
    %3410 = vmin.xlane.f32.xlu0 %v3409
    %v3411 = vpop.xlane.xlu0 %3410
    %v3412 = vsel %vm297, %v3396, inf
    %3413 = vmin.xlane.f32.xlu0 %v3412
    %v3414 = vpop.xlane.xlu0 %3413
    %v3415 = vsel %vm297, %v3397, inf
    %3416 = vmin.xlane.f32.xlu0 %v3415
    %v3417 = vpop.xlane.xlu0 %3416
    %v3418 = vsel %vm297, %v3398, inf
    %3419 = vmin.xlane.f32.xlu0 %v3418
    %v3420 = vpop.xlane.xlu0 %3419
    %v3421 = vsel %vm297, %v3399, inf
    %3422 = vmin.xlane.f32.xlu0 %v3421
    %v3423 = vpop.xlane.xlu0 %3422
    %vm3424 = vcmp.eq.f32.partialorder %v904, %v3402
    %vm3425 = vcmp.eq.f32.partialorder %v904, %v3405
    %vm3426 = vcmp.eq.f32.partialorder %v904, %v3408
    %vm3427 = vcmp.eq.f32.partialorder %v904, %v3411
    %vm3428 = vcmp.eq.f32.partialorder %v904, %v3414
    %vm3429 = vcmp.eq.f32.partialorder %v904, %v3417
    %vm3430 = vcmp.eq.f32.partialorder %v904, %v3420
    %vm3431 = vcmp.eq.f32.partialorder %v904, %v3423
    %vm3432 = vmor %vm3344, %vm3424
    %vm3433 = vmor %vm3345, %vm3425
    %vm3434 = vmor %vm3346, %vm3426
    %vm3435 = vmor %vm3347, %vm3427
    %vm3436 = vmor %vm3348, %vm3428
    %vm3437 = vmor %vm3349, %vm3429
    %vm3438 = vmor %vm3350, %vm3430
    %vm3439 = vmor %vm3351, %vm3431
    %v3440 = vsel %vm3424, -1e+30, %v3352
    %v3441 = vsel %vm3425, -1e+30, %v3353
    %v3442 = vsel %vm3426, -1e+30, %v3354
    %v3443 = vsel %vm3427, -1e+30, %v3355
    %v3444 = vsel %vm3428, -1e+30, %v3356
    %v3445 = vsel %vm3429, -1e+30, %v3357
    %v3446 = vsel %vm3430, -1e+30, %v3358
    %v3447 = vsel %vm3431, -1e+30, %v3359
    %v3448 = vsel %vm297, %v3440, -inf
    %3449 = vmax.xlane.f32.xlu0 %v3448
    %v3450 = vpop.xlane.xlu0 %3449
    %v3451 = vsel %vm297, %v3441, -inf
    %3452 = vmax.xlane.f32.xlu0 %v3451
    %v3453 = vpop.xlane.xlu0 %3452
    %v3454 = vsel %vm297, %v3442, -inf
    %3455 = vmax.xlane.f32.xlu0 %v3454
    %v3456 = vpop.xlane.xlu0 %3455
    %v3457 = vsel %vm297, %v3443, -inf
    %3458 = vmax.xlane.f32.xlu0 %v3457
    %v3459 = vpop.xlane.xlu0 %3458
    %v3460 = vsel %vm297, %v3444, -inf
    %3461 = vmax.xlane.f32.xlu0 %v3460
    %v3462 = vpop.xlane.xlu0 %3461
    %v3463 = vsel %vm297, %v3445, -inf
    %3464 = vmax.xlane.f32.xlu0 %v3463
    %v3465 = vpop.xlane.xlu0 %3464
    %v3466 = vsel %vm297, %v3446, -inf
    %3467 = vmax.xlane.f32.xlu0 %v3466
    %v3468 = vpop.xlane.xlu0 %3467
    %v3469 = vsel %vm297, %v3447, -inf
    %3470 = vmax.xlane.f32.xlu0 %v3469
    %v3471 = vpop.xlane.xlu0 %3470
    %vm3472 = vcmp.eq.f32.partialorder %v3440, %v3450
    %vm3473 = vcmp.eq.f32.partialorder %v3441, %v3453
    %vm3474 = vcmp.eq.f32.partialorder %v3442, %v3456
    %vm3475 = vcmp.eq.f32.partialorder %v3443, %v3459
    %vm3476 = vcmp.eq.f32.partialorder %v3444, %v3462
    %vm3477 = vcmp.eq.f32.partialorder %v3445, %v3465
    %vm3478 = vcmp.eq.f32.partialorder %v3446, %v3468
    %vm3479 = vcmp.eq.f32.partialorder %v3447, %v3471
    %v3480 = vsel %vm3472, %v904, 8.0
    %v3481 = vsel %vm3473, %v904, 8.0
    %v3482 = vsel %vm3474, %v904, 8.0
    %v3483 = vsel %vm3475, %v904, 8.0
    %v3484 = vsel %vm3476, %v904, 8.0
    %v3485 = vsel %vm3477, %v904, 8.0
    %v3486 = vsel %vm3478, %v904, 8.0
    %v3487 = vsel %vm3479, %v904, 8.0
    %v3488 = vsel %vm297, %v3480, inf
    %3489 = vmin.xlane.f32.xlu0 %v3488
    %v3490 = vpop.xlane.xlu0 %3489
    %v3491 = vsel %vm297, %v3481, inf
    %3492 = vmin.xlane.f32.xlu0 %v3491
    %v3493 = vpop.xlane.xlu0 %3492
    %v3494 = vsel %vm297, %v3482, inf
    %3495 = vmin.xlane.f32.xlu0 %v3494
    %v3496 = vpop.xlane.xlu0 %3495
    %v3497 = vsel %vm297, %v3483, inf
    %3498 = vmin.xlane.f32.xlu0 %v3497
    %v3499 = vpop.xlane.xlu0 %3498
    %v3500 = vsel %vm297, %v3484, inf
    %3501 = vmin.xlane.f32.xlu0 %v3500
    %v3502 = vpop.xlane.xlu0 %3501
    %v3503 = vsel %vm297, %v3485, inf
    %3504 = vmin.xlane.f32.xlu0 %v3503
    %v3505 = vpop.xlane.xlu0 %3504
    %v3506 = vsel %vm297, %v3486, inf
    %3507 = vmin.xlane.f32.xlu0 %v3506
    %v3508 = vpop.xlane.xlu0 %3507
    %v3509 = vsel %vm297, %v3487, inf
    %3510 = vmin.xlane.f32.xlu0 %v3509
    %v3511 = vpop.xlane.xlu0 %3510
    %vm3512 = vcmp.eq.f32.partialorder %v904, %v3490
    %vm3513 = vcmp.eq.f32.partialorder %v904, %v3493
    %vm3514 = vcmp.eq.f32.partialorder %v904, %v3496
    %vm3515 = vcmp.eq.f32.partialorder %v904, %v3499
    %vm3516 = vcmp.eq.f32.partialorder %v904, %v3502
    %vm3517 = vcmp.eq.f32.partialorder %v904, %v3505
    %vm3518 = vcmp.eq.f32.partialorder %v904, %v3508
    %vm3519 = vcmp.eq.f32.partialorder %v904, %v3511
    %vm3520 = vmor %vm3432, %vm3512
    %vm3521 = vmor %vm3433, %vm3513
    %vm3522 = vmor %vm3434, %vm3514
    %vm3523 = vmor %vm3435, %vm3515
    %vm3524 = vmor %vm3436, %vm3516
    %vm3525 = vmor %vm3437, %vm3517
    %vm3526 = vmor %vm3438, %vm3518
    %vm3527 = vmor %vm3439, %vm3519
    %v3528 = vsub.f32 %v2657, %v3194
    %v3529 = vsub.f32 %v2733, %v3197
    %v3530 = vsub.f32 %v2809, %v3200
    %v3531 = vsub.f32 %v2885, %v3203
    %v3532 = vsub.f32 %v2961, %v3206
    %v3533 = vsub.f32 %v3037, %v3209
    %v3534 = vsub.f32 %v3113, %v3212
    %v3535 = vsub.f32 %v3189, %v3215
    %v3536 = vmul.f32 %v3528, 1.442695
    %v3537 = vpow.pop %v3536
    %v3538 = vmul.f32 %v3529, 1.442695
    %v3539 = vpow.pop %v3538
    %v3540 = vmul.f32 %v3530, 1.442695
    %v3541 = vpow.pop %v3540
    %v3542 = vmul.f32 %v3531, 1.442695
    %v3543 = vpow.pop %v3542
    %v3544 = vmul.f32 %v3532, 1.442695
    %v3545 = vpow.pop %v3544
    %v3546 = vmul.f32 %v3533, 1.442695
    %v3547 = vpow.pop %v3546
    %v3548 = vmul.f32 %v3534, 1.442695
    %v3549 = vpow.pop %v3548
    %v3550 = vmul.f32 %v3535, 1.442695
    %v3551 = vpow.pop %v3550
    %v3552 = vsel %vm3520, %v3537, 0.0
    %v3553 = vsel %vm3521, %v3539, 0.0
    %v3554 = vsel %vm3522, %v3541, 0.0
    %v3555 = vsel %vm3523, %v3543, 0.0
    %v3556 = vsel %vm3524, %v3545, 0.0
    %v3557 = vsel %vm3525, %v3547, 0.0
    %v3558 = vsel %vm3526, %v3549, 0.0
    %v3559 = vsel %vm3527, %v3551, 0.0
    %v3560 = vsel %vm297, %v3552, 0.0
    %3561 = vadd.xlane.f32.xlu0 %v3560
    %v3562 = vpop.xlane.xlu0 %3561
    %v3563 = vsel %vm297, %v3553, 0.0
    %3564 = vadd.xlane.f32.xlu0 %v3563
    %v3565 = vpop.xlane.xlu0 %3564
    %v3566 = vsel %vm297, %v3554, 0.0
    %3567 = vadd.xlane.f32.xlu0 %v3566
    %v3568 = vpop.xlane.xlu0 %3567
    %v3569 = vsel %vm297, %v3555, 0.0
    %3570 = vadd.xlane.f32.xlu0 %v3569
    %v3571 = vpop.xlane.xlu0 %3570
    %v3572 = vsel %vm297, %v3556, 0.0
    %3573 = vadd.xlane.f32.xlu0 %v3572
    %v3574 = vpop.xlane.xlu0 %3573
    %v3575 = vsel %vm297, %v3557, 0.0
    %3576 = vadd.xlane.f32.xlu0 %v3575
    %v3577 = vpop.xlane.xlu0 %3576
    %v3578 = vsel %vm297, %v3558, 0.0
    %3579 = vadd.xlane.f32.xlu0 %v3578
    %v3580 = vpop.xlane.xlu0 %3579
    %v3581 = vsel %vm297, %v3559, 0.0
    %3582 = vadd.xlane.f32.xlu0 %v3581
    %v3583 = vpop.xlane.xlu0 %3582
    %v3584 = vrcp.pop %v3562
    %v3585 = vmul.f32 %v3552, %v3584
    %v3586 = vrcp.pop %v3565
    %v3587 = vmul.f32 %v3553, %v3586
    %v3588 = vrcp.pop %v3568
    %v3589 = vmul.f32 %v3554, %v3588
    %v3590 = vrcp.pop %v3571
    %v3591 = vmul.f32 %v3555, %v3590
    %v3592 = vrcp.pop %v3574
    %v3593 = vmul.f32 %v3556, %v3592
    %v3594 = vrcp.pop %v3577
    %v3595 = vmul.f32 %v3557, %v3594
    %v3596 = vrcp.pop %v3580
    %v3597 = vmul.f32 %v3558, %v3596
    %v3598 = vrcp.pop %v3583
    %v3599 = vmul.f32 %v3559, %v3598
    %3600 = vrot.lane.b32.xlu0 %v2562, 64
    %v3601 = vpop.permute.xlu0 %3600
    %v3604 = vsel %vm297, %v3585, 0
    %3606 = vmatprep.subr.mxu0 0.0
    %3607 = vmatpush1.msra.mxu0 0.0
    %3608 = vmatprep.subr.mxu0 0.0
    %3609 = vmatpush1.msra.mxu0 0.0
    %3610 = vmatprep.subr.mxu0 0.0
    %3611 = vmatpush1.msra.mxu0 0.0
    %3612 = vmatprep.subr.mxu0 0.0
    %3613 = vmatpush1.msra.mxu0 0.0
    %3614 = vmatprep.subr.mxu0 0.0
    %3615 = vmatpush1.msra.mxu0 0.0
    %3616 = vmatprep.subr.mxu0 0.0
    %3617 = vmatpush1.msra.mxu0 0.0
    %3618 = vmatprep.subr.mxu0 0.0
    %3619 = vmatpush1.msra.mxu0 0.0
    %3620 = vmatprep.subr.mxu0 0.0
    %3621 = vmatpush1.msra.mxu0 0.0
    %3622 = vmatprep.subr.mxu0 0.0
    %3623 = vmatpush1.msra.mxu0 0.0
    %3624 = vmatprep.subr.mxu0 0.0
    %3625 = vmatpush1.msra.mxu0 0.0
    %3626 = vmatprep.subr.mxu0 0.0
    %3627 = vmatpush1.msra.mxu0 0.0
    %3628 = vmatprep.subr.mxu0 0.0
    %3629 = vmatpush1.msra.mxu0 0.0
    %3630 = vmatprep.subr.mxu0 0.0
    %3631 = vmatpush1.msra.mxu0 0.0
    %3632 = vmatprep.subr.mxu0 0.0
    %3633 = vmatpush1.msra.mxu0 0.0
    %3634 = vmatprep.subr.mxu0 0.0
    %3635 = vmatpush1.msra.mxu0 0.0
    %3636 = vmatprep.subr.mxu0 0.0
    %3637 = vmatpush1.msra.mxu0 %v3601
    %3638 = vmatprep.subr.mxu0 0.0
    %3639 = vmatpush2.msra.mxu0 0.0
    %3640 = vmatprep.subr.mxu0 0.0
    %3641 = vmatpush2.msra.mxu0 0.0
    %3642 = vmatprep.subr.mxu0 0.0
    %3643 = vmatpush2.msra.mxu0 0.0
    %3644 = vmatprep.subr.mxu0 0.0
    %3645 = vmatpush2.msra.mxu0 0.0
    %3646 = vmatprep.subr.mxu0 0.0
    %3647 = vmatpush2.msra.mxu0 0.0
    %3648 = vmatprep.subr.mxu0 0.0
    %3649 = vmatpush2.msra.mxu0 0.0
    %3650 = vmatprep.subr.mxu0 0.0
    %3651 = vmatpush2.msra.mxu0 0.0
    %3652 = vmatprep.subr.mxu0 0.0
    %3653 = vmatpush2.msra.mxu0 0.0
    %3654 = vmatprep.subr.mxu0 0.0
    %3655 = vmatpush2.msra.mxu0 0.0
    %3656 = vmatprep.subr.mxu0 0.0
    %3657 = vmatpush2.msra.mxu0 0.0
    %3658 = vmatprep.subr.mxu0 0.0
    %3659 = vmatpush2.msra.mxu0 0.0
    %3660 = vmatprep.subr.mxu0 0.0
    %3661 = vmatpush2.msra.mxu0 0.0
    %3662 = vmatprep.subr.mxu0 0.0
    %3663 = vmatpush2.msra.mxu0 0.0
    %3664 = vmatprep.subr.mxu0 0.0
    %3665 = vmatpush2.msra.mxu0 0.0
    %3666 = vmatprep.subr.mxu0 0.0
    %3667 = vmatpush2.msra.mxu0 0.0
    %3668 = vmatprep.subr.mxu0 0.0
    %3669 = vmatpush2.msra.mxu0 0.0
    %3670 = vmatprep.mubr.f32.mxu0 0.0
    %3671 = vmatmul.mubr.f32.gmra.mxu0 %v3604
    %v3672 = vpop.f32.mrf.mxu0
    %v3673 = vadd.f32 0.0, %v3672
    %v3674 = vpop.f32.mrf.mxu0
    %3675 = vdwg.mxu0
    %3676 = vrot.lane.b32.xlu0 %v2567, 64
    %v3677 = vpop.permute.xlu0 %3676
    %v3680 = vsel %vm297, %v3587, 0
    %3682 = vmatprep.subr.mxu0 0.0
    %3683 = vmatpush1.msra.mxu0 0.0
    %3684 = vmatprep.subr.mxu0 0.0
    %3685 = vmatpush1.msra.mxu0 0.0
    %3686 = vmatprep.subr.mxu0 0.0
    %3687 = vmatpush1.msra.mxu0 0.0
    %3688 = vmatprep.subr.mxu0 0.0
    %3689 = vmatpush1.msra.mxu0 0.0
    %3690 = vmatprep.subr.mxu0 0.0
    %3691 = vmatpush1.msra.mxu0 0.0
    %3692 = vmatprep.subr.mxu0 0.0
    %3693 = vmatpush1.msra.mxu0 0.0
    %3694 = vmatprep.subr.mxu0 0.0
    %3695 = vmatpush1.msra.mxu0 0.0
    %3696 = vmatprep.subr.mxu0 0.0
    %3697 = vmatpush1.msra.mxu0 0.0
    %3698 = vmatprep.subr.mxu0 0.0
    %3699 = vmatpush1.msra.mxu0 0.0
    %3700 = vmatprep.subr.mxu0 0.0
    %3701 = vmatpush1.msra.mxu0 0.0
    %3702 = vmatprep.subr.mxu0 0.0
    %3703 = vmatpush1.msra.mxu0 0.0
    %3704 = vmatprep.subr.mxu0 0.0
    %3705 = vmatpush1.msra.mxu0 0.0
    %3706 = vmatprep.subr.mxu0 0.0
    %3707 = vmatpush1.msra.mxu0 0.0
    %3708 = vmatprep.subr.mxu0 0.0
    %3709 = vmatpush1.msra.mxu0 0.0
    %3710 = vmatprep.subr.mxu0 0.0
    %3711 = vmatpush1.msra.mxu0 0.0
    %3712 = vmatprep.subr.mxu0 0.0
    %3713 = vmatpush1.msra.mxu0 %v3677
    %3714 = vmatprep.subr.mxu0 0.0
    %3715 = vmatpush2.msra.mxu0 0.0
    %3716 = vmatprep.subr.mxu0 0.0
    %3717 = vmatpush2.msra.mxu0 0.0
    %3718 = vmatprep.subr.mxu0 0.0
    %3719 = vmatpush2.msra.mxu0 0.0
    %3720 = vmatprep.subr.mxu0 0.0
    %3721 = vmatpush2.msra.mxu0 0.0
    %3722 = vmatprep.subr.mxu0 0.0
    %3723 = vmatpush2.msra.mxu0 0.0
    %3724 = vmatprep.subr.mxu0 0.0
    %3725 = vmatpush2.msra.mxu0 0.0
    %3726 = vmatprep.subr.mxu0 0.0
    %3727 = vmatpush2.msra.mxu0 0.0
    %3728 = vmatprep.subr.mxu0 0.0
    %3729 = vmatpush2.msra.mxu0 0.0
    %3730 = vmatprep.subr.mxu0 0.0
    %3731 = vmatpush2.msra.mxu0 0.0
    %3732 = vmatprep.subr.mxu0 0.0
    %3733 = vmatpush2.msra.mxu0 0.0
    %3734 = vmatprep.subr.mxu0 0.0
    %3735 = vmatpush2.msra.mxu0 0.0
    %3736 = vmatprep.subr.mxu0 0.0
    %3737 = vmatpush2.msra.mxu0 0.0
    %3738 = vmatprep.subr.mxu0 0.0
    %3739 = vmatpush2.msra.mxu0 0.0
    %3740 = vmatprep.subr.mxu0 0.0
    %3741 = vmatpush2.msra.mxu0 0.0
    %3742 = vmatprep.subr.mxu0 0.0
    %3743 = vmatpush2.msra.mxu0 0.0
    %3744 = vmatprep.subr.mxu0 0.0
    %3745 = vmatpush2.msra.mxu0 0.0
    %3746 = vmatprep.mubr.f32.mxu0 0.0
    %3747 = vmatmul.mubr.f32.gmra.mxu0 %v3680
    %v3748 = vpop.f32.mrf.mxu0
    %v3749 = vadd.f32 0.0, %v3748
    %v3750 = vpop.f32.mrf.mxu0
    %3751 = vdwg.mxu0
    %3752 = vrot.lane.b32.xlu0 %v2573, 64
    %v3753 = vpop.permute.xlu0 %3752
    %v3756 = vsel %vm297, %v3589, 0
    %3758 = vmatprep.subr.mxu0 0.0
    %3759 = vmatpush1.msra.mxu0 0.0
    %3760 = vmatprep.subr.mxu0 0.0
    %3761 = vmatpush1.msra.mxu0 0.0
    %3762 = vmatprep.subr.mxu0 0.0
    %3763 = vmatpush1.msra.mxu0 0.0
    %3764 = vmatprep.subr.mxu0 0.0
    %3765 = vmatpush1.msra.mxu0 0.0
    %3766 = vmatprep.subr.mxu0 0.0
    %3767 = vmatpush1.msra.mxu0 0.0
    %3768 = vmatprep.subr.mxu0 0.0
    %3769 = vmatpush1.msra.mxu0 0.0
    %3770 = vmatprep.subr.mxu0 0.0
    %3771 = vmatpush1.msra.mxu0 0.0
    %3772 = vmatprep.subr.mxu0 0.0
    %3773 = vmatpush1.msra.mxu0 0.0
    %3774 = vmatprep.subr.mxu0 0.0
    %3775 = vmatpush1.msra.mxu0 0.0
    %3776 = vmatprep.subr.mxu0 0.0
    %3777 = vmatpush1.msra.mxu0 0.0
    %3778 = vmatprep.subr.mxu0 0.0
    %3779 = vmatpush1.msra.mxu0 0.0
    %3780 = vmatprep.subr.mxu0 0.0
    %3781 = vmatpush1.msra.mxu0 0.0
    %3782 = vmatprep.subr.mxu0 0.0
    %3783 = vmatpush1.msra.mxu0 0.0
    %3784 = vmatprep.subr.mxu0 0.0
    %3785 = vmatpush1.msra.mxu0 0.0
    %3786 = vmatprep.subr.mxu0 0.0
    %3787 = vmatpush1.msra.mxu0 0.0
    %3788 = vmatprep.subr.mxu0 0.0
    %3789 = vmatpush1.msra.mxu0 %v3753
    %3790 = vmatprep.subr.mxu0 0.0
    %3791 = vmatpush2.msra.mxu0 0.0
    %3792 = vmatprep.subr.mxu0 0.0
    %3793 = vmatpush2.msra.mxu0 0.0
    %3794 = vmatprep.subr.mxu0 0.0
    %3795 = vmatpush2.msra.mxu0 0.0
    %3796 = vmatprep.subr.mxu0 0.0
    %3797 = vmatpush2.msra.mxu0 0.0
    %3798 = vmatprep.subr.mxu0 0.0
    %3799 = vmatpush2.msra.mxu0 0.0
    %3800 = vmatprep.subr.mxu0 0.0
    %3801 = vmatpush2.msra.mxu0 0.0
    %3802 = vmatprep.subr.mxu0 0.0
    %3803 = vmatpush2.msra.mxu0 0.0
    %3804 = vmatprep.subr.mxu0 0.0
    %3805 = vmatpush2.msra.mxu0 0.0
    %3806 = vmatprep.subr.mxu0 0.0
    %3807 = vmatpush2.msra.mxu0 0.0
    %3808 = vmatprep.subr.mxu0 0.0
    %3809 = vmatpush2.msra.mxu0 0.0
    %3810 = vmatprep.subr.mxu0 0.0
    %3811 = vmatpush2.msra.mxu0 0.0
    %3812 = vmatprep.subr.mxu0 0.0
    %3813 = vmatpush2.msra.mxu0 0.0
    %3814 = vmatprep.subr.mxu0 0.0
    %3815 = vmatpush2.msra.mxu0 0.0
    %3816 = vmatprep.subr.mxu0 0.0
    %3817 = vmatpush2.msra.mxu0 0.0
    %3818 = vmatprep.subr.mxu0 0.0
    %3819 = vmatpush2.msra.mxu0 0.0
    %3820 = vmatprep.subr.mxu0 0.0
    %3821 = vmatpush2.msra.mxu0 0.0
    %3822 = vmatprep.mubr.f32.mxu0 0.0
    %3823 = vmatmul.mubr.f32.gmra.mxu0 %v3756
    %v3824 = vpop.f32.mrf.mxu0
    %v3825 = vadd.f32 0.0, %v3824
    %v3826 = vpop.f32.mrf.mxu0
    %3827 = vdwg.mxu0
    %3828 = vrot.lane.b32.xlu0 %v2575, 64
    %v3829 = vpop.permute.xlu0 %3828
    %v3832 = vsel %vm297, %v3591, 0
    %3834 = vmatprep.subr.mxu0 0.0
    %3835 = vmatpush1.msra.mxu0 0.0
    %3836 = vmatprep.subr.mxu0 0.0
    %3837 = vmatpush1.msra.mxu0 0.0
    %3838 = vmatprep.subr.mxu0 0.0
    %3839 = vmatpush1.msra.mxu0 0.0
    %3840 = vmatprep.subr.mxu0 0.0
    %3841 = vmatpush1.msra.mxu0 0.0
    %3842 = vmatprep.subr.mxu0 0.0
    %3843 = vmatpush1.msra.mxu0 0.0
    %3844 = vmatprep.subr.mxu0 0.0
    %3845 = vmatpush1.msra.mxu0 0.0
    %3846 = vmatprep.subr.mxu0 0.0
    %3847 = vmatpush1.msra.mxu0 0.0
    %3848 = vmatprep.subr.mxu0 0.0
    %3849 = vmatpush1.msra.mxu0 0.0
    %3850 = vmatprep.subr.mxu0 0.0
    %3851 = vmatpush1.msra.mxu0 0.0
    %3852 = vmatprep.subr.mxu0 0.0
    %3853 = vmatpush1.msra.mxu0 0.0
    %3854 = vmatprep.subr.mxu0 0.0
    %3855 = vmatpush1.msra.mxu0 0.0
    %3856 = vmatprep.subr.mxu0 0.0
    %3857 = vmatpush1.msra.mxu0 0.0
    %3858 = vmatprep.subr.mxu0 0.0
    %3859 = vmatpush1.msra.mxu0 0.0
    %3860 = vmatprep.subr.mxu0 0.0
    %3861 = vmatpush1.msra.mxu0 0.0
    %3862 = vmatprep.subr.mxu0 0.0
    %3863 = vmatpush1.msra.mxu0 0.0
    %3864 = vmatprep.subr.mxu0 0.0
    %3865 = vmatpush1.msra.mxu0 %v3829
    %3866 = vmatprep.subr.mxu0 0.0
    %3867 = vmatpush2.msra.mxu0 0.0
    %3868 = vmatprep.subr.mxu0 0.0
    %3869 = vmatpush2.msra.mxu0 0.0
    %3870 = vmatprep.subr.mxu0 0.0
    %3871 = vmatpush2.msra.mxu0 0.0
    %3872 = vmatprep.subr.mxu0 0.0
    %3873 = vmatpush2.msra.mxu0 0.0
    %3874 = vmatprep.subr.mxu0 0.0
    %3875 = vmatpush2.msra.mxu0 0.0
    %3876 = vmatprep.subr.mxu0 0.0
    %3877 = vmatpush2.msra.mxu0 0.0
    %3878 = vmatprep.subr.mxu0 0.0
    %3879 = vmatpush2.msra.mxu0 0.0
    %3880 = vmatprep.subr.mxu0 0.0
    %3881 = vmatpush2.msra.mxu0 0.0
    %3882 = vmatprep.subr.mxu0 0.0
    %3883 = vmatpush2.msra.mxu0 0.0
    %3884 = vmatprep.subr.mxu0 0.0
    %3885 = vmatpush2.msra.mxu0 0.0
    %3886 = vmatprep.subr.mxu0 0.0
    %3887 = vmatpush2.msra.mxu0 0.0
    %3888 = vmatprep.subr.mxu0 0.0
    %3889 = vmatpush2.msra.mxu0 0.0
    %3890 = vmatprep.subr.mxu0 0.0
    %3891 = vmatpush2.msra.mxu0 0.0
    %3892 = vmatprep.subr.mxu0 0.0
    %3893 = vmatpush2.msra.mxu0 0.0
    %3894 = vmatprep.subr.mxu0 0.0
    %3895 = vmatpush2.msra.mxu0 0.0
    %3896 = vmatprep.subr.mxu0 0.0
    %3897 = vmatpush2.msra.mxu0 0.0
    %3898 = vmatprep.mubr.f32.mxu0 0.0
    %3899 = vmatmul.mubr.f32.gmra.mxu0 %v3832
    %v3900 = vpop.f32.mrf.mxu0
    %v3901 = vadd.f32 0.0, %v3900
    %v3902 = vpop.f32.mrf.mxu0
    %3903 = vdwg.mxu0
    %3904 = vrot.lane.b32.xlu0 %v2577, 64
    %v3905 = vpop.permute.xlu0 %3904
    %v3908 = vsel %vm297, %v3593, 0
    %3910 = vmatprep.subr.mxu0 0.0
    %3911 = vmatpush1.msra.mxu0 0.0
    %3912 = vmatprep.subr.mxu0 0.0
    %3913 = vmatpush1.msra.mxu0 0.0
    %3914 = vmatprep.subr.mxu0 0.0
    %3915 = vmatpush1.msra.mxu0 0.0
    %3916 = vmatprep.subr.mxu0 0.0
    %3917 = vmatpush1.msra.mxu0 0.0
    %3918 = vmatprep.subr.mxu0 0.0
    %3919 = vmatpush1.msra.mxu0 0.0
    %3920 = vmatprep.subr.mxu0 0.0
    %3921 = vmatpush1.msra.mxu0 0.0
    %3922 = vmatprep.subr.mxu0 0.0
    %3923 = vmatpush1.msra.mxu0 0.0
    %3924 = vmatprep.subr.mxu0 0.0
    %3925 = vmatpush1.msra.mxu0 0.0
    %3926 = vmatprep.subr.mxu0 0.0
    %3927 = vmatpush1.msra.mxu0 0.0
    %3928 = vmatprep.subr.mxu0 0.0
    %3929 = vmatpush1.msra.mxu0 0.0
    %3930 = vmatprep.subr.mxu0 0.0
    %3931 = vmatpush1.msra.mxu0 0.0
    %3932 = vmatprep.subr.mxu0 0.0
    %3933 = vmatpush1.msra.mxu0 0.0
    %3934 = vmatprep.subr.mxu0 0.0
    %3935 = vmatpush1.msra.mxu0 0.0
    %3936 = vmatprep.subr.mxu0 0.0
    %3937 = vmatpush1.msra.mxu0 0.0
    %3938 = vmatprep.subr.mxu0 0.0
    %3939 = vmatpush1.msra.mxu0 0.0
    %3940 = vmatprep.subr.mxu0 0.0
    %3941 = vmatpush1.msra.mxu0 %v3905
    %3942 = vmatprep.subr.mxu0 0.0
    %3943 = vmatpush2.msra.mxu0 0.0
    %3944 = vmatprep.subr.mxu0 0.0
    %3945 = vmatpush2.msra.mxu0 0.0
    %3946 = vmatprep.subr.mxu0 0.0
    %3947 = vmatpush2.msra.mxu0 0.0
    %3948 = vmatprep.subr.mxu0 0.0
    %3949 = vmatpush2.msra.mxu0 0.0
    %3950 = vmatprep.subr.mxu0 0.0
    %3951 = vmatpush2.msra.mxu0 0.0
    %3952 = vmatprep.subr.mxu0 0.0
    %3953 = vmatpush2.msra.mxu0 0.0
    %3954 = vmatprep.subr.mxu0 0.0
    %3955 = vmatpush2.msra.mxu0 0.0
    %3956 = vmatprep.subr.mxu0 0.0
    %3957 = vmatpush2.msra.mxu0 0.0
    %3958 = vmatprep.subr.mxu0 0.0
    %3959 = vmatpush2.msra.mxu0 0.0
    %3960 = vmatprep.subr.mxu0 0.0
    %3961 = vmatpush2.msra.mxu0 0.0
    %3962 = vmatprep.subr.mxu0 0.0
    %3963 = vmatpush2.msra.mxu0 0.0
    %3964 = vmatprep.subr.mxu0 0.0
    %3965 = vmatpush2.msra.mxu0 0.0
    %3966 = vmatprep.subr.mxu0 0.0
    %3967 = vmatpush2.msra.mxu0 0.0
    %3968 = vmatprep.subr.mxu0 0.0
    %3969 = vmatpush2.msra.mxu0 0.0
    %3970 = vmatprep.subr.mxu0 0.0
    %3971 = vmatpush2.msra.mxu0 0.0
    %3972 = vmatprep.subr.mxu0 0.0
    %3973 = vmatpush2.msra.mxu0 0.0
    %3974 = vmatprep.mubr.f32.mxu0 0.0
    %3975 = vmatmul.mubr.f32.gmra.mxu0 %v3908
    %v3976 = vpop.f32.mrf.mxu0
    %v3977 = vadd.f32 0.0, %v3976
    %v3978 = vpop.f32.mrf.mxu0
    %3979 = vdwg.mxu0
    %3980 = vrot.lane.b32.xlu0 %v2579, 64
    %v3981 = vpop.permute.xlu0 %3980
    %v3984 = vsel %vm297, %v3595, 0
    %3986 = vmatprep.subr.mxu0 0.0
    %3987 = vmatpush1.msra.mxu0 0.0
    %3988 = vmatprep.subr.mxu0 0.0
    %3989 = vmatpush1.msra.mxu0 0.0
    %3990 = vmatprep.subr.mxu0 0.0
    %3991 = vmatpush1.msra.mxu0 0.0
    %3992 = vmatprep.subr.mxu0 0.0
    %3993 = vmatpush1.msra.mxu0 0.0
    %3994 = vmatprep.subr.mxu0 0.0
    %3995 = vmatpush1.msra.mxu0 0.0
    %3996 = vmatprep.subr.mxu0 0.0
    %3997 = vmatpush1.msra.mxu0 0.0
    %3998 = vmatprep.subr.mxu0 0.0
    %3999 = vmatpush1.msra.mxu0 0.0
    %4000 = vmatprep.subr.mxu0 0.0
    %4001 = vmatpush1.msra.mxu0 0.0
    %4002 = vmatprep.subr.mxu0 0.0
    %4003 = vmatpush1.msra.mxu0 0.0
    %4004 = vmatprep.subr.mxu0 0.0
    %4005 = vmatpush1.msra.mxu0 0.0
    %4006 = vmatprep.subr.mxu0 0.0
    %4007 = vmatpush1.msra.mxu0 0.0
    %4008 = vmatprep.subr.mxu0 0.0
    %4009 = vmatpush1.msra.mxu0 0.0
    %4010 = vmatprep.subr.mxu0 0.0
    %4011 = vmatpush1.msra.mxu0 0.0
    %4012 = vmatprep.subr.mxu0 0.0
    %4013 = vmatpush1.msra.mxu0 0.0
    %4014 = vmatprep.subr.mxu0 0.0
    %4015 = vmatpush1.msra.mxu0 0.0
    %4016 = vmatprep.subr.mxu0 0.0
    %4017 = vmatpush1.msra.mxu0 %v3981
    %4018 = vmatprep.subr.mxu0 0.0
    %4019 = vmatpush2.msra.mxu0 0.0
    %4020 = vmatprep.subr.mxu0 0.0
    %4021 = vmatpush2.msra.mxu0 0.0
    %4022 = vmatprep.subr.mxu0 0.0
    %4023 = vmatpush2.msra.mxu0 0.0
    %4024 = vmatprep.subr.mxu0 0.0
    %4025 = vmatpush2.msra.mxu0 0.0
    %4026 = vmatprep.subr.mxu0 0.0
    %4027 = vmatpush2.msra.mxu0 0.0
    %4028 = vmatprep.subr.mxu0 0.0
    %4029 = vmatpush2.msra.mxu0 0.0
    %4030 = vmatprep.subr.mxu0 0.0
    %4031 = vmatpush2.msra.mxu0 0.0
    %4032 = vmatprep.subr.mxu0 0.0
    %4033 = vmatpush2.msra.mxu0 0.0
    %4034 = vmatprep.subr.mxu0 0.0
    %4035 = vmatpush2.msra.mxu0 0.0
    %4036 = vmatprep.subr.mxu0 0.0
    %4037 = vmatpush2.msra.mxu0 0.0
    %4038 = vmatprep.subr.mxu0 0.0
    %4039 = vmatpush2.msra.mxu0 0.0
    %4040 = vmatprep.subr.mxu0 0.0
    %4041 = vmatpush2.msra.mxu0 0.0
    %4042 = vmatprep.subr.mxu0 0.0
    %4043 = vmatpush2.msra.mxu0 0.0
    %4044 = vmatprep.subr.mxu0 0.0
    %4045 = vmatpush2.msra.mxu0 0.0
    %4046 = vmatprep.subr.mxu0 0.0
    %4047 = vmatpush2.msra.mxu0 0.0
    %4048 = vmatprep.subr.mxu0 0.0
    %4049 = vmatpush2.msra.mxu0 0.0
    %4050 = vmatprep.mubr.f32.mxu0 0.0
    %4051 = vmatmul.mubr.f32.gmra.mxu0 %v3984
    %v4052 = vpop.f32.mrf.mxu0
    %v4053 = vadd.f32 0.0, %v4052
    %v4054 = vpop.f32.mrf.mxu0
    %4055 = vdwg.mxu0
    %4056 = vrot.lane.b32.xlu0 %v2581, 64
    %v4057 = vpop.permute.xlu0 %4056
    %v4060 = vsel %vm297, %v3597, 0
    %4062 = vmatprep.subr.mxu0 0.0
    %4063 = vmatpush1.msra.mxu0 0.0
    %4064 = vmatprep.subr.mxu0 0.0
    %4065 = vmatpush1.msra.mxu0 0.0
    %4066 = vmatprep.subr.mxu0 0.0
    %4067 = vmatpush1.msra.mxu0 0.0
    %4068 = vmatprep.subr.mxu0 0.0
    %4069 = vmatpush1.msra.mxu0 0.0
    %4070 = vmatprep.subr.mxu0 0.0
    %4071 = vmatpush1.msra.mxu0 0.0
    %4072 = vmatprep.subr.mxu0 0.0
    %4073 = vmatpush1.msra.mxu0 0.0
    %4074 = vmatprep.subr.mxu0 0.0
    %4075 = vmatpush1.msra.mxu0 0.0
    %4076 = vmatprep.subr.mxu0 0.0
    %4077 = vmatpush1.msra.mxu0 0.0
    %4078 = vmatprep.subr.mxu0 0.0
    %4079 = vmatpush1.msra.mxu0 0.0
    %4080 = vmatprep.subr.mxu0 0.0
    %4081 = vmatpush1.msra.mxu0 0.0
    %4082 = vmatprep.subr.mxu0 0.0
    %4083 = vmatpush1.msra.mxu0 0.0
    %4084 = vmatprep.subr.mxu0 0.0
    %4085 = vmatpush1.msra.mxu0 0.0
    %4086 = vmatprep.subr.mxu0 0.0
    %4087 = vmatpush1.msra.mxu0 0.0
    %4088 = vmatprep.subr.mxu0 0.0
    %4089 = vmatpush1.msra.mxu0 0.0
    %4090 = vmatprep.subr.mxu0 0.0
    %4091 = vmatpush1.msra.mxu0 0.0
    %4092 = vmatprep.subr.mxu0 0.0
    %4093 = vmatpush1.msra.mxu0 %v4057
    %4094 = vmatprep.subr.mxu0 0.0
    %4095 = vmatpush2.msra.mxu0 0.0
    %4096 = vmatprep.subr.mxu0 0.0
    %4097 = vmatpush2.msra.mxu0 0.0
    %4098 = vmatprep.subr.mxu0 0.0
    %4099 = vmatpush2.msra.mxu0 0.0
    %4100 = vmatprep.subr.mxu0 0.0
    %4101 = vmatpush2.msra.mxu0 0.0
    %4102 = vmatprep.subr.mxu0 0.0
    %4103 = vmatpush2.msra.mxu0 0.0
    %4104 = vmatprep.subr.mxu0 0.0
    %4105 = vmatpush2.msra.mxu0 0.0
    %4106 = vmatprep.subr.mxu0 0.0
    %4107 = vmatpush2.msra.mxu0 0.0
    %4108 = vmatprep.subr.mxu0 0.0
    %4109 = vmatpush2.msra.mxu0 0.0
    %4110 = vmatprep.subr.mxu0 0.0
    %4111 = vmatpush2.msra.mxu0 0.0
    %4112 = vmatprep.subr.mxu0 0.0
    %4113 = vmatpush2.msra.mxu0 0.0
    %4114 = vmatprep.subr.mxu0 0.0
    %4115 = vmatpush2.msra.mxu0 0.0
    %4116 = vmatprep.subr.mxu0 0.0
    %4117 = vmatpush2.msra.mxu0 0.0
    %4118 = vmatprep.subr.mxu0 0.0
    %4119 = vmatpush2.msra.mxu0 0.0
    %4120 = vmatprep.subr.mxu0 0.0
    %4121 = vmatpush2.msra.mxu0 0.0
    %4122 = vmatprep.subr.mxu0 0.0
    %4123 = vmatpush2.msra.mxu0 0.0
    %4124 = vmatprep.subr.mxu0 0.0
    %4125 = vmatpush2.msra.mxu0 0.0
    %4126 = vmatprep.mubr.f32.mxu0 0.0
    %4127 = vmatmul.mubr.f32.gmra.mxu0 %v4060
    %v4128 = vpop.f32.mrf.mxu0
    %v4129 = vadd.f32 0.0, %v4128
    %v4130 = vpop.f32.mrf.mxu0
    %4131 = vdwg.mxu0
    %4132 = vrot.lane.b32.xlu0 %v2583, 64
    %v4133 = vpop.permute.xlu0 %4132
    %v4136 = vsel %vm297, %v3599, 0
    %4138 = vmatprep.subr.mxu0 0.0
    %4139 = vmatpush1.msra.mxu0 0.0
    %4140 = vmatprep.subr.mxu0 0.0
    %4141 = vmatpush1.msra.mxu0 0.0
    %4142 = vmatprep.subr.mxu0 0.0
    %4143 = vmatpush1.msra.mxu0 0.0
    %4144 = vmatprep.subr.mxu0 0.0
    %4145 = vmatpush1.msra.mxu0 0.0
    %4146 = vmatprep.subr.mxu0 0.0
    %4147 = vmatpush1.msra.mxu0 0.0
    %4148 = vmatprep.subr.mxu0 0.0
    %4149 = vmatpush1.msra.mxu0 0.0
    %4150 = vmatprep.subr.mxu0 0.0
    %4151 = vmatpush1.msra.mxu0 0.0
    %4152 = vmatprep.subr.mxu0 0.0
    %4153 = vmatpush1.msra.mxu0 0.0
    %4154 = vmatprep.subr.mxu0 0.0
    %4155 = vmatpush1.msra.mxu0 0.0
    %4156 = vmatprep.subr.mxu0 0.0
    %4157 = vmatpush1.msra.mxu0 0.0
    %4158 = vmatprep.subr.mxu0 0.0
    %4159 = vmatpush1.msra.mxu0 0.0
    %4160 = vmatprep.subr.mxu0 0.0
    %4161 = vmatpush1.msra.mxu0 0.0
    %4162 = vmatprep.subr.mxu0 0.0
    %4163 = vmatpush1.msra.mxu0 0.0
    %4164 = vmatprep.subr.mxu0 0.0
    %4165 = vmatpush1.msra.mxu0 0.0
    %4166 = vmatprep.subr.mxu0 0.0
    %4167 = vmatpush1.msra.mxu0 0.0
    %4168 = vmatprep.subr.mxu0 0.0
    %4169 = vmatpush1.msra.mxu0 %v4133
    %4170 = vmatprep.subr.mxu0 0.0
    %4171 = vmatpush2.msra.mxu0 0.0
    %4172 = vmatprep.subr.mxu0 0.0
    %4173 = vmatpush2.msra.mxu0 0.0
    %4174 = vmatprep.subr.mxu0 0.0
    %4175 = vmatpush2.msra.mxu0 0.0
    %4176 = vmatprep.subr.mxu0 0.0
    %4177 = vmatpush2.msra.mxu0 0.0
    %4178 = vmatprep.subr.mxu0 0.0
    %4179 = vmatpush2.msra.mxu0 0.0
    %4180 = vmatprep.subr.mxu0 0.0
    %4181 = vmatpush2.msra.mxu0 0.0
    %4182 = vmatprep.subr.mxu0 0.0
    %4183 = vmatpush2.msra.mxu0 0.0
    %4184 = vmatprep.subr.mxu0 0.0
    %4185 = vmatpush2.msra.mxu0 0.0
    %4186 = vmatprep.subr.mxu0 0.0
    %4187 = vmatpush2.msra.mxu0 0.0
    %4188 = vmatprep.subr.mxu0 0.0
    %4189 = vmatpush2.msra.mxu0 0.0
    %4190 = vmatprep.subr.mxu0 0.0
    %4191 = vmatpush2.msra.mxu0 0.0
    %4192 = vmatprep.subr.mxu0 0.0
    %4193 = vmatpush2.msra.mxu0 0.0
    %4194 = vmatprep.subr.mxu0 0.0
    %4195 = vmatpush2.msra.mxu0 0.0
    %4196 = vmatprep.subr.mxu0 0.0
    %4197 = vmatpush2.msra.mxu0 0.0
    %4198 = vmatprep.subr.mxu0 0.0
    %4199 = vmatpush2.msra.mxu0 0.0
    %4200 = vmatprep.subr.mxu0 0.0
    %4201 = vmatpush2.msra.mxu0 0.0
    %4202 = vmatprep.mubr.f32.mxu0 0.0
    %4203 = vmatmul.mubr.f32.gmra.mxu0 %v4136
    %v4204 = vpop.f32.mrf.mxu0
    %v4205 = vadd.f32 0.0, %v4204
    %v4206 = vpop.f32.mrf.mxu0
    %4207 = vdwg.mxu0
    %v4209 = vrot.slane %v3673, 1
    %4210 = vrot.lane.b32.xlu0 %v4209, 8
    %v4211 = vpop.permute.xlu0 %4210
    %v4213 = vrot.slane %v3673, 2
    %4214 = vrot.lane.b32.xlu0 %v4213, 16
    %v4215 = vpop.permute.xlu0 %4214
    %v4217 = vrot.slane %v3673, 3
    %4218 = vrot.lane.b32.xlu0 %v4217, 24
    %v4219 = vpop.permute.xlu0 %4218
    %v4221 = vsel %vm297, %v3673, %v4211
    %v4222 = vsel %vm1935, %v4221, %v4215
    %v4223 = vsel %vm1937, %v4222, %v4219
    %v4225 = vrot.slane %v3825, 1
    %4226 = vrot.lane.b32.xlu0 %v4225, 8
    %v4227 = vpop.permute.xlu0 %4226
    %v4229 = vrot.slane %v3825, 2
    %4230 = vrot.lane.b32.xlu0 %v4229, 16
    %v4231 = vpop.permute.xlu0 %4230
    %v4233 = vrot.slane %v3825, 3
    %4234 = vrot.lane.b32.xlu0 %v4233, 24
    %v4235 = vpop.permute.xlu0 %4234
    %v4237 = vsel %vm297, %v3825, %v4227
    %v4238 = vsel %vm1935, %v4237, %v4231
    %v4239 = vsel %vm1937, %v4238, %v4235
    %v4241 = vrot.slane %v3977, 1
    %4242 = vrot.lane.b32.xlu0 %v4241, 8
    %v4243 = vpop.permute.xlu0 %4242
    %v4245 = vrot.slane %v3977, 2
    %4246 = vrot.lane.b32.xlu0 %v4245, 16
    %v4247 = vpop.permute.xlu0 %4246
    %v4249 = vrot.slane %v3977, 3
    %4250 = vrot.lane.b32.xlu0 %v4249, 24
    %v4251 = vpop.permute.xlu0 %4250
    %v4253 = vsel %vm297, %v3977, %v4243
    %v4254 = vsel %vm1935, %v4253, %v4247
    %v4255 = vsel %vm1937, %v4254, %v4251
    %v4257 = vrot.slane %v4129, 1
    %4258 = vrot.lane.b32.xlu0 %v4257, 8
    %v4259 = vpop.permute.xlu0 %4258
    %v4261 = vrot.slane %v4129, 2
    %4262 = vrot.lane.b32.xlu0 %v4261, 16
    %v4263 = vpop.permute.xlu0 %4262
    %v4265 = vrot.slane %v4129, 3
    %4266 = vrot.lane.b32.xlu0 %v4265, 24
    %v4267 = vpop.permute.xlu0 %4266
    %v4269 = vsel %vm297, %v4129, %v4259
    %v4270 = vsel %vm1935, %v4269, %v4263
    %v4271 = vsel %vm1937, %v4270, %v4267
    %v4273 = vrot.slane %v3749, 1
    %4274 = vrot.lane.b32.xlu0 %v4273, 8
    %v4275 = vpop.permute.xlu0 %4274
    %v4277 = vrot.slane %v3749, 2
    %4278 = vrot.lane.b32.xlu0 %v4277, 16
    %v4279 = vpop.permute.xlu0 %4278
    %v4281 = vrot.slane %v3749, 3
    %4282 = vrot.lane.b32.xlu0 %v4281, 24
    %v4283 = vpop.permute.xlu0 %4282
    %v4285 = vsel %vm297, %v3749, %v4275
    %v4286 = vsel %vm1935, %v4285, %v4279
    %v4287 = vsel %vm1937, %v4286, %v4283
    %v4289 = vrot.slane %v3901, 1
    %4290 = vrot.lane.b32.xlu0 %v4289, 8
    %v4291 = vpop.permute.xlu0 %4290
    %v4293 = vrot.slane %v3901, 2
    %4294 = vrot.lane.b32.xlu0 %v4293, 16
    %v4295 = vpop.permute.xlu0 %4294
    %v4297 = vrot.slane %v3901, 3
    %4298 = vrot.lane.b32.xlu0 %v4297, 24
    %v4299 = vpop.permute.xlu0 %4298
    %v4301 = vsel %vm297, %v3901, %v4291
    %v4302 = vsel %vm1935, %v4301, %v4295
    %v4303 = vsel %vm1937, %v4302, %v4299
    %v4305 = vrot.slane %v4053, 1
    %4306 = vrot.lane.b32.xlu0 %v4305, 8
    %v4307 = vpop.permute.xlu0 %4306
    %v4309 = vrot.slane %v4053, 2
    %4310 = vrot.lane.b32.xlu0 %v4309, 16
    %v4311 = vpop.permute.xlu0 %4310
    %v4313 = vrot.slane %v4053, 3
    %4314 = vrot.lane.b32.xlu0 %v4313, 24
    %v4315 = vpop.permute.xlu0 %4314
    %v4317 = vsel %vm297, %v4053, %v4307
    %v4318 = vsel %vm1935, %v4317, %v4311
    %v4319 = vsel %vm1937, %v4318, %v4315
    %v4321 = vrot.slane %v4205, 1
    %4322 = vrot.lane.b32.xlu0 %v4321, 8
    %v4323 = vpop.permute.xlu0 %4322
    %v4325 = vrot.slane %v4205, 2
    %4326 = vrot.lane.b32.xlu0 %v4325, 16
    %v4327 = vpop.permute.xlu0 %4326
    %v4329 = vrot.slane %v4205, 3
    %4330 = vrot.lane.b32.xlu0 %v4329, 24
    %v4331 = vpop.permute.xlu0 %4330
    %v4333 = vsel %vm297, %v4205, %v4323
    %v4334 = vsel %vm1935, %v4333, %v4327
    %v4335 = vsel %vm1937, %v4334, %v4331
    %v4337 = vrot.slane %v4223, 3
    %v4340 = vrot.slane %v4239, 6
    %v4342 = vrot.slane %v4239, 1
    %v4345 = vrot.slane %v4255, 4
    %v4347 = vrot.slane %v4255, 7
    %v4350 = vrot.slane %v4271, 2
    %v4352 = vrot.slane %v4271, 5
    %v4355 = vrot.slane %v4287, 3
    %v4358 = vrot.slane %v4303, 6
    %v4360 = vrot.slane %v4303, 1
    %v4363 = vrot.slane %v4319, 4
    %v4365 = vrot.slane %v4319, 7
    %v4368 = vrot.slane %v4335, 2
    %v4370 = vrot.slane %v4335, 5
    %v4372 = vsel %vm2087, %v4223, %v4337
    %v4373 = vsel %vm2089, %v4372, %v4340
    %v4374 = vsel %vm2091, %v4373, %v4342
    %v4375 = vsel %vm2093, %v4374, %v4345
    %v4376 = vsel %vm2095, %v4375, %v4347
    %v4377 = vsel %vm2097, %v4376, %v4350
    %v4378 = vsel %vm2099, %v4377, %v4352
    %v4379 = vsel %vm2087, %v4287, %v4355
    %v4380 = vsel %vm2089, %v4379, %v4358
    %v4381 = vsel %vm2091, %v4380, %v4360
    %v4382 = vsel %vm2093, %v4381, %v4363
    %v4383 = vsel %vm2095, %v4382, %v4365
    %v4384 = vsel %vm2097, %v4383, %v4368
    %v4385 = vsel %vm2099, %v4384, %v4370
    %v4386 = vld [vmem:[%s15] sm:$0xff]
    %v4387 = vld [vmem:[%s15 + $0x8] sm:$0xff]
    %v4388 = vld [vmem:[%s15 + $0x10] sm:$0xff]
    %v4389 = vld [vmem:[%s15 + $0x18] sm:$0xff]
    %v4390 = vld [vmem:[%s16] sm:$0x1]
    %v4392 = vlaneseq
    %v4393 = vshrl.u32 %v4392, 7
    %v4394 = vsub.s32 0, %v4393
    %v4395 = vrot.slane %v4390, %v4394
    %v4398 = vsel %vm199, %v4378, 0
    %v4401 = vsel %vm199, %v4385, 0
    %4403 = vmatprep.subr.mxu0 0.0
    %4404 = vmatpush1.msra.mxu0 0.0
    %4405 = vmatprep.subr.mxu0 0.0
    %4406 = vmatpush1.msra.mxu0 0.0
    %4407 = vmatprep.subr.mxu0 0.0
    %4408 = vmatpush1.msra.mxu0 0.0
    %4409 = vmatprep.subr.mxu0 0.0
    %4410 = vmatpush1.msra.mxu0 0.0
    %4411 = vmatprep.subr.mxu0 0.0
    %4412 = vmatpush1.msra.mxu0 0.0
    %4413 = vmatprep.subr.mxu0 0.0
    %4414 = vmatpush1.msra.mxu0 0.0
    %4415 = vmatprep.subr.mxu0 0.0
    %4416 = vmatpush1.msra.mxu0 0.0
    %4417 = vmatprep.subr.mxu0 0.0
    %4418 = vmatpush1.msra.mxu0 0.0
    %4419 = vmatprep.subr.mxu0 0.0
    %4420 = vmatpush1.msra.mxu0 0.0
    %4421 = vmatprep.subr.mxu0 0.0
    %4422 = vmatpush1.msra.mxu0 0.0
    %4423 = vmatprep.subr.mxu0 0.0
    %4424 = vmatpush1.msra.mxu0 0.0
    %4425 = vmatprep.subr.mxu0 0.0
    %4426 = vmatpush1.msra.mxu0 0.0
    %4427 = vmatprep.subr.mxu0 0.0
    %4428 = vmatpush1.msra.mxu0 %v4389
    %4429 = vmatprep.subr.mxu0 0.0
    %4430 = vmatpush1.msra.mxu0 %v4388
    %4431 = vmatprep.subr.mxu0 0.0
    %4432 = vmatpush1.msra.mxu0 %v4387
    %4433 = vmatprep.subr.mxu0 0.0
    %4434 = vmatpush1.msra.mxu0 %v4386
    %4435 = vmatprep.subr.mxu0 0.0
    %4436 = vmatpush2.msra.mxu0 0.0
    %4437 = vmatprep.subr.mxu0 0.0
    %4438 = vmatpush2.msra.mxu0 0.0
    %4439 = vmatprep.subr.mxu0 0.0
    %4440 = vmatpush2.msra.mxu0 0.0
    %4441 = vmatprep.subr.mxu0 0.0
    %4442 = vmatpush2.msra.mxu0 0.0
    %4443 = vmatprep.subr.mxu0 0.0
    %4444 = vmatpush2.msra.mxu0 0.0
    %4445 = vmatprep.subr.mxu0 0.0
    %4446 = vmatpush2.msra.mxu0 0.0
    %4447 = vmatprep.subr.mxu0 0.0
    %4448 = vmatpush2.msra.mxu0 0.0
    %4449 = vmatprep.subr.mxu0 0.0
    %4450 = vmatpush2.msra.mxu0 0.0
    %4451 = vmatprep.subr.mxu0 0.0
    %4452 = vmatpush2.msra.mxu0 0.0
    %4453 = vmatprep.subr.mxu0 0.0
    %4454 = vmatpush2.msra.mxu0 0.0
    %4455 = vmatprep.subr.mxu0 0.0
    %4456 = vmatpush2.msra.mxu0 0.0
    %4457 = vmatprep.subr.mxu0 0.0
    %4458 = vmatpush2.msra.mxu0 0.0
    %4459 = vmatprep.subr.mxu0 0.0
    %4460 = vmatpush2.msra.mxu0 0.0
    %4461 = vmatprep.subr.mxu0 0.0
    %4462 = vmatpush2.msra.mxu0 0.0
    %4463 = vmatprep.subr.mxu0 0.0
    %4464 = vmatpush2.msra.mxu0 0.0
    %4465 = vmatprep.subr.mxu0 0.0
    %4466 = vmatpush2.msra.mxu0 0.0
    %4467 = vmatprep.mubr.f32.mxu0 0.0
    %4468 = vmatmul.mubr.f32.gmra.mxu0 %v4398
    %v4469 = vpop.f32.mrf.mxu0
    %v4470 = vadd.f32 %v4395, %v4469
    %v4471 = vpop.f32.mrf.mxu0
    %4472 = vmatprep.mubr.f32.mxu0 0.0
    %4473 = vmatmul.mubr.f32.gmra.mxu0 %v4401
    %v4474 = vpop.f32.mrf.mxu0
    %v4475 = vadd.f32 %v4395, %v4474
    %v4476 = vpop.f32.mrf.mxu0
    %4477 = vdwg.mxu0
    %v4478 = vadd.f32 %v4470, %v2483
    %v4479 = vadd.f32 %v4475, %v2484
    %v4480 = vld [vmem:[%s17] sm:$0x1]
    %v4481 = vld [vmem:[%s18] sm:$0x1]
    %v4482 = vsel %vm199, %v4478, 0.0
    %4483 = vadd.xlane.f32.xlu0 %v4482
    %v4484 = vpop.xlane.xlu0 %4483
    %v4485 = vsel %vm199, %v4479, 0.0
    %4486 = vadd.xlane.f32.xlu0 %v4485
    %v4487 = vpop.xlane.xlu0 %4486
    %v4488 = vmul.f32 %v4484, %v2210
    %v4489 = vmul.f32 %v4487, %v2210
    %v4490 = vsub.f32 %v4478, %v4488
    %v4491 = vsub.f32 %v4479, %v4489
    %v4492 = vmul.f32 %v4490, %v4490
    %v4493 = vmul.f32 %v4491, %v4491
    %v4494 = vsel %vm199, %v4492, 0.0
    %4495 = vadd.xlane.f32.xlu0 %v4494
    %v4496 = vpop.xlane.xlu0 %4495
    %v4497 = vsel %vm199, %v4493, 0.0
    %4498 = vadd.xlane.f32.xlu0 %v4497
    %v4499 = vpop.xlane.xlu0 %4498
    %v4500 = vmul.f32 %v4496, %v2210
    %v4501 = vmul.f32 %v4499, %v2210
    %v4502 = vadd.f32 %v4500, 1e-05
    %v4503 = vadd.f32 %v4501, 1e-05
    %v4504 = vrsqrt.pop %v4502
    %v4505 = vrsqrt.pop %v4503
    %v4506 = vmul.f32 %v4490, %v4504
    %v4507 = vmul.f32 %v4491, %v4505
    %v4509 = vlaneseq
    %v4510 = vshrl.u32 %v4509, 7
    %v4511 = vsub.s32 0, %v4510
    %v4512 = vrot.slane %v4480, %v4511
    %v4514 = vmul.f32 %v4506, %v4512
    %v4515 = vmul.f32 %v4507, %v4512
    %v4517 = vlaneseq
    %v4518 = vshrl.u32 %v4517, 7
    %v4519 = vsub.s32 0, %v4518
    %v4520 = vrot.slane %v4481, %v4519
    %v4522 = vadd.f32 %v4514, %v4520
    %v4523 = vadd.f32 %v4515, %v4520
    %v4524 = vld [vmem:[%s19] sm:$0xff]
    %v4525 = vld [vmem:[%s19 + $0x8] sm:$0xff]
    %v4526 = vld [vmem:[%s19 + $0x10] sm:$0xff]
    %v4527 = vld [vmem:[%s19 + $0x18] sm:$0xff]
    %v4528 = vld [vmem:[%s20] sm:$0x1]
    %v4530 = vlaneseq
    %v4531 = vshrl.u32 %v4530, 7
    %v4532 = vsub.s32 0, %v4531
    %v4533 = vrot.slane %v4528, %v4532
    %v4536 = vsel %vm199, %v4522, 0
    %v4539 = vsel %vm199, %v4523, 0
    %4541 = vmatprep.subr.mxu0 0.0
    %4542 = vmatpush1.msra.mxu0 0.0
    %4543 = vmatprep.subr.mxu0 0.0
    %4544 = vmatpush1.msra.mxu0 0.0
    %4545 = vmatprep.subr.mxu0 0.0
    %4546 = vmatpush1.msra.mxu0 0.0
    %4547 = vmatprep.subr.mxu0 0.0
    %4548 = vmatpush1.msra.mxu0 0.0
    %4549 = vmatprep.subr.mxu0 0.0
    %4550 = vmatpush1.msra.mxu0 0.0
    %4551 = vmatprep.subr.mxu0 0.0
    %4552 = vmatpush1.msra.mxu0 0.0
    %4553 = vmatprep.subr.mxu0 0.0
    %4554 = vmatpush1.msra.mxu0 0.0
    %4555 = vmatprep.subr.mxu0 0.0
    %4556 = vmatpush1.msra.mxu0 0.0
    %4557 = vmatprep.subr.mxu0 0.0
    %4558 = vmatpush1.msra.mxu0 0.0
    %4559 = vmatprep.subr.mxu0 0.0
    %4560 = vmatpush1.msra.mxu0 0.0
    %4561 = vmatprep.subr.mxu0 0.0
    %4562 = vmatpush1.msra.mxu0 0.0
    %4563 = vmatprep.subr.mxu0 0.0
    %4564 = vmatpush1.msra.mxu0 0.0
    %4565 = vmatprep.subr.mxu0 0.0
    %4566 = vmatpush1.msra.mxu0 %v4527
    %4567 = vmatprep.subr.mxu0 0.0
    %4568 = vmatpush1.msra.mxu0 %v4526
    %4569 = vmatprep.subr.mxu0 0.0
    %4570 = vmatpush1.msra.mxu0 %v4525
    %4571 = vmatprep.subr.mxu0 0.0
    %4572 = vmatpush1.msra.mxu0 %v4524
    %4573 = vmatprep.subr.mxu0 0.0
    %4574 = vmatpush2.msra.mxu0 0.0
    %4575 = vmatprep.subr.mxu0 0.0
    %4576 = vmatpush2.msra.mxu0 0.0
    %4577 = vmatprep.subr.mxu0 0.0
    %4578 = vmatpush2.msra.mxu0 0.0
    %4579 = vmatprep.subr.mxu0 0.0
    %4580 = vmatpush2.msra.mxu0 0.0
    %4581 = vmatprep.subr.mxu0 0.0
    %4582 = vmatpush2.msra.mxu0 0.0
    %4583 = vmatprep.subr.mxu0 0.0
    %4584 = vmatpush2.msra.mxu0 0.0
    %4585 = vmatprep.subr.mxu0 0.0
    %4586 = vmatpush2.msra.mxu0 0.0
    %4587 = vmatprep.subr.mxu0 0.0
    %4588 = vmatpush2.msra.mxu0 0.0
    %4589 = vmatprep.subr.mxu0 0.0
    %4590 = vmatpush2.msra.mxu0 0.0
    %4591 = vmatprep.subr.mxu0 0.0
    %4592 = vmatpush2.msra.mxu0 0.0
    %4593 = vmatprep.subr.mxu0 0.0
    %4594 = vmatpush2.msra.mxu0 0.0
    %4595 = vmatprep.subr.mxu0 0.0
    %4596 = vmatpush2.msra.mxu0 0.0
    %4597 = vmatprep.subr.mxu0 0.0
    %4598 = vmatpush2.msra.mxu0 0.0
    %4599 = vmatprep.subr.mxu0 0.0
    %4600 = vmatpush2.msra.mxu0 0.0
    %4601 = vmatprep.subr.mxu0 0.0
    %4602 = vmatpush2.msra.mxu0 0.0
    %4603 = vmatprep.subr.mxu0 0.0
    %4604 = vmatpush2.msra.mxu0 0.0
    %4605 = vmatprep.mubr.f32.mxu0 0.0
    %4606 = vmatmul.mubr.f32.gmra.mxu0 %v4536
    %v4607 = vpop.f32.mrf.mxu0
    %v4608 = vadd.f32 %v4533, %v4607
    %v4609 = vpop.f32.mrf.mxu0
    %4610 = vmatprep.mubr.f32.mxu0 0.0
    %4611 = vmatmul.mubr.f32.gmra.mxu0 %v4539
    %v4612 = vpop.f32.mrf.mxu0
    %v4613 = vadd.f32 %v4533, %v4612
    %v4614 = vpop.f32.mrf.mxu0
    %4615 = vdwg.mxu0
    %v4616 = vmax.f32 %v4608, 0.0
    %v4617 = vmax.f32 %v4613, 0.0
    %v4618 = vld [vmem:[%s21] sm:$0xff]
    %v4619 = vld [vmem:[%s21 + $0x8] sm:$0xff]
    %v4620 = vld [vmem:[%s21 + $0x10] sm:$0xff]
    %v4621 = vld [vmem:[%s21 + $0x18] sm:$0xff]
    %v4622 = vld [vmem:[%s21 + $0x20] sm:$0xff]
    %v4623 = vld [vmem:[%s21 + $0x28] sm:$0xff]
    %v4624 = vld [vmem:[%s21 + $0x30] sm:$0xff]
    %v4625 = vld [vmem:[%s21 + $0x38] sm:$0xff]
    %v4626 = vld [vmem:[%s21 + $0x40] sm:$0xff]
    %v4627 = vld [vmem:[%s21 + $0x48] sm:$0xff]
    %v4628 = vld [vmem:[%s21 + $0x50] sm:$0xff]
    %v4629 = vld [vmem:[%s21 + $0x58] sm:$0xff]
    %v4630 = vld [vmem:[%s21 + $0x60] sm:$0xff]
    %v4631 = vld [vmem:[%s21 + $0x68] sm:$0xff]
    %v4632 = vld [vmem:[%s21 + $0x70] sm:$0xff]
    %v4633 = vld [vmem:[%s21 + $0x78] sm:$0xff]
    %v4634 = vld [vmem:[%s22] sm:$0x1]
    %v4636 = vlaneseq
    %v4637 = vshrl.u32 %v4636, 7
    %v4638 = vsub.s32 0, %v4637
    %v4639 = vrot.slane %v4634, %v4638
    %4641 = vmatprep.subr.mxu0 0.0
    %4642 = vmatpush1.msra.mxu0 %v4633
    %4643 = vmatprep.subr.mxu0 0.0
    %4644 = vmatpush1.msra.mxu0 %v4632
    %4645 = vmatprep.subr.mxu0 0.0
    %4646 = vmatpush1.msra.mxu0 %v4631
    %4647 = vmatprep.subr.mxu0 0.0
    %4648 = vmatpush1.msra.mxu0 %v4630
    %4649 = vmatprep.subr.mxu0 0.0
    %4650 = vmatpush1.msra.mxu0 %v4629
    %4651 = vmatprep.subr.mxu0 0.0
    %4652 = vmatpush1.msra.mxu0 %v4628
    %4653 = vmatprep.subr.mxu0 0.0
    %4654 = vmatpush1.msra.mxu0 %v4627
    %4655 = vmatprep.subr.mxu0 0.0
    %4656 = vmatpush1.msra.mxu0 %v4626
    %4657 = vmatprep.subr.mxu0 0.0
    %4658 = vmatpush1.msra.mxu0 %v4625
    %4659 = vmatprep.subr.mxu0 0.0
    %4660 = vmatpush1.msra.mxu0 %v4624
    %4661 = vmatprep.subr.mxu0 0.0
    %4662 = vmatpush1.msra.mxu0 %v4623
    %4663 = vmatprep.subr.mxu0 0.0
    %4664 = vmatpush1.msra.mxu0 %v4622
    %4665 = vmatprep.subr.mxu0 0.0
    %4666 = vmatpush1.msra.mxu0 %v4621
    %4667 = vmatprep.subr.mxu0 0.0
    %4668 = vmatpush1.msra.mxu0 %v4620
    %4669 = vmatprep.subr.mxu0 0.0
    %4670 = vmatpush1.msra.mxu0 %v4619
    %4671 = vmatprep.subr.mxu0 0.0
    %4672 = vmatpush1.msra.mxu0 %v4618
    %4673 = vmatprep.subr.mxu0 0.0
    %4674 = vmatpush2.msra.mxu0 0.0
    %4675 = vmatprep.subr.mxu0 0.0
    %4676 = vmatpush2.msra.mxu0 0.0
    %4677 = vmatprep.subr.mxu0 0.0
    %4678 = vmatpush2.msra.mxu0 0.0
    %4679 = vmatprep.subr.mxu0 0.0
    %4680 = vmatpush2.msra.mxu0 0.0
    %4681 = vmatprep.subr.mxu0 0.0
    %4682 = vmatpush2.msra.mxu0 0.0
    %4683 = vmatprep.subr.mxu0 0.0
    %4684 = vmatpush2.msra.mxu0 0.0
    %4685 = vmatprep.subr.mxu0 0.0
    %4686 = vmatpush2.msra.mxu0 0.0
    %4687 = vmatprep.subr.mxu0 0.0
    %4688 = vmatpush2.msra.mxu0 0.0
    %4689 = vmatprep.subr.mxu0 0.0
    %4690 = vmatpush2.msra.mxu0 0.0
    %4691 = vmatprep.subr.mxu0 0.0
    %4692 = vmatpush2.msra.mxu0 0.0
    %4693 = vmatprep.subr.mxu0 0.0
    %4694 = vmatpush2.msra.mxu0 0.0
    %4695 = vmatprep.subr.mxu0 0.0
    %4696 = vmatpush2.msra.mxu0 0.0
    %4697 = vmatprep.subr.mxu0 0.0
    %4698 = vmatpush2.msra.mxu0 0.0
    %4699 = vmatprep.subr.mxu0 0.0
    %4700 = vmatpush2.msra.mxu0 0.0
    %4701 = vmatprep.subr.mxu0 0.0
    %4702 = vmatpush2.msra.mxu0 0.0
    %4703 = vmatprep.subr.mxu0 0.0
    %4704 = vmatpush2.msra.mxu0 0.0
    %4705 = vmatprep.mubr.f32.mxu0 0.0
    %4706 = vmatmul.mubr.f32.gmra.mxu0 %v4616
    %v4707 = vpop.f32.mrf.mxu0
    %v4708 = vadd.f32 %v4639, %v4707
    %v4709 = vpop.f32.mrf.mxu0
    %4710 = vmatprep.mubr.f32.mxu0 0.0
    %4711 = vmatmul.mubr.f32.gmra.mxu0 %v4617
    %v4712 = vpop.f32.mrf.mxu0
    %v4713 = vadd.f32 %v4639, %v4712
    %v4714 = vpop.f32.mrf.mxu0
    %4715 = vdwg.mxu0
    %v4716 = vadd.f32 %v4708, %v4522
    %v4717 = vadd.f32 %v4713, %v4523
    %v4718 = vld [vmem:[%s23] sm:$0x1]
    %v4719 = vld [vmem:[%s24] sm:$0x1]
    %v4720 = vsel %vm199, %v4716, 0.0
    %4721 = vadd.xlane.f32.xlu0 %v4720
    %v4722 = vpop.xlane.xlu0 %4721
    %v4723 = vsel %vm199, %v4717, 0.0
    %4724 = vadd.xlane.f32.xlu0 %v4723
    %v4725 = vpop.xlane.xlu0 %4724
    %v4726 = vmul.f32 %v4722, %v2210
    %v4727 = vmul.f32 %v4725, %v2210
    %v4728 = vsub.f32 %v4716, %v4726
    %v4729 = vsub.f32 %v4717, %v4727
    %v4730 = vmul.f32 %v4728, %v4728
    %v4731 = vmul.f32 %v4729, %v4729
    %v4732 = vsel %vm199, %v4730, 0.0
    %4733 = vadd.xlane.f32.xlu0 %v4732
    %v4734 = vpop.xlane.xlu0 %4733
    %v4735 = vsel %vm199, %v4731, 0.0
    %4736 = vadd.xlane.f32.xlu0 %v4735
    %v4737 = vpop.xlane.xlu0 %4736
    %v4738 = vmul.f32 %v4734, %v2210
    %v4739 = vmul.f32 %v4737, %v2210
    %v4740 = vadd.f32 %v4738, 1e-05
    %v4741 = vadd.f32 %v4739, 1e-05
    %v4742 = vrsqrt.pop %v4740
    %v4743 = vrsqrt.pop %v4741
    %v4744 = vmul.f32 %v4728, %v4742
    %v4745 = vmul.f32 %v4729, %v4743
    %v4747 = vlaneseq
    %v4748 = vshrl.u32 %v4747, 7
    %v4749 = vsub.s32 0, %v4748
    %v4750 = vrot.slane %v4718, %v4749
    %v4752 = vmul.f32 %v4744, %v4750
    %v4753 = vmul.f32 %v4745, %v4750
    %v4755 = vlaneseq
    %v4756 = vshrl.u32 %v4755, 7
    %v4757 = vsub.s32 0, %v4756
    %v4758 = vrot.slane %v4719, %v4757
    %v4760 = vadd.f32 %v4752, %v4758
    %v4761 = vadd.f32 %v4753, %v4758
    %v4762 = vsel %vm199, %v4760, 0.0
    %v4763 = vrot.slane %v4762, 4
    %v4764 = vadd.f32 %v4762, %v4763
    %v4765 = vrot.slane %v4764, 2
    %v4766 = vadd.f32 %v4764, %v4765
    %v4767 = vrot.slane %v4766, 1
    %v4768 = vadd.f32 %v4766, %v4767
    %v4769 = vsel %vm199, %v4761, 0.0
    %v4770 = vrot.slane %v4769, 4
    %v4771 = vadd.f32 %v4769, %v4770
    %v4772 = vrot.slane %v4771, 2
    %v4773 = vadd.f32 %v4771, %v4772
    %v4774 = vrot.slane %v4773, 1
    %v4775 = vadd.f32 %v4773, %v4774
    %v4776 = vrcp.pop 8.0
    %v4777 = vmul.f32 %v4768, %v4776
    %v4778 = vmul.f32 %v4775, %v4776
    %v4779 = vld [vmem:[%s25] sm:$0xff]
    %v4780 = vld [vmem:[%s25 + $0x8] sm:$0xff]
    %v4781 = vld [vmem:[%s25 + $0x10] sm:$0xff]
    %v4782 = vld [vmem:[%s25 + $0x18] sm:$0xff]
    %v4783 = vld [vmem:[%s26] sm:$0x1]
    %v4785 = vlaneseq
    %v4786 = vshrl.u32 %v4785, 7
    %v4787 = vsub.s32 0, %v4786
    %v4788 = vrot.slane %v4783, %v4787
    %vm4792 = vcmask 1041409
    %v4793 = vsel %vm4792, %v4778, %v4777
    %v4794 = vsel %vm199, %v4793, 0
    %4796 = vmatprep.subr.mxu0 0.0
    %4797 = vmatpush1.msra.mxu0 0.0
    %4798 = vmatprep.subr.mxu0 0.0
    %4799 = vmatpush1.msra.mxu0 0.0
    %4800 = vmatprep.subr.mxu0 0.0
    %4801 = vmatpush1.msra.mxu0 0.0
    %4802 = vmatprep.subr.mxu0 0.0
    %4803 = vmatpush1.msra.mxu0 0.0
    %4804 = vmatprep.subr.mxu0 0.0
    %4805 = vmatpush1.msra.mxu0 0.0
    %4806 = vmatprep.subr.mxu0 0.0
    %4807 = vmatpush1.msra.mxu0 0.0
    %4808 = vmatprep.subr.mxu0 0.0
    %4809 = vmatpush1.msra.mxu0 0.0
    %4810 = vmatprep.subr.mxu0 0.0
    %4811 = vmatpush1.msra.mxu0 0.0
    %4812 = vmatprep.subr.mxu0 0.0
    %4813 = vmatpush1.msra.mxu0 0.0
    %4814 = vmatprep.subr.mxu0 0.0
    %4815 = vmatpush1.msra.mxu0 0.0
    %4816 = vmatprep.subr.mxu0 0.0
    %4817 = vmatpush1.msra.mxu0 0.0
    %4818 = vmatprep.subr.mxu0 0.0
    %4819 = vmatpush1.msra.mxu0 0.0
    %4820 = vmatprep.subr.mxu0 0.0
    %4821 = vmatpush1.msra.mxu0 %v4782
    %4822 = vmatprep.subr.mxu0 0.0
    %4823 = vmatpush1.msra.mxu0 %v4781
    %4824 = vmatprep.subr.mxu0 0.0
    %4825 = vmatpush1.msra.mxu0 %v4780
    %4826 = vmatprep.subr.mxu0 0.0
    %4827 = vmatpush1.msra.mxu0 %v4779
    %4828 = vmatprep.subr.mxu0 0.0
    %4829 = vmatpush2.msra.mxu0 0.0
    %4830 = vmatprep.subr.mxu0 0.0
    %4831 = vmatpush2.msra.mxu0 0.0
    %4832 = vmatprep.subr.mxu0 0.0
    %4833 = vmatpush2.msra.mxu0 0.0
    %4834 = vmatprep.subr.mxu0 0.0
    %4835 = vmatpush2.msra.mxu0 0.0
    %4836 = vmatprep.subr.mxu0 0.0
    %4837 = vmatpush2.msra.mxu0 0.0
    %4838 = vmatprep.subr.mxu0 0.0
    %4839 = vmatpush2.msra.mxu0 0.0
    %4840 = vmatprep.subr.mxu0 0.0
    %4841 = vmatpush2.msra.mxu0 0.0
    %4842 = vmatprep.subr.mxu0 0.0
    %4843 = vmatpush2.msra.mxu0 0.0
    %4844 = vmatprep.subr.mxu0 0.0
    %4845 = vmatpush2.msra.mxu0 0.0
    %4846 = vmatprep.subr.mxu0 0.0
    %4847 = vmatpush2.msra.mxu0 0.0
    %4848 = vmatprep.subr.mxu0 0.0
    %4849 = vmatpush2.msra.mxu0 0.0
    %4850 = vmatprep.subr.mxu0 0.0
    %4851 = vmatpush2.msra.mxu0 0.0
    %4852 = vmatprep.subr.mxu0 0.0
    %4853 = vmatpush2.msra.mxu0 0.0
    %4854 = vmatprep.subr.mxu0 0.0
    %4855 = vmatpush2.msra.mxu0 0.0
    %4856 = vmatprep.subr.mxu0 0.0
    %4857 = vmatpush2.msra.mxu0 0.0
    %4858 = vmatprep.subr.mxu0 0.0
    %4859 = vmatpush2.msra.mxu0 0.0
    %4860 = vmatprep.mubr.f32.mxu0 0.0
    %4861 = vmatmul.mubr.f32.gmra.mxu0 %v4794
    %v4862 = vpop.f32.mrf.mxu0
    %v4863 = vadd.f32 %v4788, %v4862
    %v4864 = vpop.f32.mrf.mxu0
    %4865 = vdwg.mxu0
    %vm4866 = vcmask 33792
    %4867 = vst.msk [vmem:[#allocation2] sm:$0x3] %vm4866, %v4863
    // Predicated region
    $region110: #{dga_forward.1} parent=1 // pred_check
      _
    $region111: #{dga_forward.1} parent=1 // pred_check_branch
      %4869 = sbr.rel (0) target = $region113
    $region112: #{dga_forward.1} parent=1 // pred_region
      %s4871 = ssub.s32 32, 32
      %4872 = vsyncadd [#allocation3], %s4871
      %s4874 = sshll.u32 [#allocation2], 4
      %s4875 = int_to_ptr.vmem [resolvable:$true] %s4874
      %4877 = dma.vmem_to_hbm [thread:$0]  %s4875, 32, %s27, [#allocation3]
    $region113: #{dga_forward.1} parent=1 // pred_fallthru
      _
    // Predicated region
    $region114: #{dga_forward.1} parent=1 // pred_check
      _
    $region115: #{dga_forward.1} parent=1 // pred_check_branch
      %4879 = sbr.rel (0) target = $region117
    $region116: #{dga_forward.1} parent=1 // pred_region
      %4880 = dma.done [#allocation3], 32
    $region117: #{dga_forward.1} parent=1 // pred_fallthru
      _
    %4881 = vsyncpa [#allocation3], 1

</llo_original>
